<compile_context>
chip_gen: v7x
topology: tpu7x:2x2x1
jax: 0.10.0
libtpu: 0.0.40
codegen_flags: <defaults>
</compile_context>

<pallas_src>
import jax
import jax.numpy as jnp
from jax.experimental import pallas as pl
from jax.experimental.pallas import tpu as pltpu

BN_EPS = 1e-5


# ---------------------------------------------------------------------------
# Wrapper-side constant construction (weights only -- tiny, built once).
# ---------------------------------------------------------------------------
def _band_matrices(w_hwio, W):
    """(3,3,Cin,Cout) conv weights -> (3, W*Cin, W*Cout) banded matrices.

    row-slab @ B[dy], summed over dy with a +-1 row shift, is the 'same' 3x3
    convolution; the W-boundary zero padding is implicit in the band.
    """
    kh, kw, Cin, Cout = w_hwio.shape
    shifts = jnp.stack([jnp.eye(W, W, k=1 - dx, dtype=jnp.float32)
                        for dx in range(kw)])                      # (3, W, W)
    B = jnp.einsum("xuv,yxco->yucvo", shifts, w_hwio.astype(jnp.float32))
    return B.reshape(kh, W * Cin, W * Cout)


def _residual_matrix(w_res, W):
    """(Cin, Cout) 1x1 conv -> (W*Cin, W*Cout) block-diagonal matrix."""
    Cin, Cout = w_res.shape
    B = jnp.einsum("uv,co->ucvo", jnp.eye(W, dtype=jnp.float32),
                   w_res.astype(jnp.float32))
    return B.reshape(W * Cin, W * Cout)


# ---------------------------------------------------------------------------
# In-kernel helpers.
# ---------------------------------------------------------------------------
def _banded_conv(x_bf16, b_ref, H):
    """3x3 'same' conv on a stacked row slab.

    x_bf16: (NB*H, K) bf16, NB images stacked (no pad rows).
    b_ref : (3, K, W*Cout) banded weights.
    Returns f32 (NB*H, W*Cout).
    """
    M = x_bf16.shape[0]
    p0 = jnp.dot(x_bf16, b_ref[0], preferred_element_type=jnp.float32)
    p1 = jnp.dot(x_bf16, b_ref[1], preferred_element_type=jnp.float32)
    p2 = jnp.dot(x_bf16, b_ref[2], preferred_element_type=jnp.float32)
    rid = jax.lax.broadcasted_iota(jnp.int32, (M, 1), 0) % H
    # out[row r] = x[r-1]@B0 + x[r]@B1 + x[r+1]@B2 with vertical zero padding.
    # The +-1 row shifts are sublane rotations (XLU) of the f32 partials; the
    # per-image top/bottom boundary rows are masked to zero (this also covers
    # the roll wrap-around at the slab ends).
    up = jnp.where(rid == 0, 0.0, pltpu.roll(p0, 1, 0))
    dn = jnp.where(rid == H - 1, 0.0, pltpu.roll(p2, M - 1, 0))
    return p1 + up + dn


def _channel_stats(acc, sel_ref):
    """Partial BN stats for this grid step: (2, C) = [sum; sum_sq] per channel.

    Column-reduce the f32 accumulator over rows first, then a tiny M=1
    selector matmul undoes the interleaved (w, c) lane layout.
    """
    cs = jnp.sum(acc, axis=0, keepdims=True)                       # (1, W*C)
    cq = jnp.sum(acc * acc, axis=0, keepdims=True)                 # (1, W*C)
    s = jnp.dot(cs, sel_ref[...], preferred_element_type=jnp.float32)
    q = jnp.dot(cq, sel_ref[...], preferred_element_type=jnp.float32)
    return jnp.concatenate([s, q], axis=0)                         # (2, C)


# ---------------------------------------------------------------------------
# Kernel 1: conv1 + fused 1x1 residual projection + BN1 partial stats.
# ---------------------------------------------------------------------------
def _conv1_kernel(x_ref, b_ref, bres_ref, sel_ref, h_ref, res_ref, st_ref):
    NB, H, K = x_ref.shape
    x = x_ref[...].reshape(NB * H, K)                              # bf16 slab
    acc = _banded_conv(x, b_ref, H)                                # f32
    res = jnp.dot(x, bres_ref[...], preferred_element_type=jnp.float32)
    st_ref[0] = _channel_stats(acc, sel_ref)
    h_ref[...] = acc.reshape(h_ref.shape).astype(h_ref.dtype)      # bf16 store
    res_ref[...] = res.reshape(res_ref.shape).astype(res_ref.dtype)


def _call_conv1(x_rows, B1, Bres, Ssel, nb):
    N, H, K = x_rows.shape
    WCo = B1.shape[-1]
    C = Ssel.shape[-1]
    G = N // nb
    return pl.pallas_call(
        _conv1_kernel,
        grid=(G,),
        in_specs=[
            pl.BlockSpec((nb, H, K), lambda g: (g, 0, 0)),
            pl.BlockSpec((3, K, WCo), lambda g: (0, 0, 0)),
            pl.BlockSpec((K, WCo), lambda g: (0, 0)),
            pl.BlockSpec((WCo, C), lambda g: (0, 0)),
        ],
        out_specs=(
            pl.BlockSpec((nb, H, WCo), lambda g: (g, 0, 0)),
            pl.BlockSpec((nb, H, WCo), lambda g: (g, 0, 0)),
            pl.BlockSpec((1, 2, C), lambda g: (g, 0, 0)),
        ),
        out_shape=(
            jax.ShapeDtypeStruct((N, H, WCo), jnp.bfloat16),
            jax.ShapeDtypeStruct((N, H, WCo), jnp.bfloat16),
            jax.ShapeDtypeStruct((G, 2, C), jnp.float32),
        ),
        compiler_params=pltpu.CompilerParams(
            dimension_semantics=("parallel",)),
    )(x_rows, B1, Bres, Ssel)


# ---------------------------------------------------------------------------
# Kernel 2: BN1-apply + PReLU (fused) + conv2 + BN2 partial stats.
# ---------------------------------------------------------------------------
def _conv2_kernel(h1_ref, ab1_ref, b_ref, sel_ref, h2_ref, st_ref):
    NB, H, WC = h1_ref.shape
    ab = ab1_ref[...]                                              # (NB, 3, WC)
    y = h1_ref[...].astype(jnp.float32) * ab[:, 0:1, :] + ab[:, 1:2, :]
    y = jnp.where(y > 0, y, ab[:, 2:3, :] * y)                     # PReLU
    y = y.reshape(NB * H, WC).astype(jnp.bfloat16)
    acc = _banded_conv(y, b_ref, H)
    st_ref[0] = _channel_stats(acc, sel_ref)
    h2_ref[...] = acc.reshape(h2_ref.shape).astype(h2_ref.dtype)   # bf16 store


def _call_conv2(h1, ab1, B2, Ssel, nb):
    N, H, WC = h1.shape
    C = Ssel.shape[-1]
    G = N // nb
    return pl.pallas_call(
        _conv2_kernel,
        grid=(G,),
        in_specs=[
            pl.BlockSpec((nb, H, WC), lambda g: (g, 0, 0)),
            pl.BlockSpec((nb, 3, WC), lambda g: (g, 0, 0)),
            pl.BlockSpec((3, WC, WC), lambda g: (0, 0, 0)),
            pl.BlockSpec((WC, C), lambda g: (0, 0)),
        ],
        out_specs=(
            pl.BlockSpec((nb, H, WC), lambda g: (g, 0, 0)),
            pl.BlockSpec((1, 2, C), lambda g: (g, 0, 0)),
        ),
        out_shape=(
            jax.ShapeDtypeStruct((N, H, WC), jnp.bfloat16),
            jax.ShapeDtypeStruct((G, 2, C), jnp.float32),
        ),
        compiler_params=pltpu.CompilerParams(
            dimension_semantics=("parallel",)),
    )(h1, ab1, B2, Ssel)


# ---------------------------------------------------------------------------
# Kernel 3: BN2-apply + residual add + PReLU + AvgPool2d(2,2).
# ---------------------------------------------------------------------------
def _finish_kernel(h2_ref, res_ref, ab2_ref, ph_ref, pw_ref, o_ref):
    NB, H, WC = h2_ref.shape
    ab = ab2_ref[...]
    y = (h2_ref[...].astype(jnp.float32) * ab[:, 0:1, :] + ab[:, 1:2, :]
         + res_ref[...].astype(jnp.float32))
    y = jnp.where(y > 0, y, ab[:, 2:3, :] * y)                     # PReLU
    y = y.reshape(NB * H, WC)
    # AvgPool2d(2,2): lane-pair pool (columns) then row-pair pool, both as
    # small matmuls; ph is block-diagonal across the NB stacked images.
    yp = jnp.dot(y, pw_ref[...], preferred_element_type=jnp.float32)
    out = jnp.dot(ph_ref[...], yp, preferred_element_type=jnp.float32)
    o_ref[...] = out.reshape(o_ref.shape).astype(o_ref.dtype)


def _call_finish(h2, res, ab2, Ph, Pw, nb):
    N, H, WC = h2.shape
    G = N // nb
    HoB, HB = Ph.shape                          # (nb*Ho, nb*H) block-diagonal
    Ho = HoB // nb
    WoC = Pw.shape[-1]
    return pl.pallas_call(
        _finish_kernel,
        grid=(G,),
        in_specs=[
            pl.BlockSpec((nb, H, WC), lambda g: (g, 0, 0)),
            pl.BlockSpec((nb, H, WC), lambda g: (g, 0, 0)),
            pl.BlockSpec((nb, 3, WC), lambda g: (g, 0, 0)),
            pl.BlockSpec((HoB, HB), lambda g: (0, 0)),
            pl.BlockSpec((WC, WoC), lambda g: (0, 0)),
        ],
        out_specs=pl.BlockSpec((nb, Ho, WoC), lambda g: (g, 0, 0)),
        out_shape=jax.ShapeDtypeStruct((N, Ho, WoC), jnp.float32),
        compiler_params=pltpu.CompilerParams(
            dimension_semantics=("parallel",)),
    )(h2, res, ab2, Ph, Pw)


# ---------------------------------------------------------------------------
# Hoisted BN + conditional-affine + PReLU coefficient math (tiny XLA ops).
# ---------------------------------------------------------------------------
def _cbn_prelu_coeffs(st, lat, lin, gamma, beta, alpha, count, W, n_images):
    """Fold BN (training-mode batch stats) + BN affine + conditional
    scale/bias + PReLU slope into a per-image lane-tiled (a, b, alpha) triple
    of shape (N, 3, W*C) f32."""
    tot = jnp.sum(st.astype(jnp.float32), axis=0)                  # (2, C)
    mean = tot[0] / count
    # TODO(synk): E[x^2]-E[x]^2 in f32; switch to centered two-pass stats if
    # BN numerics ever matter for large-mean activations.
    var = jnp.maximum(tot[1] / count - mean * mean, 0.0)
    inv_std = jax.lax.rsqrt(var + BN_EPS)
    C = gamma.shape[0]
    if lat is None:
        scale = jnp.ones((n_images, C), jnp.float32)
        bias = jnp.zeros((n_images, C), jnp.float32)
    else:
        sb = jnp.dot(lat.astype(jnp.float32), lin.astype(jnp.float32))
        scale, bias = sb[:, :C], sb[:, C:]
    g = gamma.astype(jnp.float32) * inv_std
    a = scale * g                                                  # (N, C)
    b = scale * (beta.astype(jnp.float32) - mean * g) + bias       # (N, C)
    al = jnp.broadcast_to(jnp.asarray(alpha, jnp.float32).reshape(-1), (C,))
    al = jnp.broadcast_to(al, (n_images, C))
    ab = jnp.stack([a, b, al], axis=1)                             # (N, 3, C)
    return jnp.tile(ab, (1, 1, W))                                 # (N, 3, W*C)


def _pick_images_per_step(N, H, WC, vmem_budget_bytes=8 << 20):
    """Images stacked per grid step: as many as fit a modest VMEM budget
    (v7x: 64 MiB physical / 32 MiB scoped) while keeping >= 2 grid steps so
    both v7x TensorCores get work."""
    per_image = H * WC * 4 * 8          # ~8 f32-equivalent slabs live / image
    cap = max(1, vmem_budget_bytes // max(per_image, 1))
    best = 1
    for nb in range(1, N + 1):
        if N % nb != 0 or nb > cap:
            continue
        if N // nb >= 2 or N == 1:
            best = nb
    return best


# ---------------------------------------------------------------------------
# Full ResidualConvBlock forward.
# ---------------------------------------------------------------------------
def residual_conv_block_forward(x_nchw, latent, params):
    """Matches ResidualConvBlock.forward: bias=False convs, training-mode
    BatchNorm (batch statistics), conditional scale/bias from the latent,
    scalar PReLU, Dropout2d(p=0.0)=identity, AvgPool2d(2,2)."""
    N, Cin, H, W = x_nchw.shape
    w1, w2 = params["w1"], params["w2"]
    Cout = w1.shape[-1]
    w_res = params.get("w_res")
    if w_res is None:                       # in_channels == out_channels case
        w_res = jnp.eye(Cin, dtype=jnp.float32)
    WCin, WCo = W * Cin, W * Cout
    Ho, Wo = H // 2, W // 2

    # NCHW -> channels-last rows (N, H, W*Cin), bf16.  (The module boundary is
    # NCHW; keep the surrounding model channels-last to drop this transpose.)
    x_rows = jnp.transpose(x_nchw, (0, 2, 3, 1)).reshape(N, H, WCin)
    x_rows = x_rows.astype(jnp.bfloat16)

    nb = _pick_images_per_step(N, H, WCo)

    # Small constant operands (weight-side only, built once).
    B1 = _band_matrices(w1, W).astype(jnp.bfloat16)        # (3, W*Cin, W*Cout)
    B2 = _band_matrices(w2, W).astype(jnp.bfloat16)        # (3, W*Cout, W*Cout)
    Bres = _residual_matrix(w_res, W).astype(jnp.bfloat16)
    eyeC = jnp.eye(Cout, dtype=jnp.float32)
    Ssel = jnp.tile(eyeC, (W, 1))                          # (W*Cout, Cout)
    Ph = 0.5 * jnp.kron(jnp.eye(Ho, dtype=jnp.float32),
                        jnp.ones((1, 2), jnp.float32))     # (Ho, H)
    Ph = jnp.kron(jnp.eye(nb, dtype=jnp.float32), Ph)      # (nb*Ho, nb*H)
    Pw = 0.5 * jnp.kron(jnp.kron(jnp.eye(Wo, dtype=jnp.float32),
                                 jnp.ones((2, 1), jnp.float32)), eyeC)

    count = float(N * H * W)

    # K1: conv1 + fused 1x1 residual + BN1 partial stats.
    h1, res, st1 = _call_conv1(x_rows, B1, Bres, Ssel, nb)

    # BN1 / conditional-affine / PReLU coefficients (hoisted, tiny).
    ab1 = _cbn_prelu_coeffs(st1, latent, params["lin1"], params["gamma1"],
                            params["beta1"], params["prelu1"], count, W, N)

    # K2: BN1-apply + PReLU + conv2 + BN2 partial stats (fused).
    h2, st2 = _call_conv2(h1, ab1, B2, Ssel, nb)

    ab2 = _cbn_prelu_coeffs(st2, latent, params["lin2"], params["gamma2"],
                            params["beta2"], params["prelu2"], count, W, N)

    # K3: BN2-apply + residual add + PReLU + AvgPool2d(2,2).
    pooled = _call_finish(h2, res, ab2, Ph, Pw, nb)        # (N, Ho, Wo*Cout)

    # Dropout2d(p=0.0) layers are identities.
    # TODO(synk): BatchNorm running-stat updates (training-side state) are not
    # modeled; they do not affect this forward's output.
    return pooled.reshape(N, Ho, Wo, Cout).transpose(0, 3, 1, 2)


# ---------------------------------------------------------------------------
# Pure-JAX reference (mirrors the torch forward) for a correctness check.
# ---------------------------------------------------------------------------
def _reference_forward(x, latent, params):
    def conv3x3(inp, w):  # inp NCHW f32, w HWIO
        return jax.lax.conv_general_dilated(
            inp, w, window_strides=(1, 1), padding=((1, 1), (1, 1)),
            dimension_numbers=("NCHW", "HWIO", "NCHW"))

    def cond_bn(h, lat, lin, gamma, beta):
        mean = jnp.mean(h, axis=(0, 2, 3), keepdims=True)
        var = jnp.mean(jnp.square(h - mean), axis=(0, 2, 3), keepdims=True)
        nrm = (h - mean) * jax.lax.rsqrt(var + BN_EPS)
        nrm = nrm * gamma.reshape(1, -1, 1, 1) + beta.reshape(1, -1, 1, 1)
        sb = lat @ lin
        C = gamma.shape[0]
        scale = sb[:, :C].reshape(-1, C, 1, 1)
        bias = sb[:, C:].reshape(-1, C, 1, 1)
        return nrm * scale + bias

    def prelu(h, a):
        return jnp.where(h > 0, h, a * h)

    h = conv3x3(x, params["w1"])
    h = prelu(cond_bn(h, latent, params["lin1"], params["gamma1"],
                      params["beta1"]), params["prelu1"])
    h = conv3x3(h, params["w2"])
    h = cond_bn(h, latent, params["lin2"], params["gamma2"], params["beta2"])
    h = h + jnp.einsum("nchw,co->nohw", x, params["w_res"])
    h = prelu(h, params["prelu2"])
    N, C, HH, WW = h.shape
    return h.reshape(N, C, HH // 2, 2, WW // 2, 2).mean(axis=(3, 5))


if __name__ == "__main__":
    key = jax.random.PRNGKey(0)
    N, Cin, H, W = 2, 4, 16, 16
    Cout = 8
    F_lat = 32     # latent_vector_features (default 256 in torch; small here)

    ks = jax.random.split(key, 8)
    x = jax.random.normal(ks[0], (N, Cin, H, W), jnp.float32)
    latent = jax.random.normal(ks[1], (N, F_lat), jnp.float32)

    # Deterministic synthetic parameters (conv weights in HWIO; convs are
    # bias-free per the module's default bias=False).
    params = dict(
        w1=0.1 * jax.random.normal(ks[2], (3, 3, Cin, Cout), jnp.float32),
        w2=0.1 * jax.random.normal(ks[3], (3, 3, Cout, Cout), jnp.float32),
        w_res=0.1 * jax.random.normal(ks[4], (Cin, Cout), jnp.float32),
        lin1=0.1 * jax.random.normal(ks[5], (F_lat, 2 * Cout), jnp.float32),
        lin2=0.1 * jax.random.normal(ks[6], (F_lat, 2 * Cout), jnp.float32),
        gamma1=jnp.ones((Cout,), jnp.float32),
        beta1=jnp.zeros((Cout,), jnp.float32),
        gamma2=jnp.ones((Cout,), jnp.float32),
        beta2=jnp.zeros((Cout,), jnp.float32),
        prelu1=0.25,   # nn.PReLU() default: single shared parameter
        prelu2=0.25,
    )

    fwd = jax.jit(residual_conv_block_forward)
    out = jax.block_until_ready(fwd(x, latent, params))
    assert out.shape == (N, Cout, H // 2, W // 2), out.shape
    assert bool(jnp.all(jnp.isfinite(out)))

    ref = _reference_forward(x, latent, params)
    err = float(jnp.max(jnp.abs(out - ref)))
    assert err < 0.1, f"max abs error vs reference: {err}"
    print("KERNEL_OK")
</pallas_src>

<mosaic_0001>
module attributes {stable_mosaic.version = 11 : i64} {
  func.func @_conv1_kernel(%arg0: i32, %arg1: memref<1x16x64xbf16, #tpu.memory_space<vmem>>, %arg2: memref<3x64x128xbf16, #tpu.memory_space<vmem>>, %arg3: memref<64x128xbf16, #tpu.memory_space<vmem>>, %arg4: memref<128x8xf32, #tpu.memory_space<vmem>>, %arg5: memref<1x16x128xbf16, #tpu.memory_space<vmem>>, %arg6: memref<1x16x128xbf16, #tpu.memory_space<vmem>>, %arg7: memref<1x2x8xf32, #tpu.memory_space<vmem>>) attributes {dimension_semantics = [#tpu.dimension_semantics<parallel>], iteration_bounds = array<i64: 2>, scalar_prefetch = 0 : i64, scratch_operands = 0 : i64, tpu.core_type = #tpu.core_type<tc>, window_params = [{transform_indices = @transform_0, window_bounds = array<i64: 1, 16, 64>}, {pipeline_mode = #tpu.pipeline_mode<synchronous>, transform_indices = @transform_1, window_bounds = array<i64: 3, 64, 128>}, {pipeline_mode = #tpu.pipeline_mode<synchronous>, transform_indices = @transform_2, window_bounds = array<i64: 64, 128>}, {pipeline_mode = #tpu.pipeline_mode<synchronous>, transform_indices = @transform_3, window_bounds = array<i64: 128, 8>}, {transform_indices = @transform_4, window_bounds = array<i64: 1, 16, 128>}, {transform_indices = @transform_5, window_bounds = array<i64: 1, 16, 128>}, {transform_indices = @transform_6, window_bounds = array<i64: 1, 2, 8>}]} {
    %c0 = arith.constant 0 : index
    %c0_0 = arith.constant 0 : index
    %c0_1 = arith.constant 0 : index
    %0 = vector.load %arg1[%c0, %c0_0, %c0_1] : memref<1x16x64xbf16, #tpu.memory_space<vmem>>, vector<1x16x64xbf16>
    %1 = vector.shape_cast %0 : vector<1x16x64xbf16> to vector<16x64xbf16>
    %c0_2 = arith.constant 0 : index
    %c0_3 = arith.constant 0 : index
    %c0_4 = arith.constant 0 : index
    %2 = vector.load %arg2[%c0_2, %c0_3, %c0_4] : memref<3x64x128xbf16, #tpu.memory_space<vmem>>, vector<1x64x128xbf16>
    %3 = vector.shape_cast %2 : vector<1x64x128xbf16> to vector<64x128xbf16>
    %cst = arith.constant dense<0.000000e+00> : vector<16x128xf32>
    %4 = tpu.matmul %1, %3, %cst {dimension_numbers = #tpu.dot_dimension_numbers<[1], [0], [0], [1], [0, 0, 1, 1], [], []>} : vector<16x64xbf16>, vector<64x128xbf16>, vector<16x128xf32> -> vector<16x128xf32>
    %c1 = arith.constant 1 : index
    %c0_5 = arith.constant 0 : index
    %c0_6 = arith.constant 0 : index
    %5 = vector.load %arg2[%c1, %c0_5, %c0_6] : memref<3x64x128xbf16, #tpu.memory_space<vmem>>, vector<1x64x128xbf16>
    %6 = vector.shape_cast %5 : vector<1x64x128xbf16> to vector<64x128xbf16>
    %cst_7 = arith.constant dense<0.000000e+00> : vector<16x128xf32>
    %7 = tpu.matmul %1, %6, %cst_7 {dimension_numbers = #tpu.dot_dimension_numbers<[1], [0], [0], [1], [0, 0, 1, 1], [], []>} : vector<16x64xbf16>, vector<64x128xbf16>, vector<16x128xf32> -> vector<16x128xf32>
    %c2 = arith.constant 2 : index
    %c0_8 = arith.constant 0 : index
    %c0_9 = arith.constant 0 : index
    %8 = vector.load %arg2[%c2, %c0_8, %c0_9] : memref<3x64x128xbf16, #tpu.memory_space<vmem>>, vector<1x64x128xbf16>
    %9 = vector.shape_cast %8 : vector<1x64x128xbf16> to vector<64x128xbf16>
    %cst_10 = arith.constant dense<0.000000e+00> : vector<16x128xf32>
    %10 = tpu.matmul %1, %9, %cst_10 {dimension_numbers = #tpu.dot_dimension_numbers<[1], [0], [0], [1], [0, 0, 1, 1], [], []>} : vector<16x64xbf16>, vector<64x128xbf16>, vector<16x128xf32> -> vector<16x128xf32>
    %11 = tpu.iota {dimensions = array<i32: 0>} : vector<16x1xi32>
    %c16_i32 = arith.constant 16 : i32
    %c0_i32 = arith.constant 0 : i32
    %12 = arith.cmpi eq, %c16_i32, %c0_i32 : i32
    %c1_i32 = arith.constant 1 : i32
    %13 = arith.select %12, %c1_i32, %c16_i32 : i32
    %14 = vector.broadcast %13 : i32 to vector<16x1xi32>
    %15 = arith.remsi %11, %14 : vector<16x1xi32>
    %c0_i32_11 = arith.constant 0 : i32
    %16 = vector.broadcast %c0_i32_11 : i32 to vector<16x1xi32>
    %17 = arith.cmpi ne, %15, %16 : vector<16x1xi32>
    %c0_i32_12 = arith.constant 0 : i32
    %18 = vector.broadcast %c0_i32_12 : i32 to vector<16x1xi32>
    %19 = arith.cmpi slt, %15, %18 : vector<16x1xi32>
    %c0_i32_13 = arith.constant 0 : i32
    %20 = arith.cmpi slt, %13, %c0_i32_13 : i32
    %21 = vector.broadcast %20 : i1 to vector<16x1xi1>
    %22 = vector.broadcast %21 : vector<16x1xi1> to vector<16x1xi1>
    %23 = arith.xori %19, %22 : vector<16x1xi1>
    %24 = arith.andi %23, %17 : vector<16x1xi1>
    %25 = vector.broadcast %13 : i32 to vector<16x1xi32>
    %26 = arith.addi %15, %25 : vector<16x1xi32>
    %27 = arith.select %24, %26, %15 : vector<16x1xi1>, vector<16x1xi32>
    %c0_i32_14 = arith.constant 0 : i32
    %28 = vector.broadcast %c0_i32_14 : i32 to vector<16x1xi32>
    %29 = arith.cmpi eq, %27, %28 : vector<16x1xi32>
    %c1_i32_15 = arith.constant 1 : i32
    %30 = tpu.dynamic_rotate %4 by %c1_i32_15 dim 0 : vector<16x128xf32>, i32 -> vector<16x128xf32>
    %cst_16 = arith.constant 0.000000e+00 : f32
    %31 = vector.shape_cast %29 : vector<16x1xi1> to vector<16x1xi1>
    %32 = vector.broadcast %31 : vector<16x1xi1> to vector<16x128xi1>
    %33 = vector.broadcast %cst_16 : f32 to vector<16x128xf32>
    %34 = arith.select %32, %33, %30 : vector<16x128xi1>, vector<16x128xf32>
    %c15_i32 = arith.constant 15 : i32
    %35 = vector.broadcast %c15_i32 : i32 to vector<16x1xi32>
    %36 = arith.cmpi eq, %27, %35 : vector<16x1xi32>
    %c15_i32_17 = arith.constant 15 : i32
    %37 = tpu.dynamic_rotate %10 by %c15_i32_17 dim 0 : vector<16x128xf32>, i32 -> vector<16x128xf32>
    %cst_18 = arith.constant 0.000000e+00 : f32
    %38 = vector.shape_cast %36 : vector<16x1xi1> to vector<16x1xi1>
    %39 = vector.broadcast %38 : vector<16x1xi1> to vector<16x128xi1>
    %40 = vector.broadcast %cst_18 : f32 to vector<16x128xf32>
    %41 = arith.select %39, %40, %37 : vector<16x128xi1>, vector<16x128xf32>
    %42 = arith.addf %7, %34 : vector<16x128xf32>
    %43 = arith.addf %42, %41 : vector<16x128xf32>
    %c0_19 = arith.constant 0 : index
    %c0_20 = arith.constant 0 : index
    %44 = vector.load %arg3[%c0_19, %c0_20] : memref<64x128xbf16, #tpu.memory_space<vmem>>, vector<64x128xbf16>
    %cst_21 = arith.constant dense<0.000000e+00> : vector<16x128xf32>
    %45 = tpu.matmul %1, %44, %cst_21 {dimension_numbers = #tpu.dot_dimension_numbers<[1], [0], [0], [1], [0, 0, 1, 1], [], []>} : vector<16x64xbf16>, vector<64x128xbf16>, vector<16x128xf32> -> vector<16x128xf32>
    %cst_22 = arith.constant dense<0.000000e+00> : vector<128xf32>
    %46 = vector.multi_reduction <add>, %43, %cst_22 [0] : vector<16x128xf32> to vector<128xf32>
    %47 = vector.shape_cast %46 : vector<128xf32> to vector<1x128xf32>
    %48 = arith.mulf %43, %43 : vector<16x128xf32>
    %cst_23 = arith.constant dense<0.000000e+00> : vector<128xf32>
    %49 = vector.multi_reduction <add>, %48, %cst_23 [0] : vector<16x128xf32> to vector<128xf32>
    %50 = vector.shape_cast %49 : vector<128xf32> to vector<1x128xf32>
    %c0_24 = arith.constant 0 : index
    %c0_25 = arith.constant 0 : index
    %51 = vector.load %arg4[%c0_24, %c0_25] : memref<128x8xf32, #tpu.memory_space<vmem>>, vector<128x8xf32>
    %cst_26 = arith.constant dense<0.000000e+00> : vector<1x8xf32>
    %52 = tpu.matmul %47, %51, %cst_26 {dimension_numbers = #tpu.dot_dimension_numbers<[1], [0], [0], [1], [0, 0, 1, 1], [], []>} : vector<1x128xf32>, vector<128x8xf32>, vector<1x8xf32> -> vector<1x8xf32>
    %c0_27 = arith.constant 0 : index
    %c0_28 = arith.constant 0 : index
    %53 = vector.load %arg4[%c0_27, %c0_28] : memref<128x8xf32, #tpu.memory_space<vmem>>, vector<128x8xf32>
    %cst_29 = arith.constant dense<0.000000e+00> : vector<1x8xf32>
    %54 = tpu.matmul %50, %53, %cst_29 {dimension_numbers = #tpu.dot_dimension_numbers<[1], [0], [0], [1], [0, 0, 1, 1], [], []>} : vector<1x128xf32>, vector<128x8xf32>, vector<1x8xf32> -> vector<1x8xf32>
    %55 = tpu.concatenate %52, %54 in 0 : vector<1x8xf32>, vector<1x8xf32> -> vector<2x8xf32>
    %c0_30 = arith.constant 0 : index
    %c0_31 = arith.constant 0 : index
    %c0_32 = arith.constant 0 : index
    %56 = vector.load %arg7[%c0_30, %c0_31, %c0_32] : memref<1x2x8xf32, #tpu.memory_space<vmem>>, vector<1x2x8xf32>
    %57 = vector.shape_cast %56 : vector<1x2x8xf32> to vector<2x8xf32>
    %58 = vector.shape_cast %55 : vector<2x8xf32> to vector<1x2x8xf32>
    tpu.vector_store %arg7[%c0_30, %c0_31, %c0_32], %58 {strides = array<i32>} : memref<1x2x8xf32, #tpu.memory_space<vmem>>, vector<1x2x8xf32>,
    %59 = vector.shape_cast %43 : vector<16x128xf32> to vector<1x16x128xf32>
    %60 = arith.truncf %59 : vector<1x16x128xf32> to vector<1x16x128xbf16>
    %c0_33 = arith.constant 0 : index
    %c0_34 = arith.constant 0 : index
    %c0_35 = arith.constant 0 : index
    %61 = vector.load %arg5[%c0_33, %c0_34, %c0_35] : memref<1x16x128xbf16, #tpu.memory_space<vmem>>, vector<1x16x128xbf16>
    tpu.vector_store %arg5[%c0_33, %c0_34, %c0_35], %60 {strides = array<i32>} : memref<1x16x128xbf16, #tpu.memory_space<vmem>>, vector<1x16x128xbf16>,
    %62 = vector.shape_cast %45 : vector<16x128xf32> to vector<1x16x128xf32>
    %63 = arith.truncf %62 : vector<1x16x128xf32> to vector<1x16x128xbf16>
    %c0_36 = arith.constant 0 : index
    %c0_37 = arith.constant 0 : index
    %c0_38 = arith.constant 0 : index
    %64 = vector.load %arg6[%c0_36, %c0_37, %c0_38] : memref<1x16x128xbf16, #tpu.memory_space<vmem>>, vector<1x16x128xbf16>
    tpu.vector_store %arg6[%c0_36, %c0_37, %c0_38], %63 {strides = array<i32>} : memref<1x16x128xbf16, #tpu.memory_space<vmem>>, vector<1x16x128xbf16>,
    return
  }
  func.func @transform_0(%arg0: i32) -> (i32, i32, i32) {
    %c0_i32 = arith.constant 0 : i32
    %c0_i32_0 = arith.constant 0 : i32
    %c0_i32_1 = arith.constant 0 : i32
    return %arg0, %c0_i32, %c0_i32_0 : i32, i32, i32
  }
  func.func @transform_1(%arg0: i32) -> (i32, i32, i32) {
    %c0_i32 = arith.constant 0 : i32
    %c0_i32_0 = arith.constant 0 : i32
    %c0_i32_1 = arith.constant 0 : i32
    %c0_i32_2 = arith.constant 0 : i32
    return %c0_i32, %c0_i32_0, %c0_i32_1 : i32, i32, i32
  }
  func.func @transform_2(%arg0: i32) -> (i32, i32) {
    %c0_i32 = arith.constant 0 : i32
    %c0_i32_0 = arith.constant 0 : i32
    %c0_i32_1 = arith.constant 0 : i32
    return %c0_i32, %c0_i32_0 : i32, i32
  }
  func.func @transform_3(%arg0: i32) -> (i32, i32) {
    %c0_i32 = arith.constant 0 : i32
    %c0_i32_0 = arith.constant 0 : i32
    %c0_i32_1 = arith.constant 0 : i32
    return %c0_i32, %c0_i32_0 : i32, i32
  }
  func.func @transform_4(%arg0: i32) -> (i32, i32, i32) {
    %c0_i32 = arith.constant 0 : i32
    %c0_i32_0 = arith.constant 0 : i32
    %c0_i32_1 = arith.constant 0 : i32
    return %arg0, %c0_i32, %c0_i32_0 : i32, i32, i32
  }
  func.func @transform_5(%arg0: i32) -> (i32, i32, i32) {
    %c0_i32 = arith.constant 0 : i32
    %c0_i32_0 = arith.constant 0 : i32
    %c0_i32_1 = arith.constant 0 : i32
    return %arg0, %c0_i32, %c0_i32_0 : i32, i32, i32
  }
  func.func @transform_6(%arg0: i32) -> (i32, i32, i32) {
    %c0_i32 = arith.constant 0 : i32
    %c0_i32_0 = arith.constant 0 : i32
    %c0_i32_1 = arith.constant 0 : i32
    return %arg0, %c0_i32, %c0_i32_0 : i32, i32, i32
  }
}

module attributes {stable_mosaic.version = 11 : i64} {
  func.func @_conv2_kernel(%arg0: i32, %arg1: memref<1x16x128xbf16, #tpu.memory_space<vmem>>, %arg2: memref<1x3x128xf32, #tpu.memory_space<vmem>>, %arg3: memref<3x128x128xbf16, #tpu.memory_space<vmem>>, %arg4: memref<128x8xf32, #tpu.memory_space<vmem>>, %arg5: memref<1x16x128xbf16, #tpu.memory_space<vmem>>, %arg6: memref<1x2x8xf32, #tpu.memory_space<vmem>>) attributes {dimension_semantics = [#tpu.dimension_semantics<parallel>], iteration_bounds = array<i64: 2>, scalar_prefetch = 0 : i64, scratch_operands = 0 : i64, tpu.core_type = #tpu.core_type<tc>, window_params = [{transform_indices = @transform_0, window_bounds = array<i64: 1, 16, 128>}, {transform_indices = @transform_1, window_bounds = array<i64: 1, 3, 128>}, {pipeline_mode = #tpu.pipeline_mode<synchronous>, transform_indices = @transform_2, window_bounds = array<i64: 3, 128, 128>}, {pipeline_mode = #tpu.pipeline_mode<synchronous>, transform_indices = @transform_3, window_bounds = array<i64: 128, 8>}, {transform_indices = @transform_4, window_bounds = array<i64: 1, 16, 128>}, {transform_indices = @transform_5, window_bounds = array<i64: 1, 2, 8>}]} {
    %c0 = arith.constant 0 : index
    %c0_0 = arith.constant 0 : index
    %c0_1 = arith.constant 0 : index
    %0 = vector.load %arg2[%c0, %c0_0, %c0_1] : memref<1x3x128xf32, #tpu.memory_space<vmem>>, vector<1x3x128xf32>
    %c0_2 = arith.constant 0 : index
    %c0_3 = arith.constant 0 : index
    %c0_4 = arith.constant 0 : index
    %1 = vector.load %arg1[%c0_2, %c0_3, %c0_4] : memref<1x16x128xbf16, #tpu.memory_space<vmem>>, vector<1x16x128xbf16>
    %2 = arith.extf %1 : vector<1x16x128xbf16> to vector<1x16x128xf32>
    %3 = vector.extract_strided_slice %0 {offsets = [0, 0, 0], sizes = [1, 1, 128], strides = [1, 1, 1]} : vector<1x3x128xf32> to vector<1x1x128xf32>
    %4 = vector.broadcast %3 : vector<1x1x128xf32> to vector<1x16x128xf32>
    %5 = arith.mulf %2, %4 : vector<1x16x128xf32>
    %6 = vector.extract_strided_slice %0 {offsets = [0, 1, 0], sizes = [1, 1, 128], strides = [1, 1, 1]} : vector<1x3x128xf32> to vector<1x1x128xf32>
    %7 = vector.broadcast %6 : vector<1x1x128xf32> to vector<1x16x128xf32>
    %8 = arith.addf %5, %7 : vector<1x16x128xf32>
    %cst = arith.constant 0.000000e+00 : f32
    %9 = vector.broadcast %cst : f32 to vector<1x16x128xf32>
    %10 = arith.cmpf ogt, %8, %9 : vector<1x16x128xf32>
    %11 = vector.extract_strided_slice %0 {offsets = [0, 2, 0], sizes = [1, 1, 128], strides = [1, 1, 1]} : vector<1x3x128xf32> to vector<1x1x128xf32>
    %12 = vector.broadcast %11 : vector<1x1x128xf32> to vector<1x16x128xf32>
    %13 = arith.mulf %12, %8 : vector<1x16x128xf32>
    %14 = arith.select %10, %8, %13 : vector<1x16x128xi1>, vector<1x16x128xf32>
    %15 = vector.shape_cast %14 : vector<1x16x128xf32> to vector<16x128xf32>
    %16 = arith.truncf %15 : vector<16x128xf32> to vector<16x128xbf16>
    %c0_5 = arith.constant 0 : index
    %c0_6 = arith.constant 0 : index
    %c0_7 = arith.constant 0 : index
    %17 = vector.load %arg3[%c0_5, %c0_6, %c0_7] : memref<3x128x128xbf16, #tpu.memory_space<vmem>>, vector<1x128x128xbf16>
    %18 = vector.shape_cast %17 : vector<1x128x128xbf16> to vector<128x128xbf16>
    %cst_8 = arith.constant dense<0.000000e+00> : vector<16x128xf32>
    %19 = tpu.matmul %16, %18, %cst_8 {dimension_numbers = #tpu.dot_dimension_numbers<[1], [0], [0], [1], [0, 0, 1, 1], [], []>} : vector<16x128xbf16>, vector<128x128xbf16>, vector<16x128xf32> -> vector<16x128xf32>
    %c1 = arith.constant 1 : index
    %c0_9 = arith.constant 0 : index
    %c0_10 = arith.constant 0 : index
    %20 = vector.load %arg3[%c1, %c0_9, %c0_10] : memref<3x128x128xbf16, #tpu.memory_space<vmem>>, vector<1x128x128xbf16>
    %21 = vector.shape_cast %20 : vector<1x128x128xbf16> to vector<128x128xbf16>
    %cst_11 = arith.constant dense<0.000000e+00> : vector<16x128xf32>
    %22 = tpu.matmul %16, %21, %cst_11 {dimension_numbers = #tpu.dot_dimension_numbers<[1], [0], [0], [1], [0, 0, 1, 1], [], []>} : vector<16x128xbf16>, vector<128x128xbf16>, vector<16x128xf32> -> vector<16x128xf32>
    %c2 = arith.constant 2 : index
    %c0_12 = arith.constant 0 : index
    %c0_13 = arith.constant 0 : index
    %23 = vector.load %arg3[%c2, %c0_12, %c0_13] : memref<3x128x128xbf16, #tpu.memory_space<vmem>>, vector<1x128x128xbf16>
    %24 = vector.shape_cast %23 : vector<1x128x128xbf16> to vector<128x128xbf16>
    %cst_14 = arith.constant dense<0.000000e+00> : vector<16x128xf32>
    %25 = tpu.matmul %16, %24, %cst_14 {dimension_numbers = #tpu.dot_dimension_numbers<[1], [0], [0], [1], [0, 0, 1, 1], [], []>} : vector<16x128xbf16>, vector<128x128xbf16>, vector<16x128xf32> -> vector<16x128xf32>
    %26 = tpu.iota {dimensions = array<i32: 0>} : vector<16x1xi32>
    %c16_i32 = arith.constant 16 : i32
    %c0_i32 = arith.constant 0 : i32
    %27 = arith.cmpi eq, %c16_i32, %c0_i32 : i32
    %c1_i32 = arith.constant 1 : i32
    %28 = arith.select %27, %c1_i32, %c16_i32 : i32
    %29 = vector.broadcast %28 : i32 to vector<16x1xi32>
    %30 = arith.remsi %26, %29 : vector<16x1xi32>
    %c0_i32_15 = arith.constant 0 : i32
    %31 = vector.broadcast %c0_i32_15 : i32 to vector<16x1xi32>
    %32 = arith.cmpi ne, %30, %31 : vector<16x1xi32>
    %c0_i32_16 = arith.constant 0 : i32
    %33 = vector.broadcast %c0_i32_16 : i32 to vector<16x1xi32>
    %34 = arith.cmpi slt, %30, %33 : vector<16x1xi32>
    %c0_i32_17 = arith.constant 0 : i32
    %35 = arith.cmpi slt, %28, %c0_i32_17 : i32
    %36 = vector.broadcast %35 : i1 to vector<16x1xi1>
    %37 = vector.broadcast %36 : vector<16x1xi1> to vector<16x1xi1>
    %38 = arith.xori %34, %37 : vector<16x1xi1>
    %39 = arith.andi %38, %32 : vector<16x1xi1>
    %40 = vector.broadcast %28 : i32 to vector<16x1xi32>
    %41 = arith.addi %30, %40 : vector<16x1xi32>
    %42 = arith.select %39, %41, %30 : vector<16x1xi1>, vector<16x1xi32>
    %c0_i32_18 = arith.constant 0 : i32
    %43 = vector.broadcast %c0_i32_18 : i32 to vector<16x1xi32>
    %44 = arith.cmpi eq, %42, %43 : vector<16x1xi32>
    %c1_i32_19 = arith.constant 1 : i32
    %45 = tpu.dynamic_rotate %19 by %c1_i32_19 dim 0 : vector<16x128xf32>, i32 -> vector<16x128xf32>
    %cst_20 = arith.constant 0.000000e+00 : f32
    %46 = vector.shape_cast %44 : vector<16x1xi1> to vector<16x1xi1>
    %47 = vector.broadcast %46 : vector<16x1xi1> to vector<16x128xi1>
    %48 = vector.broadcast %cst_20 : f32 to vector<16x128xf32>
    %49 = arith.select %47, %48, %45 : vector<16x128xi1>, vector<16x128xf32>
    %c15_i32 = arith.constant 15 : i32
    %50 = vector.broadcast %c15_i32 : i32 to vector<16x1xi32>
    %51 = arith.cmpi eq, %42, %50 : vector<16x1xi32>
    %c15_i32_21 = arith.constant 15 : i32
    %52 = tpu.dynamic_rotate %25 by %c15_i32_21 dim 0 : vector<16x128xf32>, i32 -> vector<16x128xf32>
    %cst_22 = arith.constant 0.000000e+00 : f32
    %53 = vector.shape_cast %51 : vector<16x1xi1> to vector<16x1xi1>
    %54 = vector.broadcast %53 : vector<16x1xi1> to vector<16x128xi1>
    %55 = vector.broadcast %cst_22 : f32 to vector<16x128xf32>
    %56 = arith.select %54, %55, %52 : vector<16x128xi1>, vector<16x128xf32>
    %57 = arith.addf %22, %49 : vector<16x128xf32>
    %58 = arith.addf %57, %56 : vector<16x128xf32>
    %cst_23 = arith.constant dense<0.000000e+00> : vector<128xf32>
    %59 = vector.multi_reduction <add>, %58, %cst_23 [0] : vector<16x128xf32> to vector<128xf32>
    %60 = vector.shape_cast %59 : vector<128xf32> to vector<1x128xf32>
    %61 = arith.mulf %58, %58 : vector<16x128xf32>
    %cst_24 = arith.constant dense<0.000000e+00> : vector<128xf32>
    %62 = vector.multi_reduction <add>, %61, %cst_24 [0] : vector<16x128xf32> to vector<128xf32>
    %63 = vector.shape_cast %62 : vector<128xf32> to vector<1x128xf32>
    %c0_25 = arith.constant 0 : index
    %c0_26 = arith.constant 0 : index
    %64 = vector.load %arg4[%c0_25, %c0_26] : memref<128x8xf32, #tpu.memory_space<vmem>>, vector<128x8xf32>
    %cst_27 = arith.constant dense<0.000000e+00> : vector<1x8xf32>
    %65 = tpu.matmul %60, %64, %cst_27 {dimension_numbers = #tpu.dot_dimension_numbers<[1], [0], [0], [1], [0, 0, 1, 1], [], []>} : vector<1x128xf32>, vector<128x8xf32>, vector<1x8xf32> -> vector<1x8xf32>
    %c0_28 = arith.constant 0 : index
    %c0_29 = arith.constant 0 : index
    %66 = vector.load %arg4[%c0_28, %c0_29] : memref<128x8xf32, #tpu.memory_space<vmem>>, vector<128x8xf32>
    %cst_30 = arith.constant dense<0.000000e+00> : vector<1x8xf32>
    %67 = tpu.matmul %63, %66, %cst_30 {dimension_numbers = #tpu.dot_dimension_numbers<[1], [0], [0], [1], [0, 0, 1, 1], [], []>} : vector<1x128xf32>, vector<128x8xf32>, vector<1x8xf32> -> vector<1x8xf32>
    %68 = tpu.concatenate %65, %67 in 0 : vector<1x8xf32>, vector<1x8xf32> -> vector<2x8xf32>
    %c0_31 = arith.constant 0 : index
    %c0_32 = arith.constant 0 : index
    %c0_33 = arith.constant 0 : index
    %69 = vector.load %arg6[%c0_31, %c0_32, %c0_33] : memref<1x2x8xf32, #tpu.memory_space<vmem>>, vector<1x2x8xf32>
    %70 = vector.shape_cast %69 : vector<1x2x8xf32> to vector<2x8xf32>
    %71 = vector.shape_cast %68 : vector<2x8xf32> to vector<1x2x8xf32>
    tpu.vector_store %arg6[%c0_31, %c0_32, %c0_33], %71 {strides = array<i32>} : memref<1x2x8xf32, #tpu.memory_space<vmem>>, vector<1x2x8xf32>,
    %72 = vector.shape_cast %58 : vector<16x128xf32> to vector<1x16x128xf32>
    %73 = arith.truncf %72 : vector<1x16x128xf32> to vector<1x16x128xbf16>
    %c0_34 = arith.constant 0 : index
    %c0_35 = arith.constant 0 : index
    %c0_36 = arith.constant 0 : index
    %74 = vector.load %arg5[%c0_34, %c0_35, %c0_36] : memref<1x16x128xbf16, #tpu.memory_space<vmem>>, vector<1x16x128xbf16>
    tpu.vector_store %arg5[%c0_34, %c0_35, %c0_36], %73 {strides = array<i32>} : memref<1x16x128xbf16, #tpu.memory_space<vmem>>, vector<1x16x128xbf16>,
    return
  }
  func.func @transform_0(%arg0: i32) -> (i32, i32, i32) {
    %c0_i32 = arith.constant 0 : i32
    %c0_i32_0 = arith.constant 0 : i32
    %c0_i32_1 = arith.constant 0 : i32
    return %arg0, %c0_i32, %c0_i32_0 : i32, i32, i32
  }
  func.func @transform_1(%arg0: i32) -> (i32, i32, i32) {
    %c0_i32 = arith.constant 0 : i32
    %c0_i32_0 = arith.constant 0 : i32
    %c0_i32_1 = arith.constant 0 : i32
    return %arg0, %c0_i32, %c0_i32_0 : i32, i32, i32
  }
  func.func @transform_2(%arg0: i32) -> (i32, i32, i32) {
    %c0_i32 = arith.constant 0 : i32
    %c0_i32_0 = arith.constant 0 : i32
    %c0_i32_1 = arith.constant 0 : i32
    %c0_i32_2 = arith.constant 0 : i32
    return %c0_i32, %c0_i32_0, %c0_i32_1 : i32, i32, i32
  }
  func.func @transform_3(%arg0: i32) -> (i32, i32) {
    %c0_i32 = arith.constant 0 : i32
    %c0_i32_0 = arith.constant 0 : i32
    %c0_i32_1 = arith.constant 0 : i32
    return %c0_i32, %c0_i32_0 : i32, i32
  }
  func.func @transform_4(%arg0: i32) -> (i32, i32, i32) {
    %c0_i32 = arith.constant 0 : i32
    %c0_i32_0 = arith.constant 0 : i32
    %c0_i32_1 = arith.constant 0 : i32
    return %arg0, %c0_i32, %c0_i32_0 : i32, i32, i32
  }
  func.func @transform_5(%arg0: i32) -> (i32, i32, i32) {
    %c0_i32 = arith.constant 0 : i32
    %c0_i32_0 = arith.constant 0 : i32
    %c0_i32_1 = arith.constant 0 : i32
    return %arg0, %c0_i32, %c0_i32_0 : i32, i32, i32
  }
}

module attributes {stable_mosaic.version = 11 : i64} {
  func.func @_finish_kernel(%arg0: i32, %arg1: memref<1x16x128xbf16, #tpu.memory_space<vmem>>, %arg2: memref<1x16x128xbf16, #tpu.memory_space<vmem>>, %arg3: memref<1x3x128xf32, #tpu.memory_space<vmem>>, %arg4: memref<8x16xf32, #tpu.memory_space<vmem>>, %arg5: memref<128x64xf32, #tpu.memory_space<vmem>>, %arg6: memref<1x8x64xf32, #tpu.memory_space<vmem>>) attributes {dimension_semantics = [#tpu.dimension_semantics<parallel>], iteration_bounds = array<i64: 2>, scalar_prefetch = 0 : i64, scratch_operands = 0 : i64, tpu.core_type = #tpu.core_type<tc>, window_params = [{transform_indices = @transform_0, window_bounds = array<i64: 1, 16, 128>}, {transform_indices = @transform_1, window_bounds = array<i64: 1, 16, 128>}, {transform_indices = @transform_2, window_bounds = array<i64: 1, 3, 128>}, {pipeline_mode = #tpu.pipeline_mode<synchronous>, transform_indices = @transform_3, window_bounds = array<i64: 8, 16>}, {pipeline_mode = #tpu.pipeline_mode<synchronous>, transform_indices = @transform_4, window_bounds = array<i64: 128, 64>}, {transform_indices = @transform_5, window_bounds = array<i64: 1, 8, 64>}]} {
    %c0 = arith.constant 0 : index
    %c0_0 = arith.constant 0 : index
    %c0_1 = arith.constant 0 : index
    %0 = vector.load %arg3[%c0, %c0_0, %c0_1] : memref<1x3x128xf32, #tpu.memory_space<vmem>>, vector<1x3x128xf32>
    %c0_2 = arith.constant 0 : index
    %c0_3 = arith.constant 0 : index
    %c0_4 = arith.constant 0 : index
    %1 = vector.load %arg1[%c0_2, %c0_3, %c0_4] : memref<1x16x128xbf16, #tpu.memory_space<vmem>>, vector<1x16x128xbf16>
    %2 = arith.extf %1 : vector<1x16x128xbf16> to vector<1x16x128xf32>
    %3 = vector.extract_strided_slice %0 {offsets = [0, 0, 0], sizes = [1, 1, 128], strides = [1, 1, 1]} : vector<1x3x128xf32> to vector<1x1x128xf32>
    %4 = vector.broadcast %3 : vector<1x1x128xf32> to vector<1x16x128xf32>
    %5 = arith.mulf %2, %4 : vector<1x16x128xf32>
    %6 = vector.extract_strided_slice %0 {offsets = [0, 1, 0], sizes = [1, 1, 128], strides = [1, 1, 1]} : vector<1x3x128xf32> to vector<1x1x128xf32>
    %7 = vector.broadcast %6 : vector<1x1x128xf32> to vector<1x16x128xf32>
    %8 = arith.addf %5, %7 : vector<1x16x128xf32>
    %c0_5 = arith.constant 0 : index
    %c0_6 = arith.constant 0 : index
    %c0_7 = arith.constant 0 : index
    %9 = vector.load %arg2[%c0_5, %c0_6, %c0_7] : memref<1x16x128xbf16, #tpu.memory_space<vmem>>, vector<1x16x128xbf16>
    %10 = arith.extf %9 : vector<1x16x128xbf16> to vector<1x16x128xf32>
    %11 = arith.addf %8, %10 : vector<1x16x128xf32>
    %cst = arith.constant 0.000000e+00 : f32
    %12 = vector.broadcast %cst : f32 to vector<1x16x128xf32>
    %13 = arith.cmpf ogt, %11, %12 : vector<1x16x128xf32>
    %14 = vector.extract_strided_slice %0 {offsets = [0, 2, 0], sizes = [1, 1, 128], strides = [1, 1, 1]} : vector<1x3x128xf32> to vector<1x1x128xf32>
    %15 = vector.broadcast %14 : vector<1x1x128xf32> to vector<1x16x128xf32>
    %16 = arith.mulf %15, %11 : vector<1x16x128xf32>
    %17 = arith.select %13, %11, %16 : vector<1x16x128xi1>, vector<1x16x128xf32>
    %18 = vector.shape_cast %17 : vector<1x16x128xf32> to vector<16x128xf32>
    %c0_8 = arith.constant 0 : index
    %c0_9 = arith.constant 0 : index
    %19 = vector.load %arg5[%c0_8, %c0_9] : memref<128x64xf32, #tpu.memory_space<vmem>>, vector<128x64xf32>
    %cst_10 = arith.constant dense<0.000000e+00> : vector<16x64xf32>
    %20 = tpu.matmul %18, %19, %cst_10 {dimension_numbers = #tpu.dot_dimension_numbers<[1], [0], [0], [1], [0, 0, 1, 1], [], []>} : vector<16x128xf32>, vector<128x64xf32>, vector<16x64xf32> -> vector<16x64xf32>
    %c0_11 = arith.constant 0 : index
    %c0_12 = arith.constant 0 : index
    %21 = vector.load %arg4[%c0_11, %c0_12] : memref<8x16xf32, #tpu.memory_space<vmem>>, vector<8x16xf32>
    %cst_13 = arith.constant dense<0.000000e+00> : vector<8x64xf32>
    %22 = tpu.matmul %21, %20, %cst_13 {dimension_numbers = #tpu.dot_dimension_numbers<[1], [0], [0], [1], [0, 0, 1, 1], [], []>} : vector<8x16xf32>, vector<16x64xf32>, vector<8x64xf32> -> vector<8x64xf32>
    %23 = vector.shape_cast %22 : vector<8x64xf32> to vector<1x8x64xf32>
    %c0_14 = arith.constant 0 : index
    %c0_15 = arith.constant 0 : index
    %c0_16 = arith.constant 0 : index
    %24 = vector.load %arg6[%c0_14, %c0_15, %c0_16] : memref<1x8x64xf32, #tpu.memory_space<vmem>>, vector<1x8x64xf32>
    tpu.vector_store %arg6[%c0_14, %c0_15, %c0_16], %23 {strides = array<i32>} : memref<1x8x64xf32, #tpu.memory_space<vmem>>, vector<1x8x64xf32>,
    return
  }
  func.func @transform_0(%arg0: i32) -> (i32, i32, i32) {
    %c0_i32 = arith.constant 0 : i32
    %c0_i32_0 = arith.constant 0 : i32
    %c0_i32_1 = arith.constant 0 : i32
    return %arg0, %c0_i32, %c0_i32_0 : i32, i32, i32
  }
  func.func @transform_1(%arg0: i32) -> (i32, i32, i32) {
    %c0_i32 = arith.constant 0 : i32
    %c0_i32_0 = arith.constant 0 : i32
    %c0_i32_1 = arith.constant 0 : i32
    return %arg0, %c0_i32, %c0_i32_0 : i32, i32, i32
  }
  func.func @transform_2(%arg0: i32) -> (i32, i32, i32) {
    %c0_i32 = arith.constant 0 : i32
    %c0_i32_0 = arith.constant 0 : i32
    %c0_i32_1 = arith.constant 0 : i32
    return %arg0, %c0_i32, %c0_i32_0 : i32, i32, i32
  }
  func.func @transform_3(%arg0: i32) -> (i32, i32) {
    %c0_i32 = arith.constant 0 : i32
    %c0_i32_0 = arith.constant 0 : i32
    %c0_i32_1 = arith.constant 0 : i32
    return %c0_i32, %c0_i32_0 : i32, i32
  }
  func.func @transform_4(%arg0: i32) -> (i32, i32) {
    %c0_i32 = arith.constant 0 : i32
    %c0_i32_0 = arith.constant 0 : i32
    %c0_i32_1 = arith.constant 0 : i32
    return %c0_i32, %c0_i32_0 : i32, i32
  }
  func.func @transform_5(%arg0: i32) -> (i32, i32, i32) {
    %c0_i32 = arith.constant 0 : i32
    %c0_i32_0 = arith.constant 0 : i32
    %c0_i32_1 = arith.constant 0 : i32
    return %arg0, %c0_i32, %c0_i32_0 : i32, i32, i32
  }
}

</mosaic_0001>

<llo_original>
// kernel: tile.24
$region0: #{tile.24}
  %s0 = inlined_call_operand.vmem [shape: f32[2,3,16,8], index: 0, kind: input, shape index: {}]
  %s1 = inlined_call_operand.vmem [shape: f32[2,3,128], index: 1, kind: output, shape index: {}]
  $region1: #{tile.24} parent=0
    #allocation0 [shape = 'u8[12288]{0}', space=vmem, size = 0x3000, scoped, tag = 'scoped mem for output reshape']
    %s2 = smov 3
    %v3 = vld [vmem:[%s0] ss:$16 sm:%s2]
    %s4 = smov 12
    %v5 = vld [vmem:[%s0] ss:$16 sm:%s4]
    %vm6 = vcmask 1043458
    %v7 = vsel %vm6, %v5, %v3
    %s8 = smov 48
    %v9 = vld [vmem:[%s0] ss:$16 sm:%s8]
    %vm10 = vcmask 1045508
    %v11 = vsel %vm10, %v9, %v7
    %vm12 = vcmask 64512
    %13 = vst.msk [vmem:[#allocation0] sm:$0x3] %vm12, %v11
    %s14 = scalar_lea.vmem [#allocation0], 6
    %15 = vst.msk [vmem:[%s14] sm:$0xc] %vm12, %v11
    %s16 = scalar_lea.vmem [#allocation0], 12
    %17 = vst.msk [vmem:[%s16] sm:$0x30] %vm12, %v11
    %s18 = scalar_lea.vmem %s0, 15
    %s19 = smov 3
    %v20 = vld [vmem:[%s18] ss:$16 sm:%s19]
    %s21 = scalar_lea.vmem %s0, 15
    %s22 = smov 12
    %v23 = vld [vmem:[%s21] ss:$16 sm:%s22]
    %vm24 = vcmask 1043458
    %v25 = vsel %vm24, %v23, %v20
    %s26 = scalar_lea.vmem %s0, 15
    %s27 = smov 48
    %v28 = vld [vmem:[%s26] ss:$16 sm:%s27]
    %vm29 = vcmask 1045508
    %v30 = vsel %vm29, %v28, %v25
    %31 = vrot.lane.b32.xlu0 %v30, 120
    %v32 = vpop.permute.xlu0 %31
    %vm33 = vcmask 1048512
    %34 = vst.msk [vmem:[#allocation0] sm:$0x3] %vm33, %v32
    %s35 = scalar_lea.vmem [#allocation0], 6
    %36 = vst.msk [vmem:[%s35] sm:$0xc] %vm33, %v32
    %s37 = scalar_lea.vmem [#allocation0], 12
    %38 = vst.msk [vmem:[%s37] sm:$0x30] %vm33, %v32
    %s39 = scalar_lea.vmem %s0, 14
    %s40 = smov 3
    %v41 = vld [vmem:[%s39] ss:$16 sm:%s40]
    %s42 = scalar_lea.vmem %s0, 14
    %s43 = smov 12
    %v44 = vld [vmem:[%s42] ss:$16 sm:%s43]
    %vm45 = vcmask 1043458
    %v46 = vsel %vm45, %v44, %v41
    %s47 = scalar_lea.vmem %s0, 14
    %s48 = smov 48
    %v49 = vld [vmem:[%s47] ss:$16 sm:%s48]
    %vm50 = vcmask 1045508
    %v51 = vsel %vm50, %v49, %v46
    %52 = vrot.lane.b32.xlu0 %v51, 112
    %v53 = vpop.permute.xlu0 %52
    %vm54 = vcmask 982912
    %55 = vst.msk [vmem:[#allocation0] sm:$0x3] %vm54, %v53
    %s56 = scalar_lea.vmem [#allocation0], 6
    %57 = vst.msk [vmem:[%s56] sm:$0xc] %vm54, %v53
    %s58 = scalar_lea.vmem [#allocation0], 12
    %59 = vst.msk [vmem:[%s58] sm:$0x30] %vm54, %v53
    %s60 = scalar_lea.vmem %s0, 13
    %s61 = smov 3
    %v62 = vld [vmem:[%s60] ss:$16 sm:%s61]
    %s63 = scalar_lea.vmem %s0, 13
    %s64 = smov 12
    %v65 = vld [vmem:[%s63] ss:$16 sm:%s64]
    %vm66 = vcmask 1043458
    %v67 = vsel %vm66, %v65, %v62
    %s68 = scalar_lea.vmem %s0, 13
    %s69 = smov 48
    %v70 = vld [vmem:[%s68] ss:$16 sm:%s69]
    %vm71 = vcmask 1045508
    %v72 = vsel %vm71, %v70, %v67
    %73 = vrot.lane.b32.xlu0 %v72, 104
    %v74 = vpop.permute.xlu0 %73
    %vm75 = vcmask 917312
    %76 = vst.msk [vmem:[#allocation0] sm:$0x3] %vm75, %v74
    %s77 = scalar_lea.vmem [#allocation0], 6
    %78 = vst.msk [vmem:[%s77] sm:$0xc] %vm75, %v74
    %s79 = scalar_lea.vmem [#allocation0], 12
    %80 = vst.msk [vmem:[%s79] sm:$0x30] %vm75, %v74
    %s81 = scalar_lea.vmem %s0, 12
    %s82 = smov 3
    %v83 = vld [vmem:[%s81] ss:$16 sm:%s82]
    %s84 = scalar_lea.vmem %s0, 12
    %s85 = smov 12
    %v86 = vld [vmem:[%s84] ss:$16 sm:%s85]
    %vm87 = vcmask 1043458
    %v88 = vsel %vm87, %v86, %v83
    %s89 = scalar_lea.vmem %s0, 12
    %s90 = smov 48
    %v91 = vld [vmem:[%s89] ss:$16 sm:%s90]
    %vm92 = vcmask 1045508
    %v93 = vsel %vm92, %v91, %v88
    %94 = vrot.lane.b32.xlu0 %v93, 96
    %v95 = vpop.permute.xlu0 %94
    %vm96 = vcmask 851712
    %97 = vst.msk [vmem:[#allocation0] sm:$0x3] %vm96, %v95
    %s98 = scalar_lea.vmem [#allocation0], 6
    %99 = vst.msk [vmem:[%s98] sm:$0xc] %vm96, %v95
    %s100 = scalar_lea.vmem [#allocation0], 12
    %101 = vst.msk [vmem:[%s100] sm:$0x30] %vm96, %v95
    %s102 = scalar_lea.vmem %s0, 11
    %s103 = smov 3
    %v104 = vld [vmem:[%s102] ss:$16 sm:%s103]
    %s105 = scalar_lea.vmem %s0, 11
    %s106 = smov 12
    %v107 = vld [vmem:[%s105] ss:$16 sm:%s106]
    %vm108 = vcmask 1043458
    %v109 = vsel %vm108, %v107, %v104
    %s110 = scalar_lea.vmem %s0, 11
    %s111 = smov 48
    %v112 = vld [vmem:[%s110] ss:$16 sm:%s111]
    %vm113 = vcmask 1045508
    %v114 = vsel %vm113, %v112, %v109
    %115 = vrot.lane.b32.xlu0 %v114, 88
    %v116 = vpop.permute.xlu0 %115
    %vm117 = vcmask 786112
    %118 = vst.msk [vmem:[#allocation0] sm:$0x3] %vm117, %v116
    %s119 = scalar_lea.vmem [#allocation0], 6
    %120 = vst.msk [vmem:[%s119] sm:$0xc] %vm117, %v116
    %s121 = scalar_lea.vmem [#allocation0], 12
    %122 = vst.msk [vmem:[%s121] sm:$0x30] %vm117, %v116
    %s123 = scalar_lea.vmem %s0, 10
    %s124 = smov 3
    %v125 = vld [vmem:[%s123] ss:$16 sm:%s124]
    %s126 = scalar_lea.vmem %s0, 10
    %s127 = smov 12
    %v128 = vld [vmem:[%s126] ss:$16 sm:%s127]
    %vm129 = vcmask 1043458
    %v130 = vsel %vm129, %v128, %v125
    %s131 = scalar_lea.vmem %s0, 10
    %s132 = smov 48
    %v133 = vld [vmem:[%s131] ss:$16 sm:%s132]
    %vm134 = vcmask 1045508
    %v135 = vsel %vm134, %v133, %v130
    %136 = vrot.lane.b32.xlu0 %v135, 80
    %v137 = vpop.permute.xlu0 %136
    %vm138 = vcmask 720512
    %139 = vst.msk [vmem:[#allocation0] sm:$0x3] %vm138, %v137
    %s140 = scalar_lea.vmem [#allocation0], 6
    %141 = vst.msk [vmem:[%s140] sm:$0xc] %vm138, %v137
    %s142 = scalar_lea.vmem [#allocation0], 12
    %143 = vst.msk [vmem:[%s142] sm:$0x30] %vm138, %v137
    %s144 = scalar_lea.vmem %s0, 9
    %s145 = smov 3
    %v146 = vld [vmem:[%s144] ss:$16 sm:%s145]
    %s147 = scalar_lea.vmem %s0, 9
    %s148 = smov 12
    %v149 = vld [vmem:[%s147] ss:$16 sm:%s148]
    %vm150 = vcmask 1043458
    %v151 = vsel %vm150, %v149, %v146
    %s152 = scalar_lea.vmem %s0, 9
    %s153 = smov 48
    %v154 = vld [vmem:[%s152] ss:$16 sm:%s153]
    %vm155 = vcmask 1045508
    %v156 = vsel %vm155, %v154, %v151
    %157 = vrot.lane.b32.xlu0 %v156, 72
    %v158 = vpop.permute.xlu0 %157
    %vm159 = vcmask 654912
    %160 = vst.msk [vmem:[#allocation0] sm:$0x3] %vm159, %v158
    %s161 = scalar_lea.vmem [#allocation0], 6
    %162 = vst.msk [vmem:[%s161] sm:$0xc] %vm159, %v158
    %s163 = scalar_lea.vmem [#allocation0], 12
    %164 = vst.msk [vmem:[%s163] sm:$0x30] %vm159, %v158
    %s165 = scalar_lea.vmem %s0, 8
    %s166 = smov 3
    %v167 = vld [vmem:[%s165] ss:$16 sm:%s166]
    %s168 = scalar_lea.vmem %s0, 8
    %s169 = smov 12
    %v170 = vld [vmem:[%s168] ss:$16 sm:%s169]
    %vm171 = vcmask 1043458
    %v172 = vsel %vm171, %v170, %v167
    %s173 = scalar_lea.vmem %s0, 8
    %s174 = smov 48
    %v175 = vld [vmem:[%s173] ss:$16 sm:%s174]
    %vm176 = vcmask 1045508
    %v177 = vsel %vm176, %v175, %v172
    %178 = vrot.lane.b32.xlu0 %v177, 64
    %v179 = vpop.permute.xlu0 %178
    %vm180 = vcmask 589312
    %181 = vst.msk [vmem:[#allocation0] sm:$0x3] %vm180, %v179
    %s182 = scalar_lea.vmem [#allocation0], 6
    %183 = vst.msk [vmem:[%s182] sm:$0xc] %vm180, %v179
    %s184 = scalar_lea.vmem [#allocation0], 12
    %185 = vst.msk [vmem:[%s184] sm:$0x30] %vm180, %v179
    %s186 = scalar_lea.vmem %s0, 7
    %s187 = smov 3
    %v188 = vld [vmem:[%s186] ss:$16 sm:%s187]
    %s189 = scalar_lea.vmem %s0, 7
    %s190 = smov 12
    %v191 = vld [vmem:[%s189] ss:$16 sm:%s190]
    %vm192 = vcmask 1043458
    %v193 = vsel %vm192, %v191, %v188
    %s194 = scalar_lea.vmem %s0, 7
    %s195 = smov 48
    %v196 = vld [vmem:[%s194] ss:$16 sm:%s195]
    %vm197 = vcmask 1045508
    %v198 = vsel %vm197, %v196, %v193
    %199 = vrot.lane.b32.xlu0 %v198, 56
    %v200 = vpop.permute.xlu0 %199
    %vm201 = vcmask 523712
    %202 = vst.msk [vmem:[#allocation0] sm:$0x3] %vm201, %v200
    %s203 = scalar_lea.vmem [#allocation0], 6
    %204 = vst.msk [vmem:[%s203] sm:$0xc] %vm201, %v200
    %s205 = scalar_lea.vmem [#allocation0], 12
    %206 = vst.msk [vmem:[%s205] sm:$0x30] %vm201, %v200
    %s207 = scalar_lea.vmem %s0, 6
    %s208 = smov 3
    %v209 = vld [vmem:[%s207] ss:$16 sm:%s208]
    %s210 = scalar_lea.vmem %s0, 6
    %s211 = smov 12
    %v212 = vld [vmem:[%s210] ss:$16 sm:%s211]
    %vm213 = vcmask 1043458
    %v214 = vsel %vm213, %v212, %v209
    %s215 = scalar_lea.vmem %s0, 6
    %s216 = smov 48
    %v217 = vld [vmem:[%s215] ss:$16 sm:%s216]
    %vm218 = vcmask 1045508
    %v219 = vsel %vm218, %v217, %v214
    %220 = vrot.lane.b32.xlu0 %v219, 48
    %v221 = vpop.permute.xlu0 %220
    %vm222 = vcmask 458112
    %223 = vst.msk [vmem:[#allocation0] sm:$0x3] %vm222, %v221
    %s224 = scalar_lea.vmem [#allocation0], 6
    %225 = vst.msk [vmem:[%s224] sm:$0xc] %vm222, %v221
    %s226 = scalar_lea.vmem [#allocation0], 12
    %227 = vst.msk [vmem:[%s226] sm:$0x30] %vm222, %v221
    %s228 = scalar_lea.vmem %s0, 5
    %s229 = smov 3
    %v230 = vld [vmem:[%s228] ss:$16 sm:%s229]
    %s231 = scalar_lea.vmem %s0, 5
    %s232 = smov 12
    %v233 = vld [vmem:[%s231] ss:$16 sm:%s232]
    %vm234 = vcmask 1043458
    %v235 = vsel %vm234, %v233, %v230
    %s236 = scalar_lea.vmem %s0, 5
    %s237 = smov 48
    %v238 = vld [vmem:[%s236] ss:$16 sm:%s237]
    %vm239 = vcmask 1045508
    %v240 = vsel %vm239, %v238, %v235
    %241 = vrot.lane.b32.xlu0 %v240, 40
    %v242 = vpop.permute.xlu0 %241
    %vm243 = vcmask 392512
    %244 = vst.msk [vmem:[#allocation0] sm:$0x3] %vm243, %v242
    %s245 = scalar_lea.vmem [#allocation0], 6
    %246 = vst.msk [vmem:[%s245] sm:$0xc] %vm243, %v242
    %s247 = scalar_lea.vmem [#allocation0], 12
    %248 = vst.msk [vmem:[%s247] sm:$0x30] %vm243, %v242
    %s249 = scalar_lea.vmem %s0, 4
    %s250 = smov 3
    %v251 = vld [vmem:[%s249] ss:$16 sm:%s250]
    %s252 = scalar_lea.vmem %s0, 4
    %s253 = smov 12
    %v254 = vld [vmem:[%s252] ss:$16 sm:%s253]
    %vm255 = vcmask 1043458
    %v256 = vsel %vm255, %v254, %v251
    %s257 = scalar_lea.vmem %s0, 4
    %s258 = smov 48
    %v259 = vld [vmem:[%s257] ss:$16 sm:%s258]
    %vm260 = vcmask 1045508
    %v261 = vsel %vm260, %v259, %v256
    %262 = vrot.lane.b32.xlu0 %v261, 32
    %v263 = vpop.permute.xlu0 %262
    %vm264 = vcmask 326912
    %265 = vst.msk [vmem:[#allocation0] sm:$0x3] %vm264, %v263
    %s266 = scalar_lea.vmem [#allocation0], 6
    %267 = vst.msk [vmem:[%s266] sm:$0xc] %vm264, %v263
    %s268 = scalar_lea.vmem [#allocation0], 12
    %269 = vst.msk [vmem:[%s268] sm:$0x30] %vm264, %v263
    %s270 = scalar_lea.vmem %s0, 3
    %s271 = smov 3
    %v272 = vld [vmem:[%s270] ss:$16 sm:%s271]
    %s273 = scalar_lea.vmem %s0, 3
    %s274 = smov 12
    %v275 = vld [vmem:[%s273] ss:$16 sm:%s274]
    %vm276 = vcmask 1043458
    %v277 = vsel %vm276, %v275, %v272
    %s278 = scalar_lea.vmem %s0, 3
    %s279 = smov 48
    %v280 = vld [vmem:[%s278] ss:$16 sm:%s279]
    %vm281 = vcmask 1045508
    %v282 = vsel %vm281, %v280, %v277
    %283 = vrot.lane.b32.xlu0 %v282, 24
    %v284 = vpop.permute.xlu0 %283
    %vm285 = vcmask 261312
    %286 = vst.msk [vmem:[#allocation0] sm:$0x3] %vm285, %v284
    %s287 = scalar_lea.vmem [#allocation0], 6
    %288 = vst.msk [vmem:[%s287] sm:$0xc] %vm285, %v284
    %s289 = scalar_lea.vmem [#allocation0], 12
    %290 = vst.msk [vmem:[%s289] sm:$0x30] %vm285, %v284
    %s291 = scalar_lea.vmem %s0, 2
    %s292 = smov 3
    %v293 = vld [vmem:[%s291] ss:$16 sm:%s292]
    %s294 = scalar_lea.vmem %s0, 2
    %s295 = smov 12
    %v296 = vld [vmem:[%s294] ss:$16 sm:%s295]
    %vm297 = vcmask 1043458
    %v298 = vsel %vm297, %v296, %v293
    %s299 = scalar_lea.vmem %s0, 2
    %s300 = smov 48
    %v301 = vld [vmem:[%s299] ss:$16 sm:%s300]
    %vm302 = vcmask 1045508
    %v303 = vsel %vm302, %v301, %v298
    %304 = vrot.lane.b32.xlu0 %v303, 16
    %v305 = vpop.permute.xlu0 %304
    %vm306 = vcmask 195712
    %307 = vst.msk [vmem:[#allocation0] sm:$0x3] %vm306, %v305
    %s308 = scalar_lea.vmem [#allocation0], 6
    %309 = vst.msk [vmem:[%s308] sm:$0xc] %vm306, %v305
    %s310 = scalar_lea.vmem [#allocation0], 12
    %311 = vst.msk [vmem:[%s310] sm:$0x30] %vm306, %v305
    %s312 = scalar_lea.vmem %s0, 1
    %s313 = smov 3
    %v314 = vld [vmem:[%s312] ss:$16 sm:%s313]
    %s315 = scalar_lea.vmem %s0, 1
    %s316 = smov 12
    %v317 = vld [vmem:[%s315] ss:$16 sm:%s316]
    %vm318 = vcmask 1043458
    %v319 = vsel %vm318, %v317, %v314
    %s320 = scalar_lea.vmem %s0, 1
    %s321 = smov 48
    %v322 = vld [vmem:[%s320] ss:$16 sm:%s321]
    %vm323 = vcmask 1045508
    %v324 = vsel %vm323, %v322, %v319
    %325 = vrot.lane.b32.xlu0 %v324, 8
    %v326 = vpop.permute.xlu0 %325
    %vm327 = vcmask 130112
    %328 = vst.msk [vmem:[#allocation0] sm:$0x3] %vm327, %v326
    %s329 = scalar_lea.vmem [#allocation0], 6
    %330 = vst.msk [vmem:[%s329] sm:$0xc] %vm327, %v326
    %s331 = scalar_lea.vmem [#allocation0], 12
    %332 = vst.msk [vmem:[%s331] sm:$0x30] %vm327, %v326
    %s334 = sshllo.u32 0, 2
    %v336 = vld [vmem:[#allocation0] sm:%s334]
    %s337 = sshllo.u32 0, 2
    %338 = vst [vmem:[%s1] sm:%s337] %v336
    %s339 = scalar_lea.vmem [#allocation0], 8
    %v340 = vld [vmem:[%s339] sm:%s334]
    %s341 = sshllo.u32 0, 2
    %s342 = scalar_lea.vmem %s1, 2
    %343 = vst [vmem:[%s342] sm:%s341] %v340
    %s344 = scalar_lea.vmem [#allocation0], 16
    %v345 = vld [vmem:[%s344] sm:%s334]
    %s346 = sshllo.u32 0, 2
    %s347 = smul.addr 2, 2
    %s348 = scalar_lea.vmem %s1, %s347
    %349 = vst [vmem:[%s348] sm:%s346] %v345

// kernel: residual_conv_block_forward.3
$region0: #{residual_conv_block_forward.3}
  #allocation0 [shape = 'u32[]', space=smem, size = 0x4, offset = 0x4, fixed_abs, tag = 'smem constant byte address 0x4 - core index']
  #allocation1 [shape = 'u32[144,128]{1,0:T(1,128)}', space=vmem, size = 0x12000, scoped, tag = 'internal scratch']
  %s0 = inlined_call_operand.vmem [shape: bf16[2,16,64], index: 0, kind: input, shape index: {}]
  %s1 = inlined_call_operand.vmem [shape: bf16[3,64,128], index: 1, kind: input, shape index: {}]
  %s2 = inlined_call_operand.vmem [shape: bf16[64,128], index: 2, kind: input, shape index: {}]
  %s3 = inlined_call_operand.vmem [shape: f32[128,8], index: 3, kind: input, shape index: {}]
  %s4 = inlined_call_operand.vmem [shape: bf16[2,16,128], index: 4, kind: output, shape index: {0}]
  %s5 = inlined_call_operand.vmem [shape: bf16[2,16,128], index: 5, kind: output, shape index: {1}]
  %s6 = inlined_call_operand.vmem [shape: f32[2,2,8], index: 6, kind: output, shape index: {2}]
  %7 = xla_tuple %s4, %s5, %s6
  %s8 = sld [smem:[#allocation0]]
  $region65: #{residual_conv_block_forward.3} parent=0
    _
  %s10 = ssub.s32 1, %s8
  %s11 = scalar_select 0, %s10, %s8
  loop: start=0, step=1, limit=4
  $region2: #{residual_conv_block_forward.3} parent=0 // loop_pre_header
    _
  $region3: #{residual_conv_block_forward.3} parent=0 // loop_header
    %s13 = sphi 0, %s17
    %p14 = scmp.ge.s32.totalorder %s13, 4
    %s23 = sphi 0, %s25
    %s26 = sphi 0, %s23
    %s27 = sphi 0, %s26
    %s43 = sphi 0, %s27
    %s47 = sphi 0, %s47
    %s49 = sphi 0, %s47
    %s50 = sphi 0, %s49
    %s64 = sphi 0, %s50
    %s68 = sphi 0, %s68
    %s70 = sphi 0, %s68
    %s71 = sphi 0, %s70
    %s85 = sphi 0, %s71
    %s89 = sphi 0, %s89
    %s91 = sphi 0, %s89
    %s92 = sphi 0, %s91
    %s106 = sphi 0, %s92
    %s112 = sphi 0, %s114
    %s115 = sphi 0, %s112
    %s116 = sphi 0, %s115
    %s132 = sphi 0, %s116
    %s138 = sphi 0, %s140
    %s141 = sphi 0, %s138
    %s142 = sphi 0, %s141
    %s158 = sphi 0, %s142
    %s164 = sphi 0, %s166
    %s167 = sphi 0, %s164
    %s168 = sphi 0, %s167
    %s184 = sphi 0, %s168
  $region4: #{residual_conv_block_forward.3} parent=0 // loop_header_branch
    %16 = sbr.rel (%p14) target = $region8
  $region5: #{residual_conv_block_forward.3} parent=0 // loop_body
    %s18 = ssub.s32 %s13, 1
    %s19 = ssub.s32 %s13, 2
    %s20 = sadd.s32 %s13, 1
    %s21 = ssub.s32 %s13, %s20
    %p22 = scmp.eq.s32.totalorder %s21, 0
    %s24 = sadd.s32 %s23, 1
    %s25 = scalar_select %p22, %s23, %s24
    %p28 = pneg %p22
    %p29 = scmp.eq.s32.totalorder %s13, 1
    %p30 = por %p28, %p29
    %p31 = scmp.ne.s32.totalorder %s23, %s26
    %p32 = scmp.eq.s32.totalorder %s13, 0
    %p33 = por %p31, %p32
    %p34 = scmp.ne.s32.totalorder %s23, %s26
    %p35 = scmp.eq.s32.totalorder %s18, 1
    %p36 = por %p34, %p35
    %p37 = scmp.ne.s32.totalorder %s26, %s27
    %p38 = scmp.eq.s32.totalorder %s18, 0
    %p39 = por %p37, %p38
    %p40 = scmp.ne.s32.totalorder %s26, %s27
    %p41 = scmp.eq.s32.totalorder %s19, 1
    %p42 = por %p40, %p41
    %p44 = scmp.ne.s32.totalorder %s27, %s43
    %p45 = scmp.eq.s32.totalorder %s19, 0
    %p46 = por %p44, %p45
    %s48 = sadd.s32 %s47, 1
    %p51 = scmp.eq.s32.totalorder %s13, 1
    %p52 = scmp.ne.s32.totalorder %s47, %s49
    %p53 = scmp.eq.s32.totalorder %s13, 0
    %p54 = por %p52, %p53
    %p55 = scmp.ne.s32.totalorder %s47, %s49
    %p56 = scmp.eq.s32.totalorder %s18, 1
    %p57 = por %p55, %p56
    %p58 = scmp.ne.s32.totalorder %s49, %s50
    %p59 = scmp.eq.s32.totalorder %s18, 0
    %p60 = por %p58, %p59
    %p61 = scmp.ne.s32.totalorder %s49, %s50
    %p62 = scmp.eq.s32.totalorder %s19, 1
    %p63 = por %p61, %p62
    %p65 = scmp.ne.s32.totalorder %s50, %s64
    %p66 = scmp.eq.s32.totalorder %s19, 0
    %p67 = por %p65, %p66
    %s69 = sadd.s32 %s68, 1
    %p72 = scmp.eq.s32.totalorder %s13, 1
    %p73 = scmp.ne.s32.totalorder %s68, %s70
    %p74 = scmp.eq.s32.totalorder %s13, 0
    %p75 = por %p73, %p74
    %p76 = scmp.ne.s32.totalorder %s68, %s70
    %p77 = scmp.eq.s32.totalorder %s18, 1
    %p78 = por %p76, %p77
    %p79 = scmp.ne.s32.totalorder %s70, %s71
    %p80 = scmp.eq.s32.totalorder %s18, 0
    %p81 = por %p79, %p80
    %p82 = scmp.ne.s32.totalorder %s70, %s71
    %p83 = scmp.eq.s32.totalorder %s19, 1
    %p84 = por %p82, %p83
    %p86 = scmp.ne.s32.totalorder %s71, %s85
    %p87 = scmp.eq.s32.totalorder %s19, 0
    %p88 = por %p86, %p87
    %s90 = sadd.s32 %s89, 1
    %p93 = scmp.eq.s32.totalorder %s13, 1
    %p94 = scmp.ne.s32.totalorder %s89, %s91
    %p95 = scmp.eq.s32.totalorder %s13, 0
    %p96 = por %p94, %p95
    %p97 = scmp.ne.s32.totalorder %s89, %s91
    %p98 = scmp.eq.s32.totalorder %s18, 1
    %p99 = por %p97, %p98
    %p100 = scmp.ne.s32.totalorder %s91, %s92
    %p101 = scmp.eq.s32.totalorder %s18, 0
    %p102 = por %p100, %p101
    %p103 = scmp.ne.s32.totalorder %s91, %s92
    %p104 = scmp.eq.s32.totalorder %s19, 1
    %p105 = por %p103, %p104
    %p107 = scmp.ne.s32.totalorder %s92, %s106
    %p108 = scmp.eq.s32.totalorder %s19, 0
    %p109 = por %p107, %p108
    %s110 = ssub.s32 %s13, %s20
    %p111 = scmp.eq.s32.totalorder %s110, 0
    %s113 = sadd.s32 %s112, 1
    %s114 = scalar_select %p111, %s112, %s113
    %p117 = pneg %p111
    %p118 = scmp.eq.s32.totalorder %s13, 1
    %p119 = por %p117, %p118
    %p120 = scmp.ne.s32.totalorder %s112, %s115
    %p121 = scmp.eq.s32.totalorder %s13, 0
    %p122 = por %p120, %p121
    %p123 = scmp.ne.s32.totalorder %s112, %s115
    %p124 = scmp.eq.s32.totalorder %s18, 1
    %p125 = por %p123, %p124
    %p126 = scmp.ne.s32.totalorder %s115, %s116
    %p127 = scmp.eq.s32.totalorder %s18, 0
    %p128 = por %p126, %p127
    %p129 = scmp.ne.s32.totalorder %s115, %s116
    %p130 = scmp.eq.s32.totalorder %s19, 1
    %p131 = por %p129, %p130
    %p133 = scmp.ne.s32.totalorder %s116, %s132
    %p134 = scmp.eq.s32.totalorder %s19, 0
    %p135 = por %p133, %p134
    %s136 = ssub.s32 %s13, %s20
    %p137 = scmp.eq.s32.totalorder %s136, 0
    %s139 = sadd.s32 %s138, 1
    %s140 = scalar_select %p137, %s138, %s139
    %p143 = pneg %p137
    %p144 = scmp.eq.s32.totalorder %s13, 1
    %p145 = por %p143, %p144
    %p146 = scmp.ne.s32.totalorder %s138, %s141
    %p147 = scmp.eq.s32.totalorder %s13, 0
    %p148 = por %p146, %p147
    %p149 = scmp.ne.s32.totalorder %s138, %s141
    %p150 = scmp.eq.s32.totalorder %s18, 1
    %p151 = por %p149, %p150
    %p152 = scmp.ne.s32.totalorder %s141, %s142
    %p153 = scmp.eq.s32.totalorder %s18, 0
    %p154 = por %p152, %p153
    %p155 = scmp.ne.s32.totalorder %s141, %s142
    %p156 = scmp.eq.s32.totalorder %s19, 1
    %p157 = por %p155, %p156
    %p159 = scmp.ne.s32.totalorder %s142, %s158
    %p160 = scmp.eq.s32.totalorder %s19, 0
    %p161 = por %p159, %p160
    %s162 = ssub.s32 %s13, %s20
    %p163 = scmp.eq.s32.totalorder %s162, 0
    %s165 = sadd.s32 %s164, 1
    %s166 = scalar_select %p163, %s164, %s165
    %p169 = pneg %p163
    %p170 = scmp.eq.s32.totalorder %s13, 1
    %p171 = por %p169, %p170
    %p172 = scmp.ne.s32.totalorder %s164, %s167
    %p173 = scmp.eq.s32.totalorder %s13, 0
    %p174 = por %p172, %p173
    %p175 = scmp.ne.s32.totalorder %s164, %s167
    %p176 = scmp.eq.s32.totalorder %s18, 1
    %p177 = por %p175, %p176
    %p178 = scmp.ne.s32.totalorder %s167, %s168
    %p179 = scmp.eq.s32.totalorder %s18, 0
    %p180 = por %p178, %p179
    %p181 = scmp.ne.s32.totalorder %s167, %s168
    %p182 = scmp.eq.s32.totalorder %s19, 1
    %p183 = por %p181, %p182
    %p185 = scmp.ne.s32.totalorder %s168, %s184
    %p186 = scmp.eq.s32.totalorder %s19, 0
    %p187 = por %p185, %p186
    %p188 = scmp.le.s32.totalorder 1, %s13
    %p189 = scmp.lt.s32.totalorder %s13, 3
    %p190 = pnand %p188, %p189
    %p191 = pneg %p190
    // Predicated region
    $region9: #{residual_conv_block_forward.3} parent=5 // pred_check
      _
    $region10: #{residual_conv_block_forward.3} parent=5 // pred_check_branch
      %193 = sbr.rel (%p190) target = $region12
    $region11: #{residual_conv_block_forward.3} parent=5 // pred_region
      %s194 = ssub.s32 %s13, 1
      // Predicated region
      $region13: #{residual_conv_block_forward.3} parent=11 // pred_check
        %p195 = pneg %p60
      $region14: #{residual_conv_block_forward.3} parent=11 // pred_check_branch
        %197 = sbr.rel (%p195) target = $region16
      $region15: #{residual_conv_block_forward.3} parent=11 // pred_region
        _
      $region16: #{residual_conv_block_forward.3} parent=11 // pred_fallthru
        _
      // Predicated region
      $region17: #{residual_conv_block_forward.3} parent=11 // pred_check
        %p198 = pneg %p81
      $region18: #{residual_conv_block_forward.3} parent=11 // pred_check_branch
        %200 = sbr.rel (%p198) target = $region20
      $region19: #{residual_conv_block_forward.3} parent=11 // pred_region
        _
      $region20: #{residual_conv_block_forward.3} parent=11 // pred_fallthru
        _
      // Predicated region
      $region21: #{residual_conv_block_forward.3} parent=11 // pred_check
        %p201 = pneg %p102
      $region22: #{residual_conv_block_forward.3} parent=11 // pred_check_branch
        %203 = sbr.rel (%p201) target = $region24
      $region23: #{residual_conv_block_forward.3} parent=11 // pred_region
        _
      $region24: #{residual_conv_block_forward.3} parent=11 // pred_fallthru
        _
    $region12: #{residual_conv_block_forward.3} parent=5 // pred_fallthru
      _
    %p204 = scmp.lt.s32.totalorder %s13, 2
    // Predicated region
    $region25: #{residual_conv_block_forward.3} parent=5 // pred_check
      %p205 = pneg %p204
    $region26: #{residual_conv_block_forward.3} parent=5 // pred_check_branch
      %207 = sbr.rel (%p205) target = $region28
    $region27: #{residual_conv_block_forward.3} parent=5 // pred_region
      // Predicated region
      $region29: #{residual_conv_block_forward.3} parent=27 // pred_check
        %p208 = pneg %p33
      $region30: #{residual_conv_block_forward.3} parent=27 // pred_check_branch
        %210 = sbr.rel (%p208) target = $region32
      $region31: #{residual_conv_block_forward.3} parent=27 // pred_region
        %p211 = scmp.lt.s32.totalorder %s13, 1
        %s212 = scalar_select %p211, %s13, 1
        %s213 = smul.addr %s212, 2
        %s214 = smul.addr %s213, 4
        %s215 = scalar_lea.vmem %s0, %s214
      $region32: #{residual_conv_block_forward.3} parent=27 // pred_fallthru
        _
    $region28: #{residual_conv_block_forward.3} parent=5 // pred_fallthru
      _
    %p216 = scmp.le.s32.totalorder 1, %s13
    %p217 = scmp.lt.s32.totalorder %s13, 3
    %p218 = pnand %p216, %p217
    %p219 = pneg %p218
    // Predicated region
    $region33: #{residual_conv_block_forward.3} parent=5 // pred_check
      _
    $region34: #{residual_conv_block_forward.3} parent=5 // pred_check_branch
      %221 = sbr.rel (%p218) target = $region36
    $region35: #{residual_conv_block_forward.3} parent=5 // pred_region
      %s222 = ssub.s32 %s13, 1
      %p223 = scmp.lt.s32.totalorder %s18, 1
      %s224 = scalar_select %p223, %s18, 1
      %s225 = smul.addr %s224, 2
      %s226 = smul.addr %s225, 4
      %s227 = scalar_lea.vmem %s0, %s226
      %p228 = pneg %p39
      %p229 = pneg %p36
      %p230 = pneg %p60
      %p231 = pneg %p57
      %p232 = pneg %p81
      %p233 = pneg %p78
      %p234 = pneg %p102
      %p235 = pneg %p99
      %p236 = pneg %p128
      %p237 = pneg %p125
      %p238 = scmp.lt.s32.totalorder %s18, 1
      %s239 = scalar_select %p238, %s18, 1
      %s240 = smul.addr %s239, 2
      %s241 = smul.addr %s240, 4
      %s242 = scalar_lea.vmem %s4, %s241
      %p243 = pneg %p154
      %p244 = pneg %p151
      %p245 = scmp.lt.s32.totalorder %s18, 1
      %s246 = scalar_select %p245, %s18, 1
      %s247 = smul.addr %s246, 2
      %s248 = smul.addr %s247, 4
      %s249 = scalar_lea.vmem %s5, %s248
      %p250 = pneg %p180
      %p251 = pneg %p177
      %p252 = scmp.lt.s32.totalorder %s18, 1
      %s253 = scalar_select %p252, %s18, 1
      %s254 = smul.addr %s253, 2
      %s255 = scalar_lea.vmem %s6, %s254
      %p256 = scmp.lt.s32.totalorder %s18, 1
      %s257 = scalar_select %p256, %s18, 1
      %s258 = smul.addr %s257, 2
      %s259 = smul.addr %s258, 4
      %s260 = scalar_lea.vmem %s0, %s259
      %p261 = scmp.lt.s32.totalorder %s18, 1
      %s262 = scalar_select %p261, %s18, 1
      %s263 = smul.addr %s262, 2
      %s264 = smul.addr %s263, 4
      %s265 = scalar_lea.vmem %s4, %s264
      %p266 = scmp.lt.s32.totalorder %s18, 1
      %s267 = scalar_select %p266, %s18, 1
      %s268 = smul.addr %s267, 2
      %s269 = smul.addr %s268, 4
      %s270 = scalar_lea.vmem %s5, %s269
      %p271 = scmp.lt.s32.totalorder %s18, 1
      %s272 = scalar_select %p271, %s18, 1
      %s273 = smul.addr %s272, 2
      %s274 = scalar_lea.vmem %s6, %s273
      %v276 = vld [vmem:[%s260] sm:$0xf]
      %v277 = vld [vmem:[%s260 + $0x4] sm:$0xf]
      %v278 = vld [vmem:[%s1] sm:$0xf]
      %v279 = vld [vmem:[%s1 + $0x4] sm:$0xf]
      %v280 = vld [vmem:[%s1 + $0x8] sm:$0xf]
      %v281 = vld [vmem:[%s1 + $0xc] sm:$0xf]
      %v282 = vld [vmem:[%s1 + $0x10] sm:$0xf]
      %v283 = vld [vmem:[%s1 + $0x14] sm:$0xf]
      %v284 = vld [vmem:[%s1 + $0x18] sm:$0xf]
      %v285 = vld [vmem:[%s1 + $0x1c] sm:$0xf]
      %v288 = vunpack.c.l.b16 %v276
      %v289 = vunpack.c.l.b16 %v277
      %v290 = vpack.c.b16 %v289, %v288
      %v299 = vunpack.c.l.b16 %v278
      %v300 = vunpack.c.l.b16 %v279
      %v301 = vunpack.c.l.b16 %v280
      %v302 = vunpack.c.l.b16 %v281
      %v303 = vunpack.c.l.b16 %v282
      %v304 = vunpack.c.l.b16 %v283
      %v305 = vunpack.c.l.b16 %v284
      %v306 = vunpack.c.l.b16 %v285
      %v307 = vpack.c.b16 %v300, %v299
      %v308 = vpack.c.b16 %v302, %v301
      %v309 = vpack.c.b16 %v304, %v303
      %v310 = vpack.c.b16 %v306, %v305
      %vm315 = vcmask 523264
      %v317 = vsel %vm315, %v290, 0
      %319 = vmatprep.subr.bf16.mxu0 0
      %320 = vmatpush1.bf16.msra.mxu0 %v307
      %321 = vmatprep.subr.bf16.mxu0 0
      %322 = vmatpush1.bf16.msra.mxu0 %v308
      %323 = vmatprep.subr.bf16.mxu0 0
      %324 = vmatpush1.bf16.msra.mxu0 %v309
      %325 = vmatprep.subr.bf16.mxu0 0
      %326 = vmatpush1.bf16.msra.mxu0 %v310
      %327 = vmatprep.subr.bf16.mxu0 0
      %328 = vmatpush1.bf16.msra.mxu0 0
      %329 = vmatprep.subr.bf16.mxu0 0
      %330 = vmatpush1.bf16.msra.mxu0 0
      %331 = vmatprep.subr.bf16.mxu0 0
      %332 = vmatpush1.bf16.msra.mxu0 0
      %333 = vmatprep.subr.bf16.mxu0 0
      %334 = vmatpush1.bf16.msra.mxu0 0
      %335 = vmatprep.subr.bf16.mxu0 0
      %336 = vmatpush1.bf16.msra.mxu0 0
      %337 = vmatprep.subr.bf16.mxu0 0
      %338 = vmatpush1.bf16.msra.mxu0 0
      %339 = vmatprep.subr.bf16.mxu0 0
      %340 = vmatpush1.bf16.msra.mxu0 0
      %341 = vmatprep.subr.bf16.mxu0 0
      %342 = vmatpush1.bf16.msra.mxu0 0
      %343 = vmatprep.subr.bf16.mxu0 0
      %344 = vmatpush1.bf16.msra.mxu0 0
      %345 = vmatprep.subr.bf16.mxu0 0
      %346 = vmatpush1.bf16.msra.mxu0 0
      %347 = vmatprep.subr.bf16.mxu0 0
      %348 = vmatpush1.bf16.msra.mxu0 0
      %349 = vmatprep.subr.bf16.mxu0 0
      %350 = vmatpush1.bf16.msra.mxu0 0
      %351 = vmatprep.mubr.bf16.mxu0 0
      %352 = vmatmul.mubr.bf16.gmra.mrb[0].mxu0 %v317
      %v353 = vpop.f32.mrb[0].mxu0
      %v354 = vadd.f32 0.0, %v353
      %v355 = vpop.f32.mrb[0].mxu0
      %v356 = vpop.f32.mrb[0].mxu0
      %v357 = vadd.f32 0.0, %v356
      %v358 = vpop.f32.mrb[0].mxu0
      %359 = vdwg.mxu0
      %s360 = scalar_lea.vmem %s1, 32
      %v361 = vld [vmem:[%s360] sm:$0xf]
      %v362 = vld [vmem:[%s360 + $0x4] sm:$0xf]
      %v363 = vld [vmem:[%s360 + $0x8] sm:$0xf]
      %v364 = vld [vmem:[%s360 + $0xc] sm:$0xf]
      %v365 = vld [vmem:[%s360 + $0x10] sm:$0xf]
      %v366 = vld [vmem:[%s360 + $0x14] sm:$0xf]
      %v367 = vld [vmem:[%s360 + $0x18] sm:$0xf]
      %v368 = vld [vmem:[%s360 + $0x1c] sm:$0xf]
      %s369 = scalar_lea.vmem %s1, 64
      %v370 = vld [vmem:[%s369] sm:$0xf]
      %v371 = vld [vmem:[%s369 + $0x4] sm:$0xf]
      %v372 = vld [vmem:[%s369 + $0x8] sm:$0xf]
      %v373 = vld [vmem:[%s369 + $0xc] sm:$0xf]
      %v374 = vld [vmem:[%s369 + $0x10] sm:$0xf]
      %v375 = vld [vmem:[%s369 + $0x14] sm:$0xf]
      %v376 = vld [vmem:[%s369 + $0x18] sm:$0xf]
      %v377 = vld [vmem:[%s369 + $0x1c] sm:$0xf]
      %v386 = vunpack.c.l.b16 %v370
      %v387 = vunpack.c.l.b16 %v371
      %v388 = vunpack.c.l.b16 %v372
      %v389 = vunpack.c.l.b16 %v373
      %v390 = vunpack.c.l.b16 %v374
      %v391 = vunpack.c.l.b16 %v375
      %v392 = vunpack.c.l.b16 %v376
      %v393 = vunpack.c.l.b16 %v377
      %v394 = vpack.c.b16 %v387, %v386
      %v395 = vpack.c.b16 %v389, %v388
      %v396 = vpack.c.b16 %v391, %v390
      %v397 = vpack.c.b16 %v393, %v392
      %402 = vmatprep.subr.bf16.mxu0 0
      %403 = vmatpush1.bf16.msra.mxu0 %v394
      %404 = vmatprep.subr.bf16.mxu0 0
      %405 = vmatpush1.bf16.msra.mxu0 %v395
      %406 = vmatprep.subr.bf16.mxu0 0
      %407 = vmatpush1.bf16.msra.mxu0 %v396
      %408 = vmatprep.subr.bf16.mxu0 0
      %409 = vmatpush1.bf16.msra.mxu0 %v397
      %410 = vmatprep.subr.bf16.mxu0 0
      %411 = vmatpush1.bf16.msra.mxu0 0
      %412 = vmatprep.subr.bf16.mxu0 0
      %413 = vmatpush1.bf16.msra.mxu0 0
      %414 = vmatprep.subr.bf16.mxu0 0
      %415 = vmatpush1.bf16.msra.mxu0 0
      %416 = vmatprep.subr.bf16.mxu0 0
      %417 = vmatpush1.bf16.msra.mxu0 0
      %418 = vmatprep.subr.bf16.mxu0 0
      %419 = vmatpush1.bf16.msra.mxu0 0
      %420 = vmatprep.subr.bf16.mxu0 0
      %421 = vmatpush1.bf16.msra.mxu0 0
      %422 = vmatprep.subr.bf16.mxu0 0
      %423 = vmatpush1.bf16.msra.mxu0 0
      %424 = vmatprep.subr.bf16.mxu0 0
      %425 = vmatpush1.bf16.msra.mxu0 0
      %426 = vmatprep.subr.bf16.mxu0 0
      %427 = vmatpush1.bf16.msra.mxu0 0
      %428 = vmatprep.subr.bf16.mxu0 0
      %429 = vmatpush1.bf16.msra.mxu0 0
      %430 = vmatprep.subr.bf16.mxu0 0
      %431 = vmatpush1.bf16.msra.mxu0 0
      %432 = vmatprep.subr.bf16.mxu0 0
      %433 = vmatpush1.bf16.msra.mxu0 0
      %434 = vmatprep.mubr.bf16.mxu0 0
      %435 = vmatmul.mubr.bf16.gmra.mrb[0].mxu0 %v317
      %v436 = vpop.f32.mrb[0].mxu0
      %v437 = vadd.f32 0.0, %v436
      %v438 = vpop.f32.mrb[0].mxu0
      %v439 = vpop.f32.mrb[0].mxu0
      %v440 = vadd.f32 0.0, %v439
      %v441 = vpop.f32.mrb[0].mxu0
      %442 = vdwg.mxu0
      %v443 = vlaneseq
      %v444 = vshrl.u32 %v443, 7
      %v445 = vadd.s32 %v444, 8
      %vm446 = vcmp.lt.s32.totalorder %v444, 0
      %v447 = vsub.s32 0, %v444
      %v448 = vsel %vm446, %v447, %v444
      %v449 = vshrl.u32 %v448, 4
      %v450 = vand.u32 %v448, 15
      %v451 = vsub.s32 0, %v450
      %v452 = vsel %vm446, %v451, %v450
      %vm453 = vcmp.lt.s32.totalorder %v445, 0
      %v454 = vsub.s32 0, %v445
      %v455 = vsel %vm453, %v454, %v445
      %v456 = vshrl.u32 %v455, 4
      %v457 = vand.u32 %v455, 15
      %v458 = vsub.s32 0, %v457
      %v459 = vsel %vm453, %v458, %v457
      %vm460 = vcmp.ne.s32.totalorder %v452, 0
      %vm461 = vcmp.ne.s32.totalorder %v459, 0
      %vm462 = vcmp.lt.s32.totalorder %v452, 0
      %vm463 = vcmp.lt.s32.totalorder %v459, 0
      %vm464 = vmand %vm462, %vm460
      %vm465 = vmand %vm463, %vm461
      %v466 = vadd.s32 %v452, 16
      %v467 = vadd.s32 %v459, 16
      %v468 = vsel %vm464, %v466, %v452
      %v469 = vsel %vm465, %v467, %v459
      %vm470 = vcmp.eq.s32.totalorder %v468, 0
      %vm471 = vcmp.eq.s32.totalorder %v469, 0
      %v472 = vrot.slane %v354, 7
      %v473 = vrot.slane %v357, 7
      %vm474 = vcmp.lt.s32.totalorder %v444, 1
      %v475 = vsel %vm474, %v472, %v473
      %v476 = vsel %vm474, %v473, %v472
      %v477 = vsel %vm470, 1, 0
      %v478 = vsel %vm471, 1, 0
      %vm479 = vcmp.eq.s32.totalorder %v477, 1
      %vm480 = vcmp.eq.s32.totalorder %v478, 1
      %v481 = vsel %vm479, 0.0, %v476
      %v482 = vsel %vm480, 0.0, %v475
      %vm483 = vcmp.eq.s32.totalorder %v468, 15
      %vm484 = vcmp.eq.s32.totalorder %v469, 15
      %v485 = vrot.slane %v437, 1
      %v486 = vrot.slane %v440, 1
      %vm487 = vcmp.lt.s32.totalorder %v444, 7
      %v488 = vsel %vm487, %v485, %v486
      %v489 = vsel %vm487, %v486, %v485
      %v490 = vsel %vm483, 1, 0
      %v491 = vsel %vm484, 1, 0
      %vm492 = vcmp.eq.s32.totalorder %v490, 1
      %vm493 = vcmp.eq.s32.totalorder %v491, 1
      %v494 = vsel %vm492, 0.0, %v488
      %v495 = vsel %vm493, 0.0, %v489
      %v504 = vunpack.c.l.b16 %v361
      %v505 = vunpack.c.l.b16 %v362
      %v506 = vunpack.c.l.b16 %v363
      %v507 = vunpack.c.l.b16 %v364
      %v508 = vunpack.c.l.b16 %v365
      %v509 = vunpack.c.l.b16 %v366
      %v510 = vunpack.c.l.b16 %v367
      %v511 = vunpack.c.l.b16 %v368
      %v512 = vpack.c.b16 %v505, %v504
      %v513 = vpack.c.b16 %v507, %v506
      %v514 = vpack.c.b16 %v509, %v508
      %v515 = vpack.c.b16 %v511, %v510
      %520 = vmatprep.subr.bf16.mxu0 0
      %521 = vmatpush1.bf16.msra.mxu0 %v512
      %522 = vmatprep.subr.bf16.mxu0 0
      %523 = vmatpush1.bf16.msra.mxu0 %v513
      %524 = vmatprep.subr.bf16.mxu0 0
      %525 = vmatpush1.bf16.msra.mxu0 %v514
      %526 = vmatprep.subr.bf16.mxu0 0
      %527 = vmatpush1.bf16.msra.mxu0 %v515
      %528 = vmatprep.subr.bf16.mxu0 0
      %529 = vmatpush1.bf16.msra.mxu0 0
      %530 = vmatprep.subr.bf16.mxu0 0
      %531 = vmatpush1.bf16.msra.mxu0 0
      %532 = vmatprep.subr.bf16.mxu0 0
      %533 = vmatpush1.bf16.msra.mxu0 0
      %534 = vmatprep.subr.bf16.mxu0 0
      %535 = vmatpush1.bf16.msra.mxu0 0
      %536 = vmatprep.subr.bf16.mxu0 0
      %537 = vmatpush1.bf16.msra.mxu0 0
      %538 = vmatprep.subr.bf16.mxu0 0
      %539 = vmatpush1.bf16.msra.mxu0 0
      %540 = vmatprep.subr.bf16.mxu0 0
      %541 = vmatpush1.bf16.msra.mxu0 0
      %542 = vmatprep.subr.bf16.mxu0 0
      %543 = vmatpush1.bf16.msra.mxu0 0
      %544 = vmatprep.subr.bf16.mxu0 0
      %545 = vmatpush1.bf16.msra.mxu0 0
      %546 = vmatprep.subr.bf16.mxu0 0
      %547 = vmatpush1.bf16.msra.mxu0 0
      %548 = vmatprep.subr.bf16.mxu0 0
      %549 = vmatpush1.bf16.msra.mxu0 0
      %550 = vmatprep.subr.bf16.mxu0 0
      %551 = vmatpush1.bf16.msra.mxu0 0
      %552 = vmatprep.mubr.bf16.mxu0 0
      %553 = vmatmul.mubr.bf16.gmra.mrb[0].mxu0 %v317
      %v554 = vpop.f32.mrb[0].mxu0
      %v555 = vadd.f32 %v481, %v554
      %v556 = vpop.f32.mrb[0].mxu0
      %v557 = vpop.f32.mrb[0].mxu0
      %v558 = vadd.f32 %v482, %v557
      %v559 = vpop.f32.mrb[0].mxu0
      %560 = vdwg.mxu0
      %v561 = vadd.f32 %v555, %v494
      %v562 = vadd.f32 %v558, %v495
      %v563 = vld [vmem:[%s2] sm:$0xf]
      %v564 = vld [vmem:[%s2 + $0x4] sm:$0xf]
      %v565 = vld [vmem:[%s2 + $0x8] sm:$0xf]
      %v566 = vld [vmem:[%s2 + $0xc] sm:$0xf]
      %v567 = vld [vmem:[%s2 + $0x10] sm:$0xf]
      %v568 = vld [vmem:[%s2 + $0x14] sm:$0xf]
      %v569 = vld [vmem:[%s2 + $0x18] sm:$0xf]
      %v570 = vld [vmem:[%s2 + $0x1c] sm:$0xf]
      %v579 = vunpack.c.l.b16 %v563
      %v580 = vunpack.c.l.b16 %v564
      %v581 = vunpack.c.l.b16 %v565
      %v582 = vunpack.c.l.b16 %v566
      %v583 = vunpack.c.l.b16 %v567
      %v584 = vunpack.c.l.b16 %v568
      %v585 = vunpack.c.l.b16 %v569
      %v586 = vunpack.c.l.b16 %v570
      %v587 = vpack.c.b16 %v580, %v579
      %v588 = vpack.c.b16 %v582, %v581
      %v589 = vpack.c.b16 %v584, %v583
      %v590 = vpack.c.b16 %v586, %v585
      %595 = vmatprep.subr.bf16.mxu0 0
      %596 = vmatpush1.bf16.msra.mxu0 %v587
      %597 = vmatprep.subr.bf16.mxu0 0
      %598 = vmatpush1.bf16.msra.mxu0 %v588
      %599 = vmatprep.subr.bf16.mxu0 0
      %600 = vmatpush1.bf16.msra.mxu0 %v589
      %601 = vmatprep.subr.bf16.mxu0 0
      %602 = vmatpush1.bf16.msra.mxu0 %v590
      %603 = vmatprep.subr.bf16.mxu0 0
      %604 = vmatpush1.bf16.msra.mxu0 0
      %605 = vmatprep.subr.bf16.mxu0 0
      %606 = vmatpush1.bf16.msra.mxu0 0
      %607 = vmatprep.subr.bf16.mxu0 0
      %608 = vmatpush1.bf16.msra.mxu0 0
      %609 = vmatprep.subr.bf16.mxu0 0
      %610 = vmatpush1.bf16.msra.mxu0 0
      %611 = vmatprep.subr.bf16.mxu0 0
      %612 = vmatpush1.bf16.msra.mxu0 0
      %613 = vmatprep.subr.bf16.mxu0 0
      %614 = vmatpush1.bf16.msra.mxu0 0
      %615 = vmatprep.subr.bf16.mxu0 0
      %616 = vmatpush1.bf16.msra.mxu0 0
      %617 = vmatprep.subr.bf16.mxu0 0
      %618 = vmatpush1.bf16.msra.mxu0 0
      %619 = vmatprep.subr.bf16.mxu0 0
      %620 = vmatpush1.bf16.msra.mxu0 0
      %621 = vmatprep.subr.bf16.mxu0 0
      %622 = vmatpush1.bf16.msra.mxu0 0
      %623 = vmatprep.subr.bf16.mxu0 0
      %624 = vmatpush1.bf16.msra.mxu0 0
      %625 = vmatprep.subr.bf16.mxu0 0
      %626 = vmatpush1.bf16.msra.mxu0 0
      %627 = vmatprep.mubr.bf16.mxu0 0
      %628 = vmatmul.mubr.bf16.gmra.mrb[0].mxu0 %v317
      %v629 = vpop.f32.mrb[0].mxu0
      %v630 = vadd.f32 0.0, %v629
      %v631 = vpop.f32.mrb[0].mxu0
      %v632 = vpop.f32.mrb[0].mxu0
      %v633 = vadd.f32 0.0, %v632
      %v634 = vpop.f32.mrb[0].mxu0
      %635 = vdwg.mxu0
      %v636 = vadd.f32 %v561, %v562
      %v637 = vrot.slane %v636, 4
      %v638 = vadd.f32 %v636, %v637
      %v639 = vrot.slane %v638, 2
      %v640 = vadd.f32 %v638, %v639
      %v641 = vrot.slane %v640, 1
      %v642 = vadd.f32 %v640, %v641
      %v643 = vmul.f32 %v561, %v561
      %v644 = vmul.f32 %v562, %v562
      %v645 = vadd.f32 %v643, %v644
      %v646 = vrot.slane %v645, 4
      %v647 = vadd.f32 %v645, %v646
      %v648 = vrot.slane %v647, 2
      %v649 = vadd.f32 %v647, %v648
      %v650 = vrot.slane %v649, 1
      %v651 = vadd.f32 %v649, %v650
      %v652 = vld [vmem:[%s3] sm:$0xff]
      %v653 = vld [vmem:[%s3 + $0x8] sm:$0xff]
      %v654 = vld [vmem:[%s3 + $0x10] sm:$0xff]
      %v655 = vld [vmem:[%s3 + $0x18] sm:$0xff]
      %v656 = vld [vmem:[%s3 + $0x20] sm:$0xff]
      %v657 = vld [vmem:[%s3 + $0x28] sm:$0xff]
      %v658 = vld [vmem:[%s3 + $0x30] sm:$0xff]
      %v659 = vld [vmem:[%s3 + $0x38] sm:$0xff]
      %v660 = vld [vmem:[%s3 + $0x40] sm:$0xff]
      %v661 = vld [vmem:[%s3 + $0x48] sm:$0xff]
      %v662 = vld [vmem:[%s3 + $0x50] sm:$0xff]
      %v663 = vld [vmem:[%s3 + $0x58] sm:$0xff]
      %v664 = vld [vmem:[%s3 + $0x60] sm:$0xff]
      %v665 = vld [vmem:[%s3 + $0x68] sm:$0xff]
      %v666 = vld [vmem:[%s3 + $0x70] sm:$0xff]
      %v667 = vld [vmem:[%s3 + $0x78] sm:$0xff]
      %668 = vmatprep.subr.mxu0 0.0
      %669 = vmatpush1.msra.mxu0 %v652
      %670 = vmatprep.subr.mxu0 0.0
      %671 = vmatpush1.msra.mxu0 %v653
      %672 = vmatprep.subr.mxu0 0.0
      %673 = vmatpush1.msra.mxu0 %v654
      %674 = vmatprep.subr.mxu0 0.0
      %675 = vmatpush1.msra.mxu0 %v655
      %676 = vmatprep.subr.mxu0 0.0
      %677 = vmatpush1.msra.mxu0 %v656
      %678 = vmatprep.subr.mxu0 0.0
      %679 = vmatpush1.msra.mxu0 %v657
      %680 = vmatprep.subr.mxu0 0.0
      %681 = vmatpush1.msra.mxu0 %v658
      %682 = vmatprep.subr.mxu0 0.0
      %683 = vmatpush1.msra.mxu0 %v659
      %684 = vmatprep.subr.mxu0 0.0
      %685 = vmatpush1.msra.mxu0 %v660
      %686 = vmatprep.subr.mxu0 0.0
      %687 = vmatpush1.msra.mxu0 %v661
      %688 = vmatprep.subr.mxu0 0.0
      %689 = vmatpush1.msra.mxu0 %v662
      %690 = vmatprep.subr.mxu0 0.0
      %691 = vmatpush1.msra.mxu0 %v663
      %692 = vmatprep.subr.mxu0 0.0
      %693 = vmatpush1.msra.mxu0 %v664
      %694 = vmatprep.subr.mxu0 0.0
      %695 = vmatpush1.msra.mxu0 %v665
      %696 = vmatprep.subr.mxu0 0.0
      %697 = vmatpush1.msra.mxu0 %v666
      %698 = vmatprep.subr.mxu0 0.0
      %699 = vmatpush1.msra.mxu0 %v667
      %700 = vmatprep.subr.mxu0 0.0
      %701 = vmatpush1.msra.mxu0 0.0
      %702 = vmatprep.subr.mxu0 0.0
      %703 = vmatpush1.msra.mxu0 0.0
      %704 = vmatprep.subr.mxu0 0.0
      %705 = vmatpush1.msra.mxu0 0.0
      %706 = vmatprep.subr.mxu0 0.0
      %707 = vmatpush1.msra.mxu0 0.0
      %708 = vmatprep.subr.mxu0 0.0
      %709 = vmatpush1.msra.mxu0 0.0
      %710 = vmatprep.subr.mxu0 0.0
      %711 = vmatpush1.msra.mxu0 0.0
      %712 = vmatprep.subr.mxu0 0.0
      %713 = vmatpush1.msra.mxu0 0.0
      %714 = vmatprep.subr.mxu0 0.0
      %715 = vmatpush1.msra.mxu0 0.0
      %716 = vmatprep.subr.mxu0 0.0
      %717 = vmatpush1.msra.mxu0 0.0
      %718 = vmatprep.subr.mxu0 0.0
      %719 = vmatpush1.msra.mxu0 0.0
      %720 = vmatprep.subr.mxu0 0.0
      %721 = vmatpush1.msra.mxu0 0.0
      %722 = vmatprep.subr.mxu0 0.0
      %723 = vmatpush1.msra.mxu0 0.0
      %724 = vmatprep.subr.mxu0 0.0
      %725 = vmatpush1.msra.mxu0 0.0
      %726 = vmatprep.subr.mxu0 0.0
      %727 = vmatpush1.msra.mxu0 0.0
      %728 = vmatprep.subr.mxu0 0.0
      %729 = vmatpush1.msra.mxu0 0.0
      %730 = vmatprep.subr.mxu0 0.0
      %731 = vmatpush1.msra.mxu0 0.0
      %732 = vmatprep.mubr.f32.mxu0 0.0
      %733 = vmatmul.mubr.f32.gmra.mrb[0].mxu0 %v642
      %v734 = vpop.f32.mrb[0].mxu0
      %v735 = vadd.f32 0.0, %v734
      %v736 = vpop.f32.mrb[0].mxu0
      %737 = vdwg.mxu0
      %738 = vmatprep.subr.mxu0 0.0
      %739 = vmatpush1.msra.mxu0 %v652
      %740 = vmatprep.subr.mxu0 0.0
      %741 = vmatpush1.msra.mxu0 %v653
      %742 = vmatprep.subr.mxu0 0.0
      %743 = vmatpush1.msra.mxu0 %v654
      %744 = vmatprep.subr.mxu0 0.0
      %745 = vmatpush1.msra.mxu0 %v655
      %746 = vmatprep.subr.mxu0 0.0
      %747 = vmatpush1.msra.mxu0 %v656
      %748 = vmatprep.subr.mxu0 0.0
      %749 = vmatpush1.msra.mxu0 %v657
      %750 = vmatprep.subr.mxu0 0.0
      %751 = vmatpush1.msra.mxu0 %v658
      %752 = vmatprep.subr.mxu0 0.0
      %753 = vmatpush1.msra.mxu0 %v659
      %754 = vmatprep.subr.mxu0 0.0
      %755 = vmatpush1.msra.mxu0 %v660
      %756 = vmatprep.subr.mxu0 0.0
      %757 = vmatpush1.msra.mxu0 %v661
      %758 = vmatprep.subr.mxu0 0.0
      %759 = vmatpush1.msra.mxu0 %v662
      %760 = vmatprep.subr.mxu0 0.0
      %761 = vmatpush1.msra.mxu0 %v663
      %762 = vmatprep.subr.mxu0 0.0
      %763 = vmatpush1.msra.mxu0 %v664
      %764 = vmatprep.subr.mxu0 0.0
      %765 = vmatpush1.msra.mxu0 %v665
      %766 = vmatprep.subr.mxu0 0.0
      %767 = vmatpush1.msra.mxu0 %v666
      %768 = vmatprep.subr.mxu0 0.0
      %769 = vmatpush1.msra.mxu0 %v667
      %770 = vmatprep.subr.mxu0 0.0
      %771 = vmatpush1.msra.mxu0 0.0
      %772 = vmatprep.subr.mxu0 0.0
      %773 = vmatpush1.msra.mxu0 0.0
      %774 = vmatprep.subr.mxu0 0.0
      %775 = vmatpush1.msra.mxu0 0.0
      %776 = vmatprep.subr.mxu0 0.0
      %777 = vmatpush1.msra.mxu0 0.0
      %778 = vmatprep.subr.mxu0 0.0
      %779 = vmatpush1.msra.mxu0 0.0
      %780 = vmatprep.subr.mxu0 0.0
      %781 = vmatpush1.msra.mxu0 0.0
      %782 = vmatprep.subr.mxu0 0.0
      %783 = vmatpush1.msra.mxu0 0.0
      %784 = vmatprep.subr.mxu0 0.0
      %785 = vmatpush1.msra.mxu0 0.0
      %786 = vmatprep.subr.mxu0 0.0
      %787 = vmatpush1.msra.mxu0 0.0
      %788 = vmatprep.subr.mxu0 0.0
      %789 = vmatpush1.msra.mxu0 0.0
      %790 = vmatprep.subr.mxu0 0.0
      %791 = vmatpush1.msra.mxu0 0.0
      %792 = vmatprep.subr.mxu0 0.0
      %793 = vmatpush1.msra.mxu0 0.0
      %794 = vmatprep.subr.mxu0 0.0
      %795 = vmatpush1.msra.mxu0 0.0
      %796 = vmatprep.subr.mxu0 0.0
      %797 = vmatpush1.msra.mxu0 0.0
      %798 = vmatprep.subr.mxu0 0.0
      %799 = vmatpush1.msra.mxu0 0.0
      %800 = vmatprep.subr.mxu0 0.0
      %801 = vmatpush1.msra.mxu0 0.0
      %802 = vmatprep.mubr.f32.mxu0 0.0
      %803 = vmatmul.mubr.f32.gmra.mrb[0].mxu0 %v651
      %v804 = vpop.f32.mrb[0].mxu0
      %v805 = vadd.f32 0.0, %v804
      %v806 = vpop.f32.mrb[0].mxu0
      %807 = vdwg.mxu0
      %v809 = vrot.slane %v805, 7
      %vm811 = vcmask 1040384
      %v812 = vsel %vm811, %v735, %v809
      %vm813 = vcmask 58368
      %814 = vst.msk [vmem:[%s274] sm:$0x3] %vm813, %v812
      %v815 = vpack.c.bf16 %v562, %v561
      %v817 = vunpack.c.l.b16 %v815
      %v818 = vunpack.c.h.b16 %v815
      %v819 = vpack.c.b16 %v817, %v817
      %v820 = vpack.c.b16 %v818, %v818
      %823 = vst [vmem:[%s265] sm:$0xf] %v819
      %824 = vst [vmem:[%s265 + $0x4] sm:$0xf] %v820
      %v825 = vpack.c.bf16 %v633, %v630
      %v827 = vunpack.c.l.b16 %v825
      %v828 = vunpack.c.h.b16 %v825
      %v829 = vpack.c.b16 %v827, %v827
      %v830 = vpack.c.b16 %v828, %v828
      %833 = vst [vmem:[%s270] sm:$0xf] %v829
      %834 = vst [vmem:[%s270 + $0x4] sm:$0xf] %v830
      %p835 = scmp.lt.s32.totalorder %s18, 1
      %s836 = scalar_select %p835, %s18, 1
      %s837 = smul.addr %s836, 2
      %s838 = smul.addr %s837, 4
      %s839 = scalar_lea.vmem %s4, %s838
      %p840 = scmp.lt.s32.totalorder %s18, 1
      %s841 = scalar_select %p840, %s18, 1
      %s842 = smul.addr %s841, 2
      %s843 = smul.addr %s842, 4
      %s844 = scalar_lea.vmem %s5, %s843
      %p845 = scmp.lt.s32.totalorder %s18, 1
      %s846 = scalar_select %p845, %s18, 1
      %s847 = smul.addr %s846, 2
      %s848 = scalar_lea.vmem %s6, %s847
      // Predicated region
      $region37: #{residual_conv_block_forward.3} parent=35 // pred_check
        %p849 = pneg %p125
      $region38: #{residual_conv_block_forward.3} parent=35 // pred_check_branch
        %851 = sbr.rel (%p849) target = $region40
      $region39: #{residual_conv_block_forward.3} parent=35 // pred_region
        _
      $region40: #{residual_conv_block_forward.3} parent=35 // pred_fallthru
        _
      // Predicated region
      $region41: #{residual_conv_block_forward.3} parent=35 // pred_check
        %p852 = pneg %p151
      $region42: #{residual_conv_block_forward.3} parent=35 // pred_check_branch
        %854 = sbr.rel (%p852) target = $region44
      $region43: #{residual_conv_block_forward.3} parent=35 // pred_region
        _
      $region44: #{residual_conv_block_forward.3} parent=35 // pred_fallthru
        _
      // Predicated region
      $region45: #{residual_conv_block_forward.3} parent=35 // pred_check
        %p855 = pneg %p177
      $region46: #{residual_conv_block_forward.3} parent=35 // pred_check_branch
        %857 = sbr.rel (%p855) target = $region48
      $region47: #{residual_conv_block_forward.3} parent=35 // pred_region
        _
      $region48: #{residual_conv_block_forward.3} parent=35 // pred_fallthru
        _
    $region36: #{residual_conv_block_forward.3} parent=5 // pred_fallthru
      _
    %p858 = scmp.le.s32.totalorder 2, %s13
    // Predicated region
    $region49: #{residual_conv_block_forward.3} parent=5 // pred_check
      %p859 = pneg %p858
    $region50: #{residual_conv_block_forward.3} parent=5 // pred_check_branch
      %861 = sbr.rel (%p859) target = $region52
    $region51: #{residual_conv_block_forward.3} parent=5 // pred_region
      %s862 = ssub.s32 %s13, 2
      // Predicated region
      $region53: #{residual_conv_block_forward.3} parent=51 // pred_check
        %p863 = pneg %p131
      $region54: #{residual_conv_block_forward.3} parent=51 // pred_check_branch
        %865 = sbr.rel (%p863) target = $region56
      $region55: #{residual_conv_block_forward.3} parent=51 // pred_region
        %p866 = scmp.lt.s32.totalorder %s19, 1
        %s867 = scalar_select %p866, %s19, 1
        %s868 = smul.addr %s867, 2
        %s869 = smul.addr %s868, 4
        %s870 = scalar_lea.vmem %s4, %s869
      $region56: #{residual_conv_block_forward.3} parent=51 // pred_fallthru
        _
      // Predicated region
      $region57: #{residual_conv_block_forward.3} parent=51 // pred_check
        %p871 = pneg %p157
      $region58: #{residual_conv_block_forward.3} parent=51 // pred_check_branch
        %873 = sbr.rel (%p871) target = $region60
      $region59: #{residual_conv_block_forward.3} parent=51 // pred_region
        %p874 = scmp.lt.s32.totalorder %s19, 1
        %s875 = scalar_select %p874, %s19, 1
        %s876 = smul.addr %s875, 2
        %s877 = smul.addr %s876, 4
        %s878 = scalar_lea.vmem %s5, %s877
      $region60: #{residual_conv_block_forward.3} parent=51 // pred_fallthru
        _
      // Predicated region
      $region61: #{residual_conv_block_forward.3} parent=51 // pred_check
        %p879 = pneg %p183
      $region62: #{residual_conv_block_forward.3} parent=51 // pred_check_branch
        %881 = sbr.rel (%p879) target = $region64
      $region63: #{residual_conv_block_forward.3} parent=51 // pred_region
        %p882 = scmp.lt.s32.totalorder %s19, 1
        %s883 = scalar_select %p882, %s19, 1
        %s884 = smul.addr %s883, 2
        %s885 = scalar_lea.vmem %s6, %s884
      $region64: #{residual_conv_block_forward.3} parent=51 // pred_fallthru
        _
    $region52: #{residual_conv_block_forward.3} parent=5 // pred_fallthru
      _
  $region6: #{residual_conv_block_forward.3} parent=0 // loop_footer
    %s17 = sadd.s32 1, %s13
  $region7: #{residual_conv_block_forward.3} parent=0 // loop_footer_branch
    %12 = sbr.rel target = $region3
  $region8: #{residual_conv_block_forward.3} parent=0 // loop_exit
    _

// kernel: residual_conv_block_forward.4
$region0: #{residual_conv_block_forward.4}
  #allocation0 [shape = 'u32[]', space=smem, size = 0x4, offset = 0x4, fixed_abs, tag = 'smem constant byte address 0x4 - core index']
  #allocation1 [shape = 'u32[144,128]{1,0:T(1,128)}', space=vmem, size = 0x12000, scoped, tag = 'internal scratch']
  %s0 = inlined_call_operand.vmem [shape: bf16[2,16,128], index: 0, kind: input, shape index: {}]
  %s1 = inlined_call_operand.vmem [shape: f32[2,3,128], index: 1, kind: input, shape index: {}]
  %s2 = inlined_call_operand.vmem [shape: bf16[3,128,128], index: 2, kind: input, shape index: {}]
  %s3 = inlined_call_operand.vmem [shape: f32[128,8], index: 3, kind: input, shape index: {}]
  %s4 = inlined_call_operand.vmem [shape: bf16[2,16,128], index: 4, kind: output, shape index: {0}]
  %s5 = inlined_call_operand.vmem [shape: f32[2,2,8], index: 5, kind: output, shape index: {1}]
  %6 = xla_tuple %s4, %s5
  %s7 = sld [smem:[#allocation0]]
  $region57: #{residual_conv_block_forward.4} parent=0
    _
  %s9 = ssub.s32 1, %s7
  %s10 = scalar_select 0, %s9, %s7
  loop: start=0, step=1, limit=4
  $region2: #{residual_conv_block_forward.4} parent=0 // loop_pre_header
    _
  $region3: #{residual_conv_block_forward.4} parent=0 // loop_header
    %s12 = sphi 0, %s16
    %p13 = scmp.ge.s32.totalorder %s12, 4
    %s22 = sphi 0, %s24
    %s25 = sphi 0, %s22
    %s26 = sphi 0, %s25
    %s42 = sphi 0, %s26
    %s48 = sphi 0, %s50
    %s51 = sphi 0, %s48
    %s52 = sphi 0, %s51
    %s68 = sphi 0, %s52
    %s72 = sphi 0, %s72
    %s74 = sphi 0, %s72
    %s75 = sphi 0, %s74
    %s89 = sphi 0, %s75
    %s93 = sphi 0, %s93
    %s95 = sphi 0, %s93
    %s96 = sphi 0, %s95
    %s110 = sphi 0, %s96
    %s116 = sphi 0, %s118
    %s119 = sphi 0, %s116
    %s120 = sphi 0, %s119
    %s136 = sphi 0, %s120
    %s142 = sphi 0, %s144
    %s145 = sphi 0, %s142
    %s146 = sphi 0, %s145
    %s162 = sphi 0, %s146
  $region4: #{residual_conv_block_forward.4} parent=0 // loop_header_branch
    %15 = sbr.rel (%p13) target = $region8
  $region5: #{residual_conv_block_forward.4} parent=0 // loop_body
    %s17 = ssub.s32 %s12, 1
    %s18 = ssub.s32 %s12, 2
    %s19 = sadd.s32 %s12, 1
    %s20 = ssub.s32 %s12, %s19
    %p21 = scmp.eq.s32.totalorder %s20, 0
    %s23 = sadd.s32 %s22, 1
    %s24 = scalar_select %p21, %s22, %s23
    %p27 = pneg %p21
    %p28 = scmp.eq.s32.totalorder %s12, 1
    %p29 = por %p27, %p28
    %p30 = scmp.ne.s32.totalorder %s22, %s25
    %p31 = scmp.eq.s32.totalorder %s12, 0
    %p32 = por %p30, %p31
    %p33 = scmp.ne.s32.totalorder %s22, %s25
    %p34 = scmp.eq.s32.totalorder %s17, 1
    %p35 = por %p33, %p34
    %p36 = scmp.ne.s32.totalorder %s25, %s26
    %p37 = scmp.eq.s32.totalorder %s17, 0
    %p38 = por %p36, %p37
    %p39 = scmp.ne.s32.totalorder %s25, %s26
    %p40 = scmp.eq.s32.totalorder %s18, 1
    %p41 = por %p39, %p40
    %p43 = scmp.ne.s32.totalorder %s26, %s42
    %p44 = scmp.eq.s32.totalorder %s18, 0
    %p45 = por %p43, %p44
    %s46 = ssub.s32 %s12, %s19
    %p47 = scmp.eq.s32.totalorder %s46, 0
    %s49 = sadd.s32 %s48, 1
    %s50 = scalar_select %p47, %s48, %s49
    %p53 = pneg %p47
    %p54 = scmp.eq.s32.totalorder %s12, 1
    %p55 = por %p53, %p54
    %p56 = scmp.ne.s32.totalorder %s48, %s51
    %p57 = scmp.eq.s32.totalorder %s12, 0
    %p58 = por %p56, %p57
    %p59 = scmp.ne.s32.totalorder %s48, %s51
    %p60 = scmp.eq.s32.totalorder %s17, 1
    %p61 = por %p59, %p60
    %p62 = scmp.ne.s32.totalorder %s51, %s52
    %p63 = scmp.eq.s32.totalorder %s17, 0
    %p64 = por %p62, %p63
    %p65 = scmp.ne.s32.totalorder %s51, %s52
    %p66 = scmp.eq.s32.totalorder %s18, 1
    %p67 = por %p65, %p66
    %p69 = scmp.ne.s32.totalorder %s52, %s68
    %p70 = scmp.eq.s32.totalorder %s18, 0
    %p71 = por %p69, %p70
    %s73 = sadd.s32 %s72, 1
    %p76 = scmp.eq.s32.totalorder %s12, 1
    %p77 = scmp.ne.s32.totalorder %s72, %s74
    %p78 = scmp.eq.s32.totalorder %s12, 0
    %p79 = por %p77, %p78
    %p80 = scmp.ne.s32.totalorder %s72, %s74
    %p81 = scmp.eq.s32.totalorder %s17, 1
    %p82 = por %p80, %p81
    %p83 = scmp.ne.s32.totalorder %s74, %s75
    %p84 = scmp.eq.s32.totalorder %s17, 0
    %p85 = por %p83, %p84
    %p86 = scmp.ne.s32.totalorder %s74, %s75
    %p87 = scmp.eq.s32.totalorder %s18, 1
    %p88 = por %p86, %p87
    %p90 = scmp.ne.s32.totalorder %s75, %s89
    %p91 = scmp.eq.s32.totalorder %s18, 0
    %p92 = por %p90, %p91
    %s94 = sadd.s32 %s93, 1
    %p97 = scmp.eq.s32.totalorder %s12, 1
    %p98 = scmp.ne.s32.totalorder %s93, %s95
    %p99 = scmp.eq.s32.totalorder %s12, 0
    %p100 = por %p98, %p99
    %p101 = scmp.ne.s32.totalorder %s93, %s95
    %p102 = scmp.eq.s32.totalorder %s17, 1
    %p103 = por %p101, %p102
    %p104 = scmp.ne.s32.totalorder %s95, %s96
    %p105 = scmp.eq.s32.totalorder %s17, 0
    %p106 = por %p104, %p105
    %p107 = scmp.ne.s32.totalorder %s95, %s96
    %p108 = scmp.eq.s32.totalorder %s18, 1
    %p109 = por %p107, %p108
    %p111 = scmp.ne.s32.totalorder %s96, %s110
    %p112 = scmp.eq.s32.totalorder %s18, 0
    %p113 = por %p111, %p112
    %s114 = ssub.s32 %s12, %s19
    %p115 = scmp.eq.s32.totalorder %s114, 0
    %s117 = sadd.s32 %s116, 1
    %s118 = scalar_select %p115, %s116, %s117
    %p121 = pneg %p115
    %p122 = scmp.eq.s32.totalorder %s12, 1
    %p123 = por %p121, %p122
    %p124 = scmp.ne.s32.totalorder %s116, %s119
    %p125 = scmp.eq.s32.totalorder %s12, 0
    %p126 = por %p124, %p125
    %p127 = scmp.ne.s32.totalorder %s116, %s119
    %p128 = scmp.eq.s32.totalorder %s17, 1
    %p129 = por %p127, %p128
    %p130 = scmp.ne.s32.totalorder %s119, %s120
    %p131 = scmp.eq.s32.totalorder %s17, 0
    %p132 = por %p130, %p131
    %p133 = scmp.ne.s32.totalorder %s119, %s120
    %p134 = scmp.eq.s32.totalorder %s18, 1
    %p135 = por %p133, %p134
    %p137 = scmp.ne.s32.totalorder %s120, %s136
    %p138 = scmp.eq.s32.totalorder %s18, 0
    %p139 = por %p137, %p138
    %s140 = ssub.s32 %s12, %s19
    %p141 = scmp.eq.s32.totalorder %s140, 0
    %s143 = sadd.s32 %s142, 1
    %s144 = scalar_select %p141, %s142, %s143
    %p147 = pneg %p141
    %p148 = scmp.eq.s32.totalorder %s12, 1
    %p149 = por %p147, %p148
    %p150 = scmp.ne.s32.totalorder %s142, %s145
    %p151 = scmp.eq.s32.totalorder %s12, 0
    %p152 = por %p150, %p151
    %p153 = scmp.ne.s32.totalorder %s142, %s145
    %p154 = scmp.eq.s32.totalorder %s17, 1
    %p155 = por %p153, %p154
    %p156 = scmp.ne.s32.totalorder %s145, %s146
    %p157 = scmp.eq.s32.totalorder %s17, 0
    %p158 = por %p156, %p157
    %p159 = scmp.ne.s32.totalorder %s145, %s146
    %p160 = scmp.eq.s32.totalorder %s18, 1
    %p161 = por %p159, %p160
    %p163 = scmp.ne.s32.totalorder %s146, %s162
    %p164 = scmp.eq.s32.totalorder %s18, 0
    %p165 = por %p163, %p164
    %p166 = scmp.le.s32.totalorder 1, %s12
    %p167 = scmp.lt.s32.totalorder %s12, 3
    %p168 = pnand %p166, %p167
    %p169 = pneg %p168
    // Predicated region
    $region9: #{residual_conv_block_forward.4} parent=5 // pred_check
      _
    $region10: #{residual_conv_block_forward.4} parent=5 // pred_check_branch
      %171 = sbr.rel (%p168) target = $region12
    $region11: #{residual_conv_block_forward.4} parent=5 // pred_region
      %s172 = ssub.s32 %s12, 1
      // Predicated region
      $region13: #{residual_conv_block_forward.4} parent=11 // pred_check
        %p173 = pneg %p85
      $region14: #{residual_conv_block_forward.4} parent=11 // pred_check_branch
        %175 = sbr.rel (%p173) target = $region16
      $region15: #{residual_conv_block_forward.4} parent=11 // pred_region
        _
      $region16: #{residual_conv_block_forward.4} parent=11 // pred_fallthru
        _
      // Predicated region
      $region17: #{residual_conv_block_forward.4} parent=11 // pred_check
        %p176 = pneg %p106
      $region18: #{residual_conv_block_forward.4} parent=11 // pred_check_branch
        %178 = sbr.rel (%p176) target = $region20
      $region19: #{residual_conv_block_forward.4} parent=11 // pred_region
        _
      $region20: #{residual_conv_block_forward.4} parent=11 // pred_fallthru
        _
    $region12: #{residual_conv_block_forward.4} parent=5 // pred_fallthru
      _
    %p179 = scmp.lt.s32.totalorder %s12, 2
    // Predicated region
    $region21: #{residual_conv_block_forward.4} parent=5 // pred_check
      %p180 = pneg %p179
    $region22: #{residual_conv_block_forward.4} parent=5 // pred_check_branch
      %182 = sbr.rel (%p180) target = $region24
    $region23: #{residual_conv_block_forward.4} parent=5 // pred_region
      // Predicated region
      $region25: #{residual_conv_block_forward.4} parent=23 // pred_check
        %p183 = pneg %p32
      $region26: #{residual_conv_block_forward.4} parent=23 // pred_check_branch
        %185 = sbr.rel (%p183) target = $region28
      $region27: #{residual_conv_block_forward.4} parent=23 // pred_region
        %p186 = scmp.lt.s32.totalorder %s12, 1
        %s187 = scalar_select %p186, %s12, 1
        %s188 = smul.addr %s187, 2
        %s189 = smul.addr %s188, 4
        %s190 = scalar_lea.vmem %s0, %s189
      $region28: #{residual_conv_block_forward.4} parent=23 // pred_fallthru
        _
      // Predicated region
      $region29: #{residual_conv_block_forward.4} parent=23 // pred_check
        %p191 = pneg %p58
      $region30: #{residual_conv_block_forward.4} parent=23 // pred_check_branch
        %193 = sbr.rel (%p191) target = $region32
      $region31: #{residual_conv_block_forward.4} parent=23 // pred_region
        %p194 = scmp.lt.s32.totalorder %s12, 1
        %s195 = scalar_select %p194, %s12, 1
        %s196 = smul.addr %s195, 4
        %s197 = scalar_lea.vmem %s1, %s196
      $region32: #{residual_conv_block_forward.4} parent=23 // pred_fallthru
        _
    $region24: #{residual_conv_block_forward.4} parent=5 // pred_fallthru
      _
    %p198 = scmp.le.s32.totalorder 1, %s12
    %p199 = scmp.lt.s32.totalorder %s12, 3
    %p200 = pnand %p198, %p199
    %p201 = pneg %p200
    // Predicated region
    $region33: #{residual_conv_block_forward.4} parent=5 // pred_check
      _
    $region34: #{residual_conv_block_forward.4} parent=5 // pred_check_branch
      %203 = sbr.rel (%p200) target = $region36
    $region35: #{residual_conv_block_forward.4} parent=5 // pred_region
      %s204 = ssub.s32 %s12, 1
      %p205 = scmp.lt.s32.totalorder %s17, 1
      %s206 = scalar_select %p205, %s17, 1
      %s207 = smul.addr %s206, 2
      %s208 = smul.addr %s207, 4
      %s209 = scalar_lea.vmem %s0, %s208
      %p210 = pneg %p38
      %p211 = pneg %p35
      %p212 = scmp.lt.s32.totalorder %s17, 1
      %s213 = scalar_select %p212, %s17, 1
      %s214 = smul.addr %s213, 4
      %s215 = scalar_lea.vmem %s1, %s214
      %p216 = pneg %p64
      %p217 = pneg %p61
      %p218 = pneg %p85
      %p219 = pneg %p82
      %p220 = pneg %p106
      %p221 = pneg %p103
      %p222 = pneg %p132
      %p223 = pneg %p129
      %p224 = scmp.lt.s32.totalorder %s17, 1
      %s225 = scalar_select %p224, %s17, 1
      %s226 = smul.addr %s225, 2
      %s227 = smul.addr %s226, 4
      %s228 = scalar_lea.vmem %s4, %s227
      %p229 = pneg %p158
      %p230 = pneg %p155
      %p231 = scmp.lt.s32.totalorder %s17, 1
      %s232 = scalar_select %p231, %s17, 1
      %s233 = smul.addr %s232, 2
      %s234 = scalar_lea.vmem %s5, %s233
      %p235 = scmp.lt.s32.totalorder %s17, 1
      %s236 = scalar_select %p235, %s17, 1
      %s237 = smul.addr %s236, 2
      %s238 = smul.addr %s237, 4
      %s239 = scalar_lea.vmem %s0, %s238
      %p240 = scmp.lt.s32.totalorder %s17, 1
      %s241 = scalar_select %p240, %s17, 1
      %s242 = smul.addr %s241, 4
      %s243 = scalar_lea.vmem %s1, %s242
      %p244 = scmp.lt.s32.totalorder %s17, 1
      %s245 = scalar_select %p244, %s17, 1
      %s246 = smul.addr %s245, 2
      %s247 = smul.addr %s246, 4
      %s248 = scalar_lea.vmem %s4, %s247
      %p249 = scmp.lt.s32.totalorder %s17, 1
      %s250 = scalar_select %p249, %s17, 1
      %s251 = smul.addr %s250, 2
      %s252 = scalar_lea.vmem %s5, %s251
      %v254 = vld [vmem:[%s243] sm:$0x7]
      %v255 = vld [vmem:[%s239] sm:$0xf]
      %v256 = vld [vmem:[%s239 + $0x4] sm:$0xf]
      %v257 = vunpack.c.l.bf16 %v255
      %v258 = vunpack.c.l.bf16 %v256
      %v259 = vlaneseq
      %v260 = vshrl.u32 %v259, 7
      %v261 = vsub.s32 0, %v260
      %v262 = vrot.slane %v254, %v261
      %v263 = vmul.f32 %v257, %v262
      %v264 = vmul.f32 %v258, %v262
      %v265 = vlaneseq
      %v266 = vshrl.u32 %v265, 7
      %v267 = vsub.s32 1, %v266
      %v268 = vrot.slane %v254, %v267
      %v269 = vadd.f32 %v263, %v268
      %v270 = vadd.f32 %v264, %v268
      %vm271 = vcmp.gt.f32.partialorder %v269, 0.0
      %vm272 = vcmp.gt.f32.partialorder %v270, 0.0
      %v273 = vlaneseq
      %v274 = vshrl.u32 %v273, 7
      %v275 = vsub.s32 2, %v274
      %v276 = vrot.slane %v254, %v275
      %v277 = vmul.f32 %v276, %v269
      %v278 = vmul.f32 %v276, %v270
      %v279 = vsel %vm271, %v269, %v277
      %v280 = vsel %vm272, %v270, %v278
      %v281 = vpack.c.bf16 %v280, %v279
      %v282 = vld [vmem:[%s2] sm:$0xf]
      %v283 = vld [vmem:[%s2 + $0x4] sm:$0xf]
      %v284 = vld [vmem:[%s2 + $0x8] sm:$0xf]
      %v285 = vld [vmem:[%s2 + $0xc] sm:$0xf]
      %v286 = vld [vmem:[%s2 + $0x10] sm:$0xf]
      %v287 = vld [vmem:[%s2 + $0x14] sm:$0xf]
      %v288 = vld [vmem:[%s2 + $0x18] sm:$0xf]
      %v289 = vld [vmem:[%s2 + $0x1c] sm:$0xf]
      %v290 = vld [vmem:[%s2 + $0x20] sm:$0xf]
      %v291 = vld [vmem:[%s2 + $0x24] sm:$0xf]
      %v292 = vld [vmem:[%s2 + $0x28] sm:$0xf]
      %v293 = vld [vmem:[%s2 + $0x2c] sm:$0xf]
      %v294 = vld [vmem:[%s2 + $0x30] sm:$0xf]
      %v295 = vld [vmem:[%s2 + $0x34] sm:$0xf]
      %v296 = vld [vmem:[%s2 + $0x38] sm:$0xf]
      %v297 = vld [vmem:[%s2 + $0x3c] sm:$0xf]
      %v314 = vunpack.c.l.b16 %v282
      %v315 = vunpack.c.l.b16 %v283
      %v316 = vunpack.c.l.b16 %v284
      %v317 = vunpack.c.l.b16 %v285
      %v318 = vunpack.c.l.b16 %v286
      %v319 = vunpack.c.l.b16 %v287
      %v320 = vunpack.c.l.b16 %v288
      %v321 = vunpack.c.l.b16 %v289
      %v322 = vunpack.c.l.b16 %v290
      %v323 = vunpack.c.l.b16 %v291
      %v324 = vunpack.c.l.b16 %v292
      %v325 = vunpack.c.l.b16 %v293
      %v326 = vunpack.c.l.b16 %v294
      %v327 = vunpack.c.l.b16 %v295
      %v328 = vunpack.c.l.b16 %v296
      %v329 = vunpack.c.l.b16 %v297
      %v330 = vpack.c.b16 %v315, %v314
      %v331 = vpack.c.b16 %v317, %v316
      %v332 = vpack.c.b16 %v319, %v318
      %v333 = vpack.c.b16 %v321, %v320
      %v334 = vpack.c.b16 %v323, %v322
      %v335 = vpack.c.b16 %v325, %v324
      %v336 = vpack.c.b16 %v327, %v326
      %v337 = vpack.c.b16 %v329, %v328
      %346 = vmatprep.subr.bf16.mxu0 0
      %347 = vmatpush1.bf16.msra.mxu0 %v330
      %348 = vmatprep.subr.bf16.mxu0 0
      %349 = vmatpush1.bf16.msra.mxu0 %v331
      %350 = vmatprep.subr.bf16.mxu0 0
      %351 = vmatpush1.bf16.msra.mxu0 %v332
      %352 = vmatprep.subr.bf16.mxu0 0
      %353 = vmatpush1.bf16.msra.mxu0 %v333
      %354 = vmatprep.subr.bf16.mxu0 0
      %355 = vmatpush1.bf16.msra.mxu0 %v334
      %356 = vmatprep.subr.bf16.mxu0 0
      %357 = vmatpush1.bf16.msra.mxu0 %v335
      %358 = vmatprep.subr.bf16.mxu0 0
      %359 = vmatpush1.bf16.msra.mxu0 %v336
      %360 = vmatprep.subr.bf16.mxu0 0
      %361 = vmatpush1.bf16.msra.mxu0 %v337
      %362 = vmatprep.subr.bf16.mxu0 0
      %363 = vmatpush1.bf16.msra.mxu0 0
      %364 = vmatprep.subr.bf16.mxu0 0
      %365 = vmatpush1.bf16.msra.mxu0 0
      %366 = vmatprep.subr.bf16.mxu0 0
      %367 = vmatpush1.bf16.msra.mxu0 0
      %368 = vmatprep.subr.bf16.mxu0 0
      %369 = vmatpush1.bf16.msra.mxu0 0
      %370 = vmatprep.subr.bf16.mxu0 0
      %371 = vmatpush1.bf16.msra.mxu0 0
      %372 = vmatprep.subr.bf16.mxu0 0
      %373 = vmatpush1.bf16.msra.mxu0 0
      %374 = vmatprep.subr.bf16.mxu0 0
      %375 = vmatpush1.bf16.msra.mxu0 0
      %376 = vmatprep.subr.bf16.mxu0 0
      %377 = vmatpush1.bf16.msra.mxu0 0
      %378 = vmatprep.mubr.bf16.mxu0 0
      %379 = vmatmul.mubr.bf16.gmra.mrb[0].mxu0 %v281
      %v380 = vpop.f32.mrb[0].mxu0
      %v381 = vadd.f32 0.0, %v380
      %v382 = vpop.f32.mrb[0].mxu0
      %v383 = vpop.f32.mrb[0].mxu0
      %v384 = vadd.f32 0.0, %v383
      %v385 = vpop.f32.mrb[0].mxu0
      %386 = vdwg.mxu0
      %s387 = scalar_lea.vmem %s2, 64
      %v388 = vld [vmem:[%s387] sm:$0xf]
      %v389 = vld [vmem:[%s387 + $0x4] sm:$0xf]
      %v390 = vld [vmem:[%s387 + $0x8] sm:$0xf]
      %v391 = vld [vmem:[%s387 + $0xc] sm:$0xf]
      %v392 = vld [vmem:[%s387 + $0x10] sm:$0xf]
      %v393 = vld [vmem:[%s387 + $0x14] sm:$0xf]
      %v394 = vld [vmem:[%s387 + $0x18] sm:$0xf]
      %v395 = vld [vmem:[%s387 + $0x1c] sm:$0xf]
      %v396 = vld [vmem:[%s387 + $0x20] sm:$0xf]
      %v397 = vld [vmem:[%s387 + $0x24] sm:$0xf]
      %v398 = vld [vmem:[%s387 + $0x28] sm:$0xf]
      %v399 = vld [vmem:[%s387 + $0x2c] sm:$0xf]
      %v400 = vld [vmem:[%s387 + $0x30] sm:$0xf]
      %v401 = vld [vmem:[%s387 + $0x34] sm:$0xf]
      %v402 = vld [vmem:[%s387 + $0x38] sm:$0xf]
      %v403 = vld [vmem:[%s387 + $0x3c] sm:$0xf]
      %s404 = scalar_lea.vmem %s2, 128
      %v405 = vld [vmem:[%s404] sm:$0xf]
      %v406 = vld [vmem:[%s404 + $0x4] sm:$0xf]
      %v407 = vld [vmem:[%s404 + $0x8] sm:$0xf]
      %v408 = vld [vmem:[%s404 + $0xc] sm:$0xf]
      %v409 = vld [vmem:[%s404 + $0x10] sm:$0xf]
      %v410 = vld [vmem:[%s404 + $0x14] sm:$0xf]
      %v411 = vld [vmem:[%s404 + $0x18] sm:$0xf]
      %v412 = vld [vmem:[%s404 + $0x1c] sm:$0xf]
      %v413 = vld [vmem:[%s404 + $0x20] sm:$0xf]
      %v414 = vld [vmem:[%s404 + $0x24] sm:$0xf]
      %v415 = vld [vmem:[%s404 + $0x28] sm:$0xf]
      %v416 = vld [vmem:[%s404 + $0x2c] sm:$0xf]
      %v417 = vld [vmem:[%s404 + $0x30] sm:$0xf]
      %v418 = vld [vmem:[%s404 + $0x34] sm:$0xf]
      %v419 = vld [vmem:[%s404 + $0x38] sm:$0xf]
      %v420 = vld [vmem:[%s404 + $0x3c] sm:$0xf]
      %v437 = vunpack.c.l.b16 %v405
      %v438 = vunpack.c.l.b16 %v406
      %v439 = vunpack.c.l.b16 %v407
      %v440 = vunpack.c.l.b16 %v408
      %v441 = vunpack.c.l.b16 %v409
      %v442 = vunpack.c.l.b16 %v410
      %v443 = vunpack.c.l.b16 %v411
      %v444 = vunpack.c.l.b16 %v412
      %v445 = vunpack.c.l.b16 %v413
      %v446 = vunpack.c.l.b16 %v414
      %v447 = vunpack.c.l.b16 %v415
      %v448 = vunpack.c.l.b16 %v416
      %v449 = vunpack.c.l.b16 %v417
      %v450 = vunpack.c.l.b16 %v418
      %v451 = vunpack.c.l.b16 %v419
      %v452 = vunpack.c.l.b16 %v420
      %v453 = vpack.c.b16 %v438, %v437
      %v454 = vpack.c.b16 %v440, %v439
      %v455 = vpack.c.b16 %v442, %v441
      %v456 = vpack.c.b16 %v444, %v443
      %v457 = vpack.c.b16 %v446, %v445
      %v458 = vpack.c.b16 %v448, %v447
      %v459 = vpack.c.b16 %v450, %v449
      %v460 = vpack.c.b16 %v452, %v451
      %469 = vmatprep.subr.bf16.mxu0 0
      %470 = vmatpush1.bf16.msra.mxu0 %v453
      %471 = vmatprep.subr.bf16.mxu0 0
      %472 = vmatpush1.bf16.msra.mxu0 %v454
      %473 = vmatprep.subr.bf16.mxu0 0
      %474 = vmatpush1.bf16.msra.mxu0 %v455
      %475 = vmatprep.subr.bf16.mxu0 0
      %476 = vmatpush1.bf16.msra.mxu0 %v456
      %477 = vmatprep.subr.bf16.mxu0 0
      %478 = vmatpush1.bf16.msra.mxu0 %v457
      %479 = vmatprep.subr.bf16.mxu0 0
      %480 = vmatpush1.bf16.msra.mxu0 %v458
      %481 = vmatprep.subr.bf16.mxu0 0
      %482 = vmatpush1.bf16.msra.mxu0 %v459
      %483 = vmatprep.subr.bf16.mxu0 0
      %484 = vmatpush1.bf16.msra.mxu0 %v460
      %485 = vmatprep.subr.bf16.mxu0 0
      %486 = vmatpush1.bf16.msra.mxu0 0
      %487 = vmatprep.subr.bf16.mxu0 0
      %488 = vmatpush1.bf16.msra.mxu0 0
      %489 = vmatprep.subr.bf16.mxu0 0
      %490 = vmatpush1.bf16.msra.mxu0 0
      %491 = vmatprep.subr.bf16.mxu0 0
      %492 = vmatpush1.bf16.msra.mxu0 0
      %493 = vmatprep.subr.bf16.mxu0 0
      %494 = vmatpush1.bf16.msra.mxu0 0
      %495 = vmatprep.subr.bf16.mxu0 0
      %496 = vmatpush1.bf16.msra.mxu0 0
      %497 = vmatprep.subr.bf16.mxu0 0
      %498 = vmatpush1.bf16.msra.mxu0 0
      %499 = vmatprep.subr.bf16.mxu0 0
      %500 = vmatpush1.bf16.msra.mxu0 0
      %501 = vmatprep.mubr.bf16.mxu0 0
      %502 = vmatmul.mubr.bf16.gmra.mrb[0].mxu0 %v281
      %v503 = vpop.f32.mrb[0].mxu0
      %v504 = vadd.f32 0.0, %v503
      %v505 = vpop.f32.mrb[0].mxu0
      %v506 = vpop.f32.mrb[0].mxu0
      %v507 = vadd.f32 0.0, %v506
      %v508 = vpop.f32.mrb[0].mxu0
      %509 = vdwg.mxu0
      %v510 = vlaneseq
      %v511 = vshrl.u32 %v510, 7
      %v512 = vadd.s32 %v511, 8
      %vm513 = vcmp.lt.s32.totalorder %v511, 0
      %v514 = vsub.s32 0, %v511
      %v515 = vsel %vm513, %v514, %v511
      %v516 = vshrl.u32 %v515, 4
      %v517 = vand.u32 %v515, 15
      %v518 = vsub.s32 0, %v517
      %v519 = vsel %vm513, %v518, %v517
      %vm520 = vcmp.lt.s32.totalorder %v512, 0
      %v521 = vsub.s32 0, %v512
      %v522 = vsel %vm520, %v521, %v512
      %v523 = vshrl.u32 %v522, 4
      %v524 = vand.u32 %v522, 15
      %v525 = vsub.s32 0, %v524
      %v526 = vsel %vm520, %v525, %v524
      %vm527 = vcmp.ne.s32.totalorder %v519, 0
      %vm528 = vcmp.ne.s32.totalorder %v526, 0
      %vm529 = vcmp.lt.s32.totalorder %v519, 0
      %vm530 = vcmp.lt.s32.totalorder %v526, 0
      %vm531 = vmand %vm529, %vm527
      %vm532 = vmand %vm530, %vm528
      %v533 = vadd.s32 %v519, 16
      %v534 = vadd.s32 %v526, 16
      %v535 = vsel %vm531, %v533, %v519
      %v536 = vsel %vm532, %v534, %v526
      %vm537 = vcmp.eq.s32.totalorder %v535, 0
      %vm538 = vcmp.eq.s32.totalorder %v536, 0
      %v539 = vrot.slane %v381, 7
      %v540 = vrot.slane %v384, 7
      %vm541 = vcmp.lt.s32.totalorder %v511, 1
      %v542 = vsel %vm541, %v539, %v540
      %v543 = vsel %vm541, %v540, %v539
      %v544 = vsel %vm537, 1, 0
      %v545 = vsel %vm538, 1, 0
      %vm546 = vcmp.eq.s32.totalorder %v544, 1
      %vm547 = vcmp.eq.s32.totalorder %v545, 1
      %v548 = vsel %vm546, 0.0, %v543
      %v549 = vsel %vm547, 0.0, %v542
      %vm550 = vcmp.eq.s32.totalorder %v535, 15
      %vm551 = vcmp.eq.s32.totalorder %v536, 15
      %v552 = vrot.slane %v504, 1
      %v553 = vrot.slane %v507, 1
      %vm554 = vcmp.lt.s32.totalorder %v511, 7
      %v555 = vsel %vm554, %v552, %v553
      %v556 = vsel %vm554, %v553, %v552
      %v557 = vsel %vm550, 1, 0
      %v558 = vsel %vm551, 1, 0
      %vm559 = vcmp.eq.s32.totalorder %v557, 1
      %vm560 = vcmp.eq.s32.totalorder %v558, 1
      %v561 = vsel %vm559, 0.0, %v555
      %v562 = vsel %vm560, 0.0, %v556
      %v579 = vunpack.c.l.b16 %v388
      %v580 = vunpack.c.l.b16 %v389
      %v581 = vunpack.c.l.b16 %v390
      %v582 = vunpack.c.l.b16 %v391
      %v583 = vunpack.c.l.b16 %v392
      %v584 = vunpack.c.l.b16 %v393
      %v585 = vunpack.c.l.b16 %v394
      %v586 = vunpack.c.l.b16 %v395
      %v587 = vunpack.c.l.b16 %v396
      %v588 = vunpack.c.l.b16 %v397
      %v589 = vunpack.c.l.b16 %v398
      %v590 = vunpack.c.l.b16 %v399
      %v591 = vunpack.c.l.b16 %v400
      %v592 = vunpack.c.l.b16 %v401
      %v593 = vunpack.c.l.b16 %v402
      %v594 = vunpack.c.l.b16 %v403
      %v595 = vpack.c.b16 %v580, %v579
      %v596 = vpack.c.b16 %v582, %v581
      %v597 = vpack.c.b16 %v584, %v583
      %v598 = vpack.c.b16 %v586, %v585
      %v599 = vpack.c.b16 %v588, %v587
      %v600 = vpack.c.b16 %v590, %v589
      %v601 = vpack.c.b16 %v592, %v591
      %v602 = vpack.c.b16 %v594, %v593
      %611 = vmatprep.subr.bf16.mxu0 0
      %612 = vmatpush1.bf16.msra.mxu0 %v595
      %613 = vmatprep.subr.bf16.mxu0 0
      %614 = vmatpush1.bf16.msra.mxu0 %v596
      %615 = vmatprep.subr.bf16.mxu0 0
      %616 = vmatpush1.bf16.msra.mxu0 %v597
      %617 = vmatprep.subr.bf16.mxu0 0
      %618 = vmatpush1.bf16.msra.mxu0 %v598
      %619 = vmatprep.subr.bf16.mxu0 0
      %620 = vmatpush1.bf16.msra.mxu0 %v599
      %621 = vmatprep.subr.bf16.mxu0 0
      %622 = vmatpush1.bf16.msra.mxu0 %v600
      %623 = vmatprep.subr.bf16.mxu0 0
      %624 = vmatpush1.bf16.msra.mxu0 %v601
      %625 = vmatprep.subr.bf16.mxu0 0
      %626 = vmatpush1.bf16.msra.mxu0 %v602
      %627 = vmatprep.subr.bf16.mxu0 0
      %628 = vmatpush1.bf16.msra.mxu0 0
      %629 = vmatprep.subr.bf16.mxu0 0
      %630 = vmatpush1.bf16.msra.mxu0 0
      %631 = vmatprep.subr.bf16.mxu0 0
      %632 = vmatpush1.bf16.msra.mxu0 0
      %633 = vmatprep.subr.bf16.mxu0 0
      %634 = vmatpush1.bf16.msra.mxu0 0
      %635 = vmatprep.subr.bf16.mxu0 0
      %636 = vmatpush1.bf16.msra.mxu0 0
      %637 = vmatprep.subr.bf16.mxu0 0
      %638 = vmatpush1.bf16.msra.mxu0 0
      %639 = vmatprep.subr.bf16.mxu0 0
      %640 = vmatpush1.bf16.msra.mxu0 0
      %641 = vmatprep.subr.bf16.mxu0 0
      %642 = vmatpush1.bf16.msra.mxu0 0
      %643 = vmatprep.mubr.bf16.mxu0 0
      %644 = vmatmul.mubr.bf16.gmra.mrb[0].mxu0 %v281
      %v645 = vpop.f32.mrb[0].mxu0
      %v646 = vadd.f32 %v548, %v645
      %v647 = vpop.f32.mrb[0].mxu0
      %v648 = vpop.f32.mrb[0].mxu0
      %v649 = vadd.f32 %v549, %v648
      %v650 = vpop.f32.mrb[0].mxu0
      %651 = vdwg.mxu0
      %v652 = vadd.f32 %v646, %v561
      %v653 = vadd.f32 %v649, %v562
      %v654 = vadd.f32 %v652, %v653
      %v655 = vrot.slane %v654, 4
      %v656 = vadd.f32 %v654, %v655
      %v657 = vrot.slane %v656, 2
      %v658 = vadd.f32 %v656, %v657
      %v659 = vrot.slane %v658, 1
      %v660 = vadd.f32 %v658, %v659
      %v661 = vmul.f32 %v652, %v652
      %v662 = vmul.f32 %v653, %v653
      %v663 = vadd.f32 %v661, %v662
      %v664 = vrot.slane %v663, 4
      %v665 = vadd.f32 %v663, %v664
      %v666 = vrot.slane %v665, 2
      %v667 = vadd.f32 %v665, %v666
      %v668 = vrot.slane %v667, 1
      %v669 = vadd.f32 %v667, %v668
      %v670 = vld [vmem:[%s3] sm:$0xff]
      %v671 = vld [vmem:[%s3 + $0x8] sm:$0xff]
      %v672 = vld [vmem:[%s3 + $0x10] sm:$0xff]
      %v673 = vld [vmem:[%s3 + $0x18] sm:$0xff]
      %v674 = vld [vmem:[%s3 + $0x20] sm:$0xff]
      %v675 = vld [vmem:[%s3 + $0x28] sm:$0xff]
      %v676 = vld [vmem:[%s3 + $0x30] sm:$0xff]
      %v677 = vld [vmem:[%s3 + $0x38] sm:$0xff]
      %v678 = vld [vmem:[%s3 + $0x40] sm:$0xff]
      %v679 = vld [vmem:[%s3 + $0x48] sm:$0xff]
      %v680 = vld [vmem:[%s3 + $0x50] sm:$0xff]
      %v681 = vld [vmem:[%s3 + $0x58] sm:$0xff]
      %v682 = vld [vmem:[%s3 + $0x60] sm:$0xff]
      %v683 = vld [vmem:[%s3 + $0x68] sm:$0xff]
      %v684 = vld [vmem:[%s3 + $0x70] sm:$0xff]
      %v685 = vld [vmem:[%s3 + $0x78] sm:$0xff]
      %686 = vmatprep.subr.mxu0 0.0
      %687 = vmatpush1.msra.mxu0 %v670
      %688 = vmatprep.subr.mxu0 0.0
      %689 = vmatpush1.msra.mxu0 %v671
      %690 = vmatprep.subr.mxu0 0.0
      %691 = vmatpush1.msra.mxu0 %v672
      %692 = vmatprep.subr.mxu0 0.0
      %693 = vmatpush1.msra.mxu0 %v673
      %694 = vmatprep.subr.mxu0 0.0
      %695 = vmatpush1.msra.mxu0 %v674
      %696 = vmatprep.subr.mxu0 0.0
      %697 = vmatpush1.msra.mxu0 %v675
      %698 = vmatprep.subr.mxu0 0.0
      %699 = vmatpush1.msra.mxu0 %v676
      %700 = vmatprep.subr.mxu0 0.0
      %701 = vmatpush1.msra.mxu0 %v677
      %702 = vmatprep.subr.mxu0 0.0
      %703 = vmatpush1.msra.mxu0 %v678
      %704 = vmatprep.subr.mxu0 0.0
      %705 = vmatpush1.msra.mxu0 %v679
      %706 = vmatprep.subr.mxu0 0.0
      %707 = vmatpush1.msra.mxu0 %v680
      %708 = vmatprep.subr.mxu0 0.0
      %709 = vmatpush1.msra.mxu0 %v681
      %710 = vmatprep.subr.mxu0 0.0
      %711 = vmatpush1.msra.mxu0 %v682
      %712 = vmatprep.subr.mxu0 0.0
      %713 = vmatpush1.msra.mxu0 %v683
      %714 = vmatprep.subr.mxu0 0.0
      %715 = vmatpush1.msra.mxu0 %v684
      %716 = vmatprep.subr.mxu0 0.0
      %717 = vmatpush1.msra.mxu0 %v685
      %718 = vmatprep.subr.mxu0 0.0
      %719 = vmatpush1.msra.mxu0 0.0
      %720 = vmatprep.subr.mxu0 0.0
      %721 = vmatpush1.msra.mxu0 0.0
      %722 = vmatprep.subr.mxu0 0.0
      %723 = vmatpush1.msra.mxu0 0.0
      %724 = vmatprep.subr.mxu0 0.0
      %725 = vmatpush1.msra.mxu0 0.0
      %726 = vmatprep.subr.mxu0 0.0
      %727 = vmatpush1.msra.mxu0 0.0
      %728 = vmatprep.subr.mxu0 0.0
      %729 = vmatpush1.msra.mxu0 0.0
      %730 = vmatprep.subr.mxu0 0.0
      %731 = vmatpush1.msra.mxu0 0.0
      %732 = vmatprep.subr.mxu0 0.0
      %733 = vmatpush1.msra.mxu0 0.0
      %734 = vmatprep.subr.mxu0 0.0
      %735 = vmatpush1.msra.mxu0 0.0
      %736 = vmatprep.subr.mxu0 0.0
      %737 = vmatpush1.msra.mxu0 0.0
      %738 = vmatprep.subr.mxu0 0.0
      %739 = vmatpush1.msra.mxu0 0.0
      %740 = vmatprep.subr.mxu0 0.0
      %741 = vmatpush1.msra.mxu0 0.0
      %742 = vmatprep.subr.mxu0 0.0
      %743 = vmatpush1.msra.mxu0 0.0
      %744 = vmatprep.subr.mxu0 0.0
      %745 = vmatpush1.msra.mxu0 0.0
      %746 = vmatprep.subr.mxu0 0.0
      %747 = vmatpush1.msra.mxu0 0.0
      %748 = vmatprep.subr.mxu0 0.0
      %749 = vmatpush1.msra.mxu0 0.0
      %750 = vmatprep.mubr.f32.mxu0 0.0
      %751 = vmatmul.mubr.f32.gmra.mrb[0].mxu0 %v660
      %v752 = vpop.f32.mrb[0].mxu0
      %v753 = vadd.f32 0.0, %v752
      %v754 = vpop.f32.mrb[0].mxu0
      %755 = vdwg.mxu0
      %756 = vmatprep.subr.mxu0 0.0
      %757 = vmatpush1.msra.mxu0 %v670
      %758 = vmatprep.subr.mxu0 0.0
      %759 = vmatpush1.msra.mxu0 %v671
      %760 = vmatprep.subr.mxu0 0.0
      %761 = vmatpush1.msra.mxu0 %v672
      %762 = vmatprep.subr.mxu0 0.0
      %763 = vmatpush1.msra.mxu0 %v673
      %764 = vmatprep.subr.mxu0 0.0
      %765 = vmatpush1.msra.mxu0 %v674
      %766 = vmatprep.subr.mxu0 0.0
      %767 = vmatpush1.msra.mxu0 %v675
      %768 = vmatprep.subr.mxu0 0.0
      %769 = vmatpush1.msra.mxu0 %v676
      %770 = vmatprep.subr.mxu0 0.0
      %771 = vmatpush1.msra.mxu0 %v677
      %772 = vmatprep.subr.mxu0 0.0
      %773 = vmatpush1.msra.mxu0 %v678
      %774 = vmatprep.subr.mxu0 0.0
      %775 = vmatpush1.msra.mxu0 %v679
      %776 = vmatprep.subr.mxu0 0.0
      %777 = vmatpush1.msra.mxu0 %v680
      %778 = vmatprep.subr.mxu0 0.0
      %779 = vmatpush1.msra.mxu0 %v681
      %780 = vmatprep.subr.mxu0 0.0
      %781 = vmatpush1.msra.mxu0 %v682
      %782 = vmatprep.subr.mxu0 0.0
      %783 = vmatpush1.msra.mxu0 %v683
      %784 = vmatprep.subr.mxu0 0.0
      %785 = vmatpush1.msra.mxu0 %v684
      %786 = vmatprep.subr.mxu0 0.0
      %787 = vmatpush1.msra.mxu0 %v685
      %788 = vmatprep.subr.mxu0 0.0
      %789 = vmatpush1.msra.mxu0 0.0
      %790 = vmatprep.subr.mxu0 0.0
      %791 = vmatpush1.msra.mxu0 0.0
      %792 = vmatprep.subr.mxu0 0.0
      %793 = vmatpush1.msra.mxu0 0.0
      %794 = vmatprep.subr.mxu0 0.0
      %795 = vmatpush1.msra.mxu0 0.0
      %796 = vmatprep.subr.mxu0 0.0
      %797 = vmatpush1.msra.mxu0 0.0
      %798 = vmatprep.subr.mxu0 0.0
      %799 = vmatpush1.msra.mxu0 0.0
      %800 = vmatprep.subr.mxu0 0.0
      %801 = vmatpush1.msra.mxu0 0.0
      %802 = vmatprep.subr.mxu0 0.0
      %803 = vmatpush1.msra.mxu0 0.0
      %804 = vmatprep.subr.mxu0 0.0
      %805 = vmatpush1.msra.mxu0 0.0
      %806 = vmatprep.subr.mxu0 0.0
      %807 = vmatpush1.msra.mxu0 0.0
      %808 = vmatprep.subr.mxu0 0.0
      %809 = vmatpush1.msra.mxu0 0.0
      %810 = vmatprep.subr.mxu0 0.0
      %811 = vmatpush1.msra.mxu0 0.0
      %812 = vmatprep.subr.mxu0 0.0
      %813 = vmatpush1.msra.mxu0 0.0
      %814 = vmatprep.subr.mxu0 0.0
      %815 = vmatpush1.msra.mxu0 0.0
      %816 = vmatprep.subr.mxu0 0.0
      %817 = vmatpush1.msra.mxu0 0.0
      %818 = vmatprep.subr.mxu0 0.0
      %819 = vmatpush1.msra.mxu0 0.0
      %820 = vmatprep.mubr.f32.mxu0 0.0
      %821 = vmatmul.mubr.f32.gmra.mrb[0].mxu0 %v669
      %v822 = vpop.f32.mrb[0].mxu0
      %v823 = vadd.f32 0.0, %v822
      %v824 = vpop.f32.mrb[0].mxu0
      %825 = vdwg.mxu0
      %v827 = vrot.slane %v823, 7
      %vm829 = vcmask 1040384
      %v830 = vsel %vm829, %v753, %v827
      %vm831 = vcmask 58368
      %832 = vst.msk [vmem:[%s252] sm:$0x3] %vm831, %v830
      %v833 = vpack.c.bf16 %v653, %v652
      %v835 = vunpack.c.l.b16 %v833
      %v836 = vunpack.c.h.b16 %v833
      %v837 = vpack.c.b16 %v835, %v835
      %v838 = vpack.c.b16 %v836, %v836
      %841 = vst [vmem:[%s248] sm:$0xf] %v837
      %842 = vst [vmem:[%s248 + $0x4] sm:$0xf] %v838
      %p843 = scmp.lt.s32.totalorder %s17, 1
      %s844 = scalar_select %p843, %s17, 1
      %s845 = smul.addr %s844, 2
      %s846 = smul.addr %s845, 4
      %s847 = scalar_lea.vmem %s4, %s846
      %p848 = scmp.lt.s32.totalorder %s17, 1
      %s849 = scalar_select %p848, %s17, 1
      %s850 = smul.addr %s849, 2
      %s851 = scalar_lea.vmem %s5, %s850
      // Predicated region
      $region37: #{residual_conv_block_forward.4} parent=35 // pred_check
        %p852 = pneg %p129
      $region38: #{residual_conv_block_forward.4} parent=35 // pred_check_branch
        %854 = sbr.rel (%p852) target = $region40
      $region39: #{residual_conv_block_forward.4} parent=35 // pred_region
        _
      $region40: #{residual_conv_block_forward.4} parent=35 // pred_fallthru
        _
      // Predicated region
      $region41: #{residual_conv_block_forward.4} parent=35 // pred_check
        %p855 = pneg %p155
      $region42: #{residual_conv_block_forward.4} parent=35 // pred_check_branch
        %857 = sbr.rel (%p855) target = $region44
      $region43: #{residual_conv_block_forward.4} parent=35 // pred_region
        _
      $region44: #{residual_conv_block_forward.4} parent=35 // pred_fallthru
        _
    $region36: #{residual_conv_block_forward.4} parent=5 // pred_fallthru
      _
    %p858 = scmp.le.s32.totalorder 2, %s12
    // Predicated region
    $region45: #{residual_conv_block_forward.4} parent=5 // pred_check
      %p859 = pneg %p858
    $region46: #{residual_conv_block_forward.4} parent=5 // pred_check_branch
      %861 = sbr.rel (%p859) target = $region48
    $region47: #{residual_conv_block_forward.4} parent=5 // pred_region
      %s862 = ssub.s32 %s12, 2
      // Predicated region
      $region49: #{residual_conv_block_forward.4} parent=47 // pred_check
        %p863 = pneg %p135
      $region50: #{residual_conv_block_forward.4} parent=47 // pred_check_branch
        %865 = sbr.rel (%p863) target = $region52
      $region51: #{residual_conv_block_forward.4} parent=47 // pred_region
        %p866 = scmp.lt.s32.totalorder %s18, 1
        %s867 = scalar_select %p866, %s18, 1
        %s868 = smul.addr %s867, 2
        %s869 = smul.addr %s868, 4
        %s870 = scalar_lea.vmem %s4, %s869
      $region52: #{residual_conv_block_forward.4} parent=47 // pred_fallthru
        _
      // Predicated region
      $region53: #{residual_conv_block_forward.4} parent=47 // pred_check
        %p871 = pneg %p161
      $region54: #{residual_conv_block_forward.4} parent=47 // pred_check_branch
        %873 = sbr.rel (%p871) target = $region56
      $region55: #{residual_conv_block_forward.4} parent=47 // pred_region
        %p874 = scmp.lt.s32.totalorder %s18, 1
        %s875 = scalar_select %p874, %s18, 1
        %s876 = smul.addr %s875, 2
        %s877 = scalar_lea.vmem %s5, %s876
      $region56: #{residual_conv_block_forward.4} parent=47 // pred_fallthru
        _
    $region48: #{residual_conv_block_forward.4} parent=5 // pred_fallthru
      _
  $region6: #{residual_conv_block_forward.4} parent=0 // loop_footer
    %s16 = sadd.s32 1, %s12
  $region7: #{residual_conv_block_forward.4} parent=0 // loop_footer_branch
    %11 = sbr.rel target = $region3
  $region8: #{residual_conv_block_forward.4} parent=0 // loop_exit
    _

// kernel: residual_conv_block_forward.5
$region0: #{residual_conv_block_forward.5}
  #allocation0 [shape = 'u32[]', space=smem, size = 0x4, offset = 0x4, fixed_abs, tag = 'smem constant byte address 0x4 - core index']
  #allocation1 [shape = 'u32[144,128]{1,0:T(1,128)}', space=vmem, size = 0x12000, scoped, tag = 'internal scratch']
  %s0 = inlined_call_operand.vmem [shape: bf16[2,16,128], index: 0, kind: input, shape index: {}]
  %s1 = inlined_call_operand.vmem [shape: bf16[2,16,128], index: 1, kind: input, shape index: {}]
  %s2 = inlined_call_operand.vmem [shape: f32[2,3,128], index: 2, kind: input, shape index: {}]
  %s3 = inlined_call_operand.vmem [shape: f32[8,16], index: 3, kind: input, shape index: {}]
  %s4 = inlined_call_operand.vmem [shape: f32[128,64], index: 4, kind: input, shape index: {}]
  %s5 = inlined_call_operand.vmem [shape: f32[2,8,64], index: 5, kind: output, shape index: {}]
  %s6 = sld [smem:[#allocation0]]
  $region53: #{residual_conv_block_forward.5} parent=0
    _
  %s8 = ssub.s32 1, %s6
  %s9 = scalar_select 0, %s8, %s6
  loop: start=0, step=1, limit=4
  $region2: #{residual_conv_block_forward.5} parent=0 // loop_pre_header
    _
  $region3: #{residual_conv_block_forward.5} parent=0 // loop_header
    %s11 = sphi 0, %s15
    %p12 = scmp.ge.s32.totalorder %s11, 4
    %s21 = sphi 0, %s23
    %s24 = sphi 0, %s21
    %s25 = sphi 0, %s24
    %s41 = sphi 0, %s25
    %s47 = sphi 0, %s49
    %s50 = sphi 0, %s47
    %s51 = sphi 0, %s50
    %s67 = sphi 0, %s51
    %s73 = sphi 0, %s75
    %s76 = sphi 0, %s73
    %s77 = sphi 0, %s76
    %s93 = sphi 0, %s77
    %s97 = sphi 0, %s97
    %s99 = sphi 0, %s97
    %s100 = sphi 0, %s99
    %s114 = sphi 0, %s100
    %s118 = sphi 0, %s118
    %s120 = sphi 0, %s118
    %s121 = sphi 0, %s120
    %s135 = sphi 0, %s121
    %s141 = sphi 0, %s143
    %s144 = sphi 0, %s141
    %s145 = sphi 0, %s144
    %s161 = sphi 0, %s145
  $region4: #{residual_conv_block_forward.5} parent=0 // loop_header_branch
    %14 = sbr.rel (%p12) target = $region8
  $region5: #{residual_conv_block_forward.5} parent=0 // loop_body
    %s16 = ssub.s32 %s11, 1
    %s17 = ssub.s32 %s11, 2
    %s18 = sadd.s32 %s11, 1
    %s19 = ssub.s32 %s11, %s18
    %p20 = scmp.eq.s32.totalorder %s19, 0
    %s22 = sadd.s32 %s21, 1
    %s23 = scalar_select %p20, %s21, %s22
    %p26 = pneg %p20
    %p27 = scmp.eq.s32.totalorder %s11, 1
    %p28 = por %p26, %p27
    %p29 = scmp.ne.s32.totalorder %s21, %s24
    %p30 = scmp.eq.s32.totalorder %s11, 0
    %p31 = por %p29, %p30
    %p32 = scmp.ne.s32.totalorder %s21, %s24
    %p33 = scmp.eq.s32.totalorder %s16, 1
    %p34 = por %p32, %p33
    %p35 = scmp.ne.s32.totalorder %s24, %s25
    %p36 = scmp.eq.s32.totalorder %s16, 0
    %p37 = por %p35, %p36
    %p38 = scmp.ne.s32.totalorder %s24, %s25
    %p39 = scmp.eq.s32.totalorder %s17, 1
    %p40 = por %p38, %p39
    %p42 = scmp.ne.s32.totalorder %s25, %s41
    %p43 = scmp.eq.s32.totalorder %s17, 0
    %p44 = por %p42, %p43
    %s45 = ssub.s32 %s11, %s18
    %p46 = scmp.eq.s32.totalorder %s45, 0
    %s48 = sadd.s32 %s47, 1
    %s49 = scalar_select %p46, %s47, %s48
    %p52 = pneg %p46
    %p53 = scmp.eq.s32.totalorder %s11, 1
    %p54 = por %p52, %p53
    %p55 = scmp.ne.s32.totalorder %s47, %s50
    %p56 = scmp.eq.s32.totalorder %s11, 0
    %p57 = por %p55, %p56
    %p58 = scmp.ne.s32.totalorder %s47, %s50
    %p59 = scmp.eq.s32.totalorder %s16, 1
    %p60 = por %p58, %p59
    %p61 = scmp.ne.s32.totalorder %s50, %s51
    %p62 = scmp.eq.s32.totalorder %s16, 0
    %p63 = por %p61, %p62
    %p64 = scmp.ne.s32.totalorder %s50, %s51
    %p65 = scmp.eq.s32.totalorder %s17, 1
    %p66 = por %p64, %p65
    %p68 = scmp.ne.s32.totalorder %s51, %s67
    %p69 = scmp.eq.s32.totalorder %s17, 0
    %p70 = por %p68, %p69
    %s71 = ssub.s32 %s11, %s18
    %p72 = scmp.eq.s32.totalorder %s71, 0
    %s74 = sadd.s32 %s73, 1
    %s75 = scalar_select %p72, %s73, %s74
    %p78 = pneg %p72
    %p79 = scmp.eq.s32.totalorder %s11, 1
    %p80 = por %p78, %p79
    %p81 = scmp.ne.s32.totalorder %s73, %s76
    %p82 = scmp.eq.s32.totalorder %s11, 0
    %p83 = por %p81, %p82
    %p84 = scmp.ne.s32.totalorder %s73, %s76
    %p85 = scmp.eq.s32.totalorder %s16, 1
    %p86 = por %p84, %p85
    %p87 = scmp.ne.s32.totalorder %s76, %s77
    %p88 = scmp.eq.s32.totalorder %s16, 0
    %p89 = por %p87, %p88
    %p90 = scmp.ne.s32.totalorder %s76, %s77
    %p91 = scmp.eq.s32.totalorder %s17, 1
    %p92 = por %p90, %p91
    %p94 = scmp.ne.s32.totalorder %s77, %s93
    %p95 = scmp.eq.s32.totalorder %s17, 0
    %p96 = por %p94, %p95
    %s98 = sadd.s32 %s97, 1
    %p101 = scmp.eq.s32.totalorder %s11, 1
    %p102 = scmp.ne.s32.totalorder %s97, %s99
    %p103 = scmp.eq.s32.totalorder %s11, 0
    %p104 = por %p102, %p103
    %p105 = scmp.ne.s32.totalorder %s97, %s99
    %p106 = scmp.eq.s32.totalorder %s16, 1
    %p107 = por %p105, %p106
    %p108 = scmp.ne.s32.totalorder %s99, %s100
    %p109 = scmp.eq.s32.totalorder %s16, 0
    %p110 = por %p108, %p109
    %p111 = scmp.ne.s32.totalorder %s99, %s100
    %p112 = scmp.eq.s32.totalorder %s17, 1
    %p113 = por %p111, %p112
    %p115 = scmp.ne.s32.totalorder %s100, %s114
    %p116 = scmp.eq.s32.totalorder %s17, 0
    %p117 = por %p115, %p116
    %s119 = sadd.s32 %s118, 1
    %p122 = scmp.eq.s32.totalorder %s11, 1
    %p123 = scmp.ne.s32.totalorder %s118, %s120
    %p124 = scmp.eq.s32.totalorder %s11, 0
    %p125 = por %p123, %p124
    %p126 = scmp.ne.s32.totalorder %s118, %s120
    %p127 = scmp.eq.s32.totalorder %s16, 1
    %p128 = por %p126, %p127
    %p129 = scmp.ne.s32.totalorder %s120, %s121
    %p130 = scmp.eq.s32.totalorder %s16, 0
    %p131 = por %p129, %p130
    %p132 = scmp.ne.s32.totalorder %s120, %s121
    %p133 = scmp.eq.s32.totalorder %s17, 1
    %p134 = por %p132, %p133
    %p136 = scmp.ne.s32.totalorder %s121, %s135
    %p137 = scmp.eq.s32.totalorder %s17, 0
    %p138 = por %p136, %p137
    %s139 = ssub.s32 %s11, %s18
    %p140 = scmp.eq.s32.totalorder %s139, 0
    %s142 = sadd.s32 %s141, 1
    %s143 = scalar_select %p140, %s141, %s142
    %p146 = pneg %p140
    %p147 = scmp.eq.s32.totalorder %s11, 1
    %p148 = por %p146, %p147
    %p149 = scmp.ne.s32.totalorder %s141, %s144
    %p150 = scmp.eq.s32.totalorder %s11, 0
    %p151 = por %p149, %p150
    %p152 = scmp.ne.s32.totalorder %s141, %s144
    %p153 = scmp.eq.s32.totalorder %s16, 1
    %p154 = por %p152, %p153
    %p155 = scmp.ne.s32.totalorder %s144, %s145
    %p156 = scmp.eq.s32.totalorder %s16, 0
    %p157 = por %p155, %p156
    %p158 = scmp.ne.s32.totalorder %s144, %s145
    %p159 = scmp.eq.s32.totalorder %s17, 1
    %p160 = por %p158, %p159
    %p162 = scmp.ne.s32.totalorder %s145, %s161
    %p163 = scmp.eq.s32.totalorder %s17, 0
    %p164 = por %p162, %p163
    %p165 = scmp.le.s32.totalorder 1, %s11
    %p166 = scmp.lt.s32.totalorder %s11, 3
    %p167 = pnand %p165, %p166
    %p168 = pneg %p167
    // Predicated region
    $region9: #{residual_conv_block_forward.5} parent=5 // pred_check
      _
    $region10: #{residual_conv_block_forward.5} parent=5 // pred_check_branch
      %170 = sbr.rel (%p167) target = $region12
    $region11: #{residual_conv_block_forward.5} parent=5 // pred_region
      %s171 = ssub.s32 %s11, 1
      // Predicated region
      $region13: #{residual_conv_block_forward.5} parent=11 // pred_check
        %p172 = pneg %p110
      $region14: #{residual_conv_block_forward.5} parent=11 // pred_check_branch
        %174 = sbr.rel (%p172) target = $region16
      $region15: #{residual_conv_block_forward.5} parent=11 // pred_region
        _
      $region16: #{residual_conv_block_forward.5} parent=11 // pred_fallthru
        _
      // Predicated region
      $region17: #{residual_conv_block_forward.5} parent=11 // pred_check
        %p175 = pneg %p131
      $region18: #{residual_conv_block_forward.5} parent=11 // pred_check_branch
        %177 = sbr.rel (%p175) target = $region20
      $region19: #{residual_conv_block_forward.5} parent=11 // pred_region
        _
      $region20: #{residual_conv_block_forward.5} parent=11 // pred_fallthru
        _
    $region12: #{residual_conv_block_forward.5} parent=5 // pred_fallthru
      _
    %p178 = scmp.lt.s32.totalorder %s11, 2
    // Predicated region
    $region21: #{residual_conv_block_forward.5} parent=5 // pred_check
      %p179 = pneg %p178
    $region22: #{residual_conv_block_forward.5} parent=5 // pred_check_branch
      %181 = sbr.rel (%p179) target = $region24
    $region23: #{residual_conv_block_forward.5} parent=5 // pred_region
      // Predicated region
      $region25: #{residual_conv_block_forward.5} parent=23 // pred_check
        %p182 = pneg %p31
      $region26: #{residual_conv_block_forward.5} parent=23 // pred_check_branch
        %184 = sbr.rel (%p182) target = $region28
      $region27: #{residual_conv_block_forward.5} parent=23 // pred_region
        %p185 = scmp.lt.s32.totalorder %s11, 1
        %s186 = scalar_select %p185, %s11, 1
        %s187 = smul.addr %s186, 2
        %s188 = smul.addr %s187, 4
        %s189 = scalar_lea.vmem %s0, %s188
      $region28: #{residual_conv_block_forward.5} parent=23 // pred_fallthru
        _
      // Predicated region
      $region29: #{residual_conv_block_forward.5} parent=23 // pred_check
        %p190 = pneg %p57
      $region30: #{residual_conv_block_forward.5} parent=23 // pred_check_branch
        %192 = sbr.rel (%p190) target = $region32
      $region31: #{residual_conv_block_forward.5} parent=23 // pred_region
        %p193 = scmp.lt.s32.totalorder %s11, 1
        %s194 = scalar_select %p193, %s11, 1
        %s195 = smul.addr %s194, 2
        %s196 = smul.addr %s195, 4
        %s197 = scalar_lea.vmem %s1, %s196
      $region32: #{residual_conv_block_forward.5} parent=23 // pred_fallthru
        _
      // Predicated region
      $region33: #{residual_conv_block_forward.5} parent=23 // pred_check
        %p198 = pneg %p83
      $region34: #{residual_conv_block_forward.5} parent=23 // pred_check_branch
        %200 = sbr.rel (%p198) target = $region36
      $region35: #{residual_conv_block_forward.5} parent=23 // pred_region
        %p201 = scmp.lt.s32.totalorder %s11, 1
        %s202 = scalar_select %p201, %s11, 1
        %s203 = smul.addr %s202, 4
        %s204 = scalar_lea.vmem %s2, %s203
      $region36: #{residual_conv_block_forward.5} parent=23 // pred_fallthru
        _
    $region24: #{residual_conv_block_forward.5} parent=5 // pred_fallthru
      _
    %p205 = scmp.le.s32.totalorder 1, %s11
    %p206 = scmp.lt.s32.totalorder %s11, 3
    %p207 = pnand %p205, %p206
    %p208 = pneg %p207
    // Predicated region
    $region37: #{residual_conv_block_forward.5} parent=5 // pred_check
      _
    $region38: #{residual_conv_block_forward.5} parent=5 // pred_check_branch
      %210 = sbr.rel (%p207) target = $region40
    $region39: #{residual_conv_block_forward.5} parent=5 // pred_region
      %s211 = ssub.s32 %s11, 1
      %p212 = scmp.lt.s32.totalorder %s16, 1
      %s213 = scalar_select %p212, %s16, 1
      %s214 = smul.addr %s213, 2
      %s215 = smul.addr %s214, 4
      %s216 = scalar_lea.vmem %s0, %s215
      %p217 = pneg %p37
      %p218 = pneg %p34
      %p219 = scmp.lt.s32.totalorder %s16, 1
      %s220 = scalar_select %p219, %s16, 1
      %s221 = smul.addr %s220, 2
      %s222 = smul.addr %s221, 4
      %s223 = scalar_lea.vmem %s1, %s222
      %p224 = pneg %p63
      %p225 = pneg %p60
      %p226 = scmp.lt.s32.totalorder %s16, 1
      %s227 = scalar_select %p226, %s16, 1
      %s228 = smul.addr %s227, 4
      %s229 = scalar_lea.vmem %s2, %s228
      %p230 = pneg %p89
      %p231 = pneg %p86
      %p232 = pneg %p110
      %p233 = pneg %p107
      %p234 = pneg %p131
      %p235 = pneg %p128
      %p236 = pneg %p157
      %p237 = pneg %p154
      %p238 = scmp.lt.s32.totalorder %s16, 1
      %s239 = scalar_select %p238, %s16, 1
      %s240 = smul.addr %s239, 8
      %s241 = scalar_lea.vmem %s5, %s240
      %p242 = scmp.lt.s32.totalorder %s16, 1
      %s243 = scalar_select %p242, %s16, 1
      %s244 = smul.addr %s243, 2
      %s245 = smul.addr %s244, 4
      %s246 = scalar_lea.vmem %s0, %s245
      %p247 = scmp.lt.s32.totalorder %s16, 1
      %s248 = scalar_select %p247, %s16, 1
      %s249 = smul.addr %s248, 2
      %s250 = smul.addr %s249, 4
      %s251 = scalar_lea.vmem %s1, %s250
      %p252 = scmp.lt.s32.totalorder %s16, 1
      %s253 = scalar_select %p252, %s16, 1
      %s254 = smul.addr %s253, 4
      %s255 = scalar_lea.vmem %s2, %s254
      %p256 = scmp.lt.s32.totalorder %s16, 1
      %s257 = scalar_select %p256, %s16, 1
      %s258 = smul.addr %s257, 8
      %s259 = scalar_lea.vmem %s5, %s258
      %v260 = vld [vmem:[%s255] sm:$0x7]
      %v261 = vld [vmem:[%s246] sm:$0xf]
      %v262 = vld [vmem:[%s246 + $0x4] sm:$0xf]
      %v263 = vunpack.c.l.bf16 %v261
      %v264 = vunpack.c.l.bf16 %v262
      %v265 = vlaneseq
      %v266 = vshrl.u32 %v265, 7
      %v267 = vsub.s32 0, %v266
      %v268 = vrot.slane %v260, %v267
      %v269 = vmul.f32 %v263, %v268
      %v270 = vmul.f32 %v264, %v268
      %v271 = vlaneseq
      %v272 = vshrl.u32 %v271, 7
      %v273 = vsub.s32 1, %v272
      %v274 = vrot.slane %v260, %v273
      %v275 = vadd.f32 %v269, %v274
      %v276 = vadd.f32 %v270, %v274
      %v277 = vld [vmem:[%s251] sm:$0xf]
      %v278 = vld [vmem:[%s251 + $0x4] sm:$0xf]
      %v279 = vunpack.c.l.bf16 %v277
      %v280 = vunpack.c.l.bf16 %v278
      %v281 = vadd.f32 %v275, %v279
      %v282 = vadd.f32 %v276, %v280
      %vm283 = vcmp.gt.f32.partialorder %v281, 0.0
      %vm284 = vcmp.gt.f32.partialorder %v282, 0.0
      %v285 = vlaneseq
      %v286 = vshrl.u32 %v285, 7
      %v287 = vsub.s32 2, %v286
      %v288 = vrot.slane %v260, %v287
      %v289 = vmul.f32 %v288, %v281
      %v290 = vmul.f32 %v288, %v282
      %v291 = vsel %vm283, %v281, %v289
      %v292 = vsel %vm284, %v282, %v290
      %v293 = vld [vmem:[%s4] sm:$0xff]
      %v294 = vld [vmem:[%s4 + $0x8] sm:$0xff]
      %v295 = vld [vmem:[%s4 + $0x10] sm:$0xff]
      %v296 = vld [vmem:[%s4 + $0x18] sm:$0xff]
      %v297 = vld [vmem:[%s4 + $0x20] sm:$0xff]
      %v298 = vld [vmem:[%s4 + $0x28] sm:$0xff]
      %v299 = vld [vmem:[%s4 + $0x30] sm:$0xff]
      %v300 = vld [vmem:[%s4 + $0x38] sm:$0xff]
      %v301 = vld [vmem:[%s4 + $0x40] sm:$0xff]
      %v302 = vld [vmem:[%s4 + $0x48] sm:$0xff]
      %v303 = vld [vmem:[%s4 + $0x50] sm:$0xff]
      %v304 = vld [vmem:[%s4 + $0x58] sm:$0xff]
      %v305 = vld [vmem:[%s4 + $0x60] sm:$0xff]
      %v306 = vld [vmem:[%s4 + $0x68] sm:$0xff]
      %v307 = vld [vmem:[%s4 + $0x70] sm:$0xff]
      %v308 = vld [vmem:[%s4 + $0x78] sm:$0xff]
      %309 = vmatprep.subr.mxu0 0.0
      %310 = vmatpush1.msra.mxu0 %v293
      %311 = vmatprep.subr.mxu0 0.0
      %312 = vmatpush1.msra.mxu0 %v294
      %313 = vmatprep.subr.mxu0 0.0
      %314 = vmatpush1.msra.mxu0 %v295
      %315 = vmatprep.subr.mxu0 0.0
      %316 = vmatpush1.msra.mxu0 %v296
      %317 = vmatprep.subr.mxu0 0.0
      %318 = vmatpush1.msra.mxu0 %v297
      %319 = vmatprep.subr.mxu0 0.0
      %320 = vmatpush1.msra.mxu0 %v298
      %321 = vmatprep.subr.mxu0 0.0
      %322 = vmatpush1.msra.mxu0 %v299
      %323 = vmatprep.subr.mxu0 0.0
      %324 = vmatpush1.msra.mxu0 %v300
      %325 = vmatprep.subr.mxu0 0.0
      %326 = vmatpush1.msra.mxu0 %v301
      %327 = vmatprep.subr.mxu0 0.0
      %328 = vmatpush1.msra.mxu0 %v302
      %329 = vmatprep.subr.mxu0 0.0
      %330 = vmatpush1.msra.mxu0 %v303
      %331 = vmatprep.subr.mxu0 0.0
      %332 = vmatpush1.msra.mxu0 %v304
      %333 = vmatprep.subr.mxu0 0.0
      %334 = vmatpush1.msra.mxu0 %v305
      %335 = vmatprep.subr.mxu0 0.0
      %336 = vmatpush1.msra.mxu0 %v306
      %337 = vmatprep.subr.mxu0 0.0
      %338 = vmatpush1.msra.mxu0 %v307
      %339 = vmatprep.subr.mxu0 0.0
      %340 = vmatpush1.msra.mxu0 %v308
      %341 = vmatprep.subr.mxu0 0.0
      %342 = vmatpush1.msra.mxu0 0.0
      %343 = vmatprep.subr.mxu0 0.0
      %344 = vmatpush1.msra.mxu0 0.0
      %345 = vmatprep.subr.mxu0 0.0
      %346 = vmatpush1.msra.mxu0 0.0
      %347 = vmatprep.subr.mxu0 0.0
      %348 = vmatpush1.msra.mxu0 0.0
      %349 = vmatprep.subr.mxu0 0.0
      %350 = vmatpush1.msra.mxu0 0.0
      %351 = vmatprep.subr.mxu0 0.0
      %352 = vmatpush1.msra.mxu0 0.0
      %353 = vmatprep.subr.mxu0 0.0
      %354 = vmatpush1.msra.mxu0 0.0
      %355 = vmatprep.subr.mxu0 0.0
      %356 = vmatpush1.msra.mxu0 0.0
      %357 = vmatprep.subr.mxu0 0.0
      %358 = vmatpush1.msra.mxu0 0.0
      %359 = vmatprep.subr.mxu0 0.0
      %360 = vmatpush1.msra.mxu0 0.0
      %361 = vmatprep.subr.mxu0 0.0
      %362 = vmatpush1.msra.mxu0 0.0
      %363 = vmatprep.subr.mxu0 0.0
      %364 = vmatpush1.msra.mxu0 0.0
      %365 = vmatprep.subr.mxu0 0.0
      %366 = vmatpush1.msra.mxu0 0.0
      %367 = vmatprep.subr.mxu0 0.0
      %368 = vmatpush1.msra.mxu0 0.0
      %369 = vmatprep.subr.mxu0 0.0
      %370 = vmatpush1.msra.mxu0 0.0
      %371 = vmatprep.subr.mxu0 0.0
      %372 = vmatpush1.msra.mxu0 0.0
      %373 = vmatprep.mubr.f32.mxu0 0.0
      %374 = vmatmul.mubr.f32.gmra.mrb[0].mxu0 %v291
      %v375 = vpop.f32.mrb[0].mxu0
      %v376 = vadd.f32 0.0, %v375
      %v377 = vpop.f32.mrb[0].mxu0
      %378 = vmatprep.mubr.f32.mxu0 0.0
      %379 = vmatmul.mubr.f32.gmra.mrb[0].mxu0 %v292
      %v380 = vpop.f32.mrb[0].mxu0
      %v381 = vadd.f32 0.0, %v380
      %v382 = vpop.f32.mrb[0].mxu0
      %383 = vdwg.mxu0
      %v384 = vld [vmem:[%s3] sm:$0xff]
      %vm385 = vcmask 130048
      %v387 = vsel %vm385, %v384, 0
      %389 = vmatprep.subr.mxu0 0.0
      %390 = vmatpush1.msra.mxu0 %v376
      %391 = vmatprep.subr.mxu0 0.0
      %392 = vmatpush1.msra.mxu0 %v381
      %393 = vmatprep.subr.mxu0 0.0
      %394 = vmatpush1.msra.mxu0 0.0
      %395 = vmatprep.subr.mxu0 0.0
      %396 = vmatpush1.msra.mxu0 0.0
      %397 = vmatprep.subr.mxu0 0.0
      %398 = vmatpush1.msra.mxu0 0.0
      %399 = vmatprep.subr.mxu0 0.0
      %400 = vmatpush1.msra.mxu0 0.0
      %401 = vmatprep.subr.mxu0 0.0
      %402 = vmatpush1.msra.mxu0 0.0
      %403 = vmatprep.subr.mxu0 0.0
      %404 = vmatpush1.msra.mxu0 0.0
      %405 = vmatprep.subr.mxu0 0.0
      %406 = vmatpush1.msra.mxu0 0.0
      %407 = vmatprep.subr.mxu0 0.0
      %408 = vmatpush1.msra.mxu0 0.0
      %409 = vmatprep.subr.mxu0 0.0
      %410 = vmatpush1.msra.mxu0 0.0
      %411 = vmatprep.subr.mxu0 0.0
      %412 = vmatpush1.msra.mxu0 0.0
      %413 = vmatprep.subr.mxu0 0.0
      %414 = vmatpush1.msra.mxu0 0.0
      %415 = vmatprep.subr.mxu0 0.0
      %416 = vmatpush1.msra.mxu0 0.0
      %417 = vmatprep.subr.mxu0 0.0
      %418 = vmatpush1.msra.mxu0 0.0
      %419 = vmatprep.subr.mxu0 0.0
      %420 = vmatpush1.msra.mxu0 0.0
      %421 = vmatprep.subr.mxu0 0.0
      %422 = vmatpush1.msra.mxu0 0.0
      %423 = vmatprep.subr.mxu0 0.0
      %424 = vmatpush1.msra.mxu0 0.0
      %425 = vmatprep.subr.mxu0 0.0
      %426 = vmatpush1.msra.mxu0 0.0
      %427 = vmatprep.subr.mxu0 0.0
      %428 = vmatpush1.msra.mxu0 0.0
      %429 = vmatprep.subr.mxu0 0.0
      %430 = vmatpush1.msra.mxu0 0.0
      %431 = vmatprep.subr.mxu0 0.0
      %432 = vmatpush1.msra.mxu0 0.0
      %433 = vmatprep.subr.mxu0 0.0
      %434 = vmatpush1.msra.mxu0 0.0
      %435 = vmatprep.subr.mxu0 0.0
      %436 = vmatpush1.msra.mxu0 0.0
      %437 = vmatprep.subr.mxu0 0.0
      %438 = vmatpush1.msra.mxu0 0.0
      %439 = vmatprep.subr.mxu0 0.0
      %440 = vmatpush1.msra.mxu0 0.0
      %441 = vmatprep.subr.mxu0 0.0
      %442 = vmatpush1.msra.mxu0 0.0
      %443 = vmatprep.subr.mxu0 0.0
      %444 = vmatpush1.msra.mxu0 0.0
      %445 = vmatprep.subr.mxu0 0.0
      %446 = vmatpush1.msra.mxu0 0.0
      %447 = vmatprep.subr.mxu0 0.0
      %448 = vmatpush1.msra.mxu0 0.0
      %449 = vmatprep.subr.mxu0 0.0
      %450 = vmatpush1.msra.mxu0 0.0
      %451 = vmatprep.subr.mxu0 0.0
      %452 = vmatpush1.msra.mxu0 0.0
      %453 = vmatprep.mubr.f32.mxu0 0.0
      %454 = vmatmul.mubr.f32.gmra.mrb[0].mxu0 %v387
      %v455 = vpop.f32.mrb[0].mxu0
      %v456 = vadd.f32 0.0, %v455
      %v457 = vpop.f32.mrb[0].mxu0
      %458 = vdwg.mxu0
      %vm459 = vcmask 523264
      %460 = vst.msk [vmem:[%s259] sm:$0xff] %vm459, %v456
      %p461 = scmp.lt.s32.totalorder %s16, 1
      %s462 = scalar_select %p461, %s16, 1
      %s463 = smul.addr %s462, 8
      %s464 = scalar_lea.vmem %s5, %s463
      // Predicated region
      $region41: #{residual_conv_block_forward.5} parent=39 // pred_check
        %p465 = pneg %p154
      $region42: #{residual_conv_block_forward.5} parent=39 // pred_check_branch
        %467 = sbr.rel (%p465) target = $region44
      $region43: #{residual_conv_block_forward.5} parent=39 // pred_region
        _
      $region44: #{residual_conv_block_forward.5} parent=39 // pred_fallthru
        _
    $region40: #{residual_conv_block_forward.5} parent=5 // pred_fallthru
      _
    %p468 = scmp.le.s32.totalorder 2, %s11
    // Predicated region
    $region45: #{residual_conv_block_forward.5} parent=5 // pred_check
      %p469 = pneg %p468
    $region46: #{residual_conv_block_forward.5} parent=5 // pred_check_branch
      %471 = sbr.rel (%p469) target = $region48
    $region47: #{residual_conv_block_forward.5} parent=5 // pred_region
      %s472 = ssub.s32 %s11, 2
      // Predicated region
      $region49: #{residual_conv_block_forward.5} parent=47 // pred_check
        %p473 = pneg %p160
      $region50: #{residual_conv_block_forward.5} parent=47 // pred_check_branch
        %475 = sbr.rel (%p473) target = $region52
      $region51: #{residual_conv_block_forward.5} parent=47 // pred_region
        %p476 = scmp.lt.s32.totalorder %s17, 1
        %s477 = scalar_select %p476, %s17, 1
        %s478 = smul.addr %s477, 8
        %s479 = scalar_lea.vmem %s5, %s478
      $region52: #{residual_conv_block_forward.5} parent=47 // pred_fallthru
        _
    $region48: #{residual_conv_block_forward.5} parent=5 // pred_fallthru
      _
  $region6: #{residual_conv_block_forward.5} parent=0 // loop_footer
    %s15 = sadd.s32 1, %s11
  $region7: #{residual_conv_block_forward.5} parent=0 // loop_footer_branch
    %10 = sbr.rel target = $region3
  $region8: #{residual_conv_block_forward.5} parent=0 // loop_exit
    _

</llo_original>
